<compile_context>
chip_gen: v7x
topology: tpu7x:2x2x1
jax: 0.10.0
libtpu: 0.0.40
codegen_flags: <defaults>
</compile_context>

<pallas_src>
import math
import functools

import jax
import jax.numpy as jnp
from jax.experimental import pallas as pl
from jax.experimental.pallas import tpu as pltpu

LOG2 = math.log(2.0)
LANE = 128        # MXU / lane width — node & feature dims padded to this
EDGE_TILE = 256   # edges processed per grid step (fills 256-wide MXU)


def _round_up(x, m):
    return ((x + m - 1) // m) * m


def _shifted_softplus(x):
    # ShiftedSoftplus(x) = softplus(x) - log(2)
    return jax.nn.softplus(x) - LOG2


def interaction_kernel(pi_over_cutoff, use_bf16,
                       h_ref, src_ref, dst_ref, ew_ref, ea_ref,
                       w_mlp1_ref, b_mlp1_ref, w_mlp2_ref, b_mlp2_ref,
                       w_lin2_ref, b_lin2_ref,
                       out_ref,
                       agg_ref):
    e = pl.program_id(0)
    n_pad, f_pad = agg_ref.shape
    te = src_ref.shape[0]
    mxu = jnp.bfloat16 if use_bf16 else jnp.float32

    # --- edge step 0: zero the scatter accumulator (persists in VMEM scratch).
    @pl.when(e == 0)
    def _init():
        agg_ref[...] = jnp.zeros_like(agg_ref)

    # --- filter network on this edge tile: Linear -> ShiftedSoftplus -> Linear
    ea = ea_ref[...]                                                   # [tE, G]
    h1 = jnp.dot(ea.astype(mxu), w_mlp1_ref[...].astype(mxu),
                 preferred_element_type=jnp.float32) + b_mlp1_ref[...]
    h1 = _shifted_softplus(h1)                                         # [tE, F]
    w_filt = jnp.dot(h1.astype(mxu), w_mlp2_ref[...].astype(mxu),
                     preferred_element_type=jnp.float32) + b_mlp2_ref[...]

    # --- cosine cutoff (f32 on the VPU).  Padded edges carry ew == cutoff so
    #     C == 0, which zeroes their messages.
    c = 0.5 * (jnp.cos(ew_ref[...] * pi_over_cutoff) + 1.0)            # [tE, 1]
    w_edge = w_filt * c                                                # [tE, F]

    # --- gather x_j = h[src] as a one-hot MXU matmul (exact 0/1 weights):
    #     onehot_src[tE, N] = (lane iota == src column); x_j = onehot_src @ h.
    iota_lane = jax.lax.broadcasted_iota(jnp.int32, (te, n_pad), 1)    # [tE, N]
    onehot_src = (iota_lane == src_ref[...]).astype(mxu)               # [tE, N]
    x_j = jnp.dot(onehot_src, h_ref[...].astype(mxu),
                  preferred_element_type=jnp.float32)                  # [tE, F]
    msg = x_j * w_edge                                                 # [tE, F]

    # --- scatter-add by dst: one-hot built already transposed ([N, tE]) from
    #     the lane-major dst row, so the accumulate is a plain MXU matmul.
    #     Padded edges carry dst == -1 -> all-zero one-hot column -> no-op.
    iota_sub = jax.lax.broadcasted_iota(jnp.int32, (n_pad, te), 0)     # [N, tE]
    onehot_dst = (iota_sub == dst_ref[...]).astype(mxu)                # [N, tE]
    agg_ref[...] += jnp.dot(onehot_dst, msg.astype(mxu),
                            preferred_element_type=jnp.float32)        # [N, F]

    # --- last edge tile: lin2 + bias + ShiftedSoftplus epilogue
    @pl.when(e == pl.num_programs(0) - 1)
    def _finalize():
        out = jnp.dot(agg_ref[...].astype(mxu), w_lin2_ref[...].astype(mxu),
                      preferred_element_type=jnp.float32) + b_lin2_ref[...]
        out_ref[...] = _shifted_softplus(out)                          # [N, H]


def schnet_interaction_block(x, edge_index, edge_weight, edge_attr, params,
                             cutoff, edge_tile=EDGE_TILE, use_bf16=False):
    N, H = x.shape
    E = edge_weight.shape[0]
    G = edge_attr.shape[1]
    F = params["w_lin1"].shape[1]

    # Padded (lane/MXU-dense) sizes.  G is only sublane-aligned (no 128 pad).
    n_pad = _round_up(N, LANE)
    h_pad = _round_up(H, LANE)
    f_pad = _round_up(F, LANE)
    g_pad = _round_up(G, 8)
    e_pad = _round_up(max(E, edge_tile), edge_tile)

    def pad2(a, rows, cols):
        a = a.astype(jnp.float32)
        out = jnp.zeros((rows, cols), jnp.float32)
        return out.at[:a.shape[0], :a.shape[1]].set(a)

    # Hoisted projection h = x @ lin1 (tiny XLA matmul), then zero-padded.
    h = x.astype(jnp.float32) @ params["w_lin1"].astype(jnp.float32)   # [N, F]
    h_p = pad2(h, n_pad, f_pad)

    # Parameters (zero padding keeps padded rows/cols inert).
    w_mlp1 = pad2(params["w_mlp1"], g_pad, f_pad)
    b_mlp1 = pad2(params["b_mlp1"].reshape(1, -1), 1, f_pad)
    w_mlp2 = pad2(params["w_mlp2"], f_pad, f_pad)
    b_mlp2 = pad2(params["b_mlp2"].reshape(1, -1), 1, f_pad)
    w_lin2 = pad2(params["w_lin2"], f_pad, h_pad)
    b_lin2 = pad2(params["b_lin2"].reshape(1, -1), 1, h_pad)

    # Edge tensors.  src: [E,1] column (one-hot gather wants sublane-major),
    # dst: [1,E] row (transposed one-hot wants lane-major), ew: [E,1] column.
    src = edge_index[0].astype(jnp.int32)
    dst = edge_index[1].astype(jnp.int32)
    src_p = jnp.zeros((e_pad, 1), jnp.int32).at[:E, 0].set(src)
    dst_p = jnp.full((1, e_pad), -1, jnp.int32).at[0, :E].set(dst)   # -1 => no-op
    ew_p = jnp.full((e_pad, 1), cutoff, jnp.float32).at[:E, 0].set(
        edge_weight.astype(jnp.float32))                             # C(pad)=0
    ea_p = pad2(edge_attr, e_pad, g_pad)

    grid = (e_pad // edge_tile,)

    def resident(shape):
        return pl.BlockSpec(shape, lambda e: (0, 0))

    in_specs = [
        resident((n_pad, f_pad)),                            # h = x @ lin1
        pl.BlockSpec((edge_tile, 1), lambda e: (e, 0)),      # src (column)
        pl.BlockSpec((1, edge_tile), lambda e: (0, e)),      # dst (row)
        pl.BlockSpec((edge_tile, 1), lambda e: (e, 0)),      # edge_weight
        pl.BlockSpec((edge_tile, g_pad), lambda e: (e, 0)),  # edge_attr (native G)
        resident((g_pad, f_pad)), resident((1, f_pad)),      # mlp1
        resident((f_pad, f_pad)), resident((1, f_pad)),      # mlp2
        resident((f_pad, h_pad)), resident((1, h_pad)),      # lin2
    ]
    out_spec = pl.BlockSpec((n_pad, h_pad), lambda e: (0, 0))

    scratch_shapes = [
        pltpu.VMEM((n_pad, f_pad), jnp.float32),   # agg accumulator
    ]

    # Advisory cost estimate (filter MLP + one-hot gather/scatter + lin2).
    flops = 2 * (e_pad * g_pad * f_pad + e_pad * f_pad * f_pad
                 + 2 * e_pad * n_pad * f_pad + n_pad * f_pad * h_pad)
    transcendentals = 2 * e_pad * f_pad + e_pad + 2 * n_pad * h_pad
    bytes_accessed = 4 * (n_pad * f_pad + e_pad * (g_pad + 3)
                          + g_pad * f_pad + f_pad * f_pad + f_pad * h_pad
                          + 2 * f_pad + h_pad + n_pad * h_pad)

    # VMEM budget from the tiled buffers (residents double-buffered by Pallas),
    # with a 16 MiB floor and a 64 MiB cap so the config stays viable on v7x.
    fb = 4
    resident_bytes = fb * (n_pad * f_pad + g_pad * f_pad + f_pad * f_pad
                           + f_pad * h_pad + n_pad * h_pad
                           + 2 * f_pad + h_pad)
    per_edge_step = fb * edge_tile * (g_pad + 2) + 8 * edge_tile
    scratch_bytes = fb * n_pad * f_pad
    vmem_limit = int(min(max(2 * resident_bytes + 4 * per_edge_step
                             + scratch_bytes, 16 * 1024 * 1024),
                         64 * 1024 * 1024))

    out = pl.pallas_call(
        functools.partial(interaction_kernel, math.pi / cutoff, use_bf16),
        out_shape=jax.ShapeDtypeStruct((n_pad, h_pad), jnp.float32),
        grid_spec=pltpu.PrefetchScalarGridSpec(
            num_scalar_prefetch=0,
            grid=grid,
            in_specs=in_specs,
            out_specs=out_spec,
            scratch_shapes=scratch_shapes),
        compiler_params=pltpu.CompilerParams(
            dimension_semantics=("arbitrary",),   # edge axis reduces into out
            vmem_limit_bytes=vmem_limit),
        cost_estimate=pl.CostEstimate(
            flops=int(flops),
            transcendentals=int(transcendentals),
            bytes_accessed=int(bytes_accessed)),
    )(h_p, src_p, dst_p, ew_p, ea_p,
      w_mlp1, b_mlp1, w_mlp2, b_mlp2, w_lin2, b_lin2)

    return out[:N, :H]


def xavier_uniform(key, fan_in, fan_out):
    a = math.sqrt(6.0 / (fan_in + fan_out))
    return jax.random.uniform(key, (fan_in, fan_out), jnp.float32, -a, a)


def make_params(key, hidden_channels, num_gaussians, num_filters):
    ks = jax.random.split(key, 4)
    return {
        # filter MLP: Linear(G,F) -> ShiftedSoftplus -> Linear(F,F)
        "w_mlp1": xavier_uniform(ks[0], num_gaussians, num_filters),
        "b_mlp1": jnp.zeros((num_filters,), jnp.float32),
        "w_mlp2": xavier_uniform(ks[1], num_filters, num_filters),
        "b_mlp2": jnp.zeros((num_filters,), jnp.float32),
        # CFConv linears
        "w_lin1": xavier_uniform(ks[2], hidden_channels, num_filters),  # no bias
        "w_lin2": xavier_uniform(ks[3], num_filters, hidden_channels),
        "b_lin2": jnp.zeros((hidden_channels,), jnp.float32),
    }


def reference_forward(x, edge_index, edge_weight, edge_attr, params, cutoff):
    # Pure-JAX reference for correctness checking.
    src, dst = edge_index[0], edge_index[1]
    h1 = jax.nn.softplus(edge_attr @ params["w_mlp1"] + params["b_mlp1"]) - LOG2
    w_filt = h1 @ params["w_mlp2"] + params["b_mlp2"]
    C = 0.5 * (jnp.cos(edge_weight * math.pi / cutoff) + 1.0)
    W = w_filt * C[:, None]
    h = x @ params["w_lin1"]
    msg = h[src] * W
    agg = jax.ops.segment_sum(msg, dst, num_segments=x.shape[0])
    out = agg @ params["w_lin2"] + params["b_lin2"]
    return jax.nn.softplus(out) - LOG2


if __name__ == "__main__":
    # small shapes consistent with the module
    N = 8              # number of nodes
    E = 16             # number of edges
    hidden_channels = 32
    num_gaussians = 16
    num_filters = 32
    cutoff = 10.0

    key = jax.random.PRNGKey(0)
    k_x, k_ei, k_ew, k_ea, k_p = jax.random.split(key, 5)

    x = jax.random.normal(k_x, (N, hidden_channels), jnp.float32)
    edge_index = jax.random.randint(k_ei, (2, E), 0, N, jnp.int32)
    edge_weight = jax.random.uniform(k_ew, (E,), jnp.float32, 0.0, cutoff)
    edge_attr = jax.random.normal(k_ea, (E, num_gaussians), jnp.float32)

    params = make_params(k_p, hidden_channels, num_gaussians, num_filters)

    out = schnet_interaction_block(x, edge_index, edge_weight, edge_attr,
                                   params, cutoff)
    out = jax.block_until_ready(out)

    ref = reference_forward(x, edge_index, edge_weight, edge_attr, params,
                            cutoff)
    assert out.shape == (N, hidden_channels)
    assert jnp.allclose(out, ref, atol=1e-4, rtol=1e-4), "mismatch vs reference"

    print("KERNEL_OK")
</pallas_src>

<mosaic_0001>
module attributes {stable_mosaic.version = 11 : i64} {
  func.func @interaction_kernel(%arg0: i32, %arg1: memref<128x128xf32, #tpu.memory_space<vmem>>, %arg2: memref<256x1xi32, #tpu.memory_space<vmem>>, %arg3: memref<1x256xi32, #tpu.memory_space<vmem>>, %arg4: memref<256x1xf32, #tpu.memory_space<vmem>>, %arg5: memref<256x16xf32, #tpu.memory_space<vmem>>, %arg6: memref<16x128xf32, #tpu.memory_space<vmem>>, %arg7: memref<1x128xf32, #tpu.memory_space<vmem>>, %arg8: memref<128x128xf32, #tpu.memory_space<vmem>>, %arg9: memref<1x128xf32, #tpu.memory_space<vmem>>, %arg10: memref<128x128xf32, #tpu.memory_space<vmem>>, %arg11: memref<1x128xf32, #tpu.memory_space<vmem>>, %arg12: memref<128x128xf32, #tpu.memory_space<vmem>>, %arg13: memref<128x128xf32, #tpu.memory_space<vmem>>) attributes {dimension_semantics = [#tpu.dimension_semantics<arbitrary>], iteration_bounds = array<i64: 1>, scalar_prefetch = 0 : i64, scratch_operands = 1 : i64, tpu.core_type = #tpu.core_type<tc>, window_params = [{pipeline_mode = #tpu.pipeline_mode<synchronous>, transform_indices = @transform_0, window_bounds = array<i64: 128, 128>}, {transform_indices = @transform_1, window_bounds = array<i64: 256, 1>}, {transform_indices = @transform_2, window_bounds = array<i64: 1, 256>}, {transform_indices = @transform_3, window_bounds = array<i64: 256, 1>}, {transform_indices = @transform_4, window_bounds = array<i64: 256, 16>}, {pipeline_mode = #tpu.pipeline_mode<synchronous>, transform_indices = @transform_5, window_bounds = array<i64: 16, 128>}, {pipeline_mode = #tpu.pipeline_mode<synchronous>, transform_indices = @transform_6, window_bounds = array<i64: 1, 128>}, {pipeline_mode = #tpu.pipeline_mode<synchronous>, transform_indices = @transform_7, window_bounds = array<i64: 128, 128>}, {pipeline_mode = #tpu.pipeline_mode<synchronous>, transform_indices = @transform_8, window_bounds = array<i64: 1, 128>}, {pipeline_mode = #tpu.pipeline_mode<synchronous>, transform_indices = @transform_9, window_bounds = array<i64: 128, 128>}, {pipeline_mode = #tpu.pipeline_mode<synchronous>, transform_indices = @transform_10, window_bounds = array<i64: 1, 128>}, {pipeline_mode = #tpu.pipeline_mode<synchronous>, transform_indices = @transform_11, window_bounds = array<i64: 128, 128>}]} {
    %c0_i32 = arith.constant 0 : i32
    %0 = arith.cmpi eq, %arg0, %c0_i32 : i32
    %1 = arith.extui %0 : i1 to i32
    %c0_i32_0 = arith.constant 0 : i32
    %2 = arith.cmpi ne, %1, %c0_i32_0 : i32
    scf.if %2 {
      %cst_33 = arith.constant 0.000000e+00 : f32
      %62 = vector.broadcast %cst_33 : f32 to vector<128x128xf32>
      %c0_34 = arith.constant 0 : index
      %c0_35 = arith.constant 0 : index
      %63 = vector.load %arg13[%c0_34, %c0_35] : memref<128x128xf32, #tpu.memory_space<vmem>>, vector<128x128xf32>
      tpu.vector_store %arg13[%c0_34, %c0_35], %62 {strides = array<i32>} : memref<128x128xf32, #tpu.memory_space<vmem>>, vector<128x128xf32>,
    } else {
    }
    %c0 = arith.constant 0 : index
    %c0_1 = arith.constant 0 : index
    %3 = vector.load %arg5[%c0, %c0_1] : memref<256x16xf32, #tpu.memory_space<vmem>>, vector<256x16xf32>
    %c0_2 = arith.constant 0 : index
    %c0_3 = arith.constant 0 : index
    %4 = vector.load %arg6[%c0_2, %c0_3] : memref<16x128xf32, #tpu.memory_space<vmem>>, vector<16x128xf32>
    %cst = arith.constant dense<0.000000e+00> : vector<256x128xf32>
    %5 = tpu.matmul %3, %4, %cst {dimension_numbers = #tpu.dot_dimension_numbers<[1], [0], [0], [1], [0, 0, 1, 1], [], []>} : vector<256x16xf32>, vector<16x128xf32>, vector<256x128xf32> -> vector<256x128xf32>
    %c0_4 = arith.constant 0 : index
    %c0_5 = arith.constant 0 : index
    %6 = vector.load %arg7[%c0_4, %c0_5] : memref<1x128xf32, #tpu.memory_space<vmem>>, vector<1x128xf32>
    %7 = vector.broadcast %6 : vector<1x128xf32> to vector<256x128xf32>
    %8 = arith.addf %5, %7 : vector<256x128xf32>
    %cst_6 = arith.constant 0.000000e+00 : f32
    %9 = vector.broadcast %cst_6 : f32 to vector<256x128xf32>
    %10 = arith.maximumf %8, %9 : vector<256x128xf32>
    %11 = vector.broadcast %cst_6 : f32 to vector<256x128xf32>
    %12 = arith.subf %8, %11 : vector<256x128xf32>
    %13 = arith.cmpf one, %12, %12 : vector<256x128xf32>
    %14 = vector.broadcast %cst_6 : f32 to vector<256x128xf32>
    %15 = arith.addf %8, %14 : vector<256x128xf32>
    %16 = math.absf %12 : vector<256x128xf32>
    %cst_7 = arith.constant 0.000000e+00 : f32
    %17 = vector.broadcast %cst_7 : f32 to vector<256x128xf32>
    %18 = arith.subf %17, %16 : vector<256x128xf32>
    %19 = math.exp %18 : vector<256x128xf32>
    %20 = math.log1p %19 : vector<256x128xf32>
    %21 = arith.addf %10, %20 : vector<256x128xf32>
    %22 = arith.select %13, %15, %21 : vector<256x128xi1>, vector<256x128xf32>
    %cst_8 = arith.constant 0.693147182 : f32
    %23 = vector.broadcast %cst_8 : f32 to vector<256x128xf32>
    %24 = arith.subf %22, %23 : vector<256x128xf32>
    %c0_9 = arith.constant 0 : index
    %c0_10 = arith.constant 0 : index
    %25 = vector.load %arg8[%c0_9, %c0_10] : memref<128x128xf32, #tpu.memory_space<vmem>>, vector<128x128xf32>
    %cst_11 = arith.constant dense<0.000000e+00> : vector<256x128xf32>
    %26 = tpu.matmul %24, %25, %cst_11 {dimension_numbers = #tpu.dot_dimension_numbers<[1], [0], [0], [1], [0, 0, 1, 1], [], []>} : vector<256x128xf32>, vector<128x128xf32>, vector<256x128xf32> -> vector<256x128xf32>
    %c0_12 = arith.constant 0 : index
    %c0_13 = arith.constant 0 : index
    %27 = vector.load %arg9[%c0_12, %c0_13] : memref<1x128xf32, #tpu.memory_space<vmem>>, vector<1x128xf32>
    %28 = vector.broadcast %27 : vector<1x128xf32> to vector<256x128xf32>
    %29 = arith.addf %26, %28 : vector<256x128xf32>
    %c0_14 = arith.constant 0 : index
    %c0_15 = arith.constant 0 : index
    %30 = vector.load %arg4[%c0_14, %c0_15] : memref<256x1xf32, #tpu.memory_space<vmem>>, vector<256x1xf32>
    %cst_16 = arith.constant 0.314159274 : f32
    %31 = vector.broadcast %cst_16 : f32 to vector<256x1xf32>
    %32 = arith.mulf %30, %31 : vector<256x1xf32>
    %33 = math.cos %32 : vector<256x1xf32>
    %cst_17 = arith.constant 1.000000e+00 : f32
    %34 = vector.broadcast %cst_17 : f32 to vector<256x1xf32>
    %35 = arith.addf %33, %34 : vector<256x1xf32>
    %cst_18 = arith.constant 5.000000e-01 : f32
    %36 = vector.broadcast %cst_18 : f32 to vector<256x1xf32>
    %37 = arith.mulf %36, %35 : vector<256x1xf32>
    %38 = vector.broadcast %37 : vector<256x1xf32> to vector<256x128xf32>
    %39 = arith.mulf %29, %38 : vector<256x128xf32>
    %40 = tpu.iota {dimensions = array<i32: 1>} : vector<256x128xi32>
    %c0_19 = arith.constant 0 : index
    %c0_20 = arith.constant 0 : index
    %41 = vector.load %arg2[%c0_19, %c0_20] : memref<256x1xi32, #tpu.memory_space<vmem>>, vector<256x1xi32>
    %42 = vector.broadcast %41 : vector<256x1xi32> to vector<256x128xi32>
    %43 = arith.cmpi eq, %40, %42 : vector<256x128xi32>
    %44 = arith.extui %43 : vector<256x128xi1> to vector<256x128xi32>
    %45 = arith.sitofp %44 : vector<256x128xi32> to vector<256x128xf32>
    %c0_21 = arith.constant 0 : index
    %c0_22 = arith.constant 0 : index
    %46 = vector.load %arg1[%c0_21, %c0_22] : memref<128x128xf32, #tpu.memory_space<vmem>>, vector<128x128xf32>
    %cst_23 = arith.constant dense<0.000000e+00> : vector<256x128xf32>
    %47 = tpu.matmul %45, %46, %cst_23 {dimension_numbers = #tpu.dot_dimension_numbers<[1], [0], [0], [1], [0, 0, 1, 1], [], []>} : vector<256x128xf32>, vector<128x128xf32>, vector<256x128xf32> -> vector<256x128xf32>
    %48 = arith.mulf %47, %39 : vector<256x128xf32>
    %49 = tpu.iota {dimensions = array<i32: 0>} : vector<128x256xi32>
    %c0_24 = arith.constant 0 : index
    %c0_25 = arith.constant 0 : index
    %50 = vector.load %arg3[%c0_24, %c0_25] : memref<1x256xi32, #tpu.memory_space<vmem>>, vector<1x256xi32>
    %51 = vector.broadcast %50 : vector<1x256xi32> to vector<128x256xi32>
    %52 = arith.cmpi eq, %49, %51 : vector<128x256xi32>
    %53 = arith.extui %52 : vector<128x256xi1> to vector<128x256xi32>
    %54 = arith.sitofp %53 : vector<128x256xi32> to vector<128x256xf32>
    %c0_26 = arith.constant 0 : index
    %c0_27 = arith.constant 0 : index
    %55 = vector.load %arg13[%c0_26, %c0_27] : memref<128x128xf32, #tpu.memory_space<vmem>>, vector<128x128xf32>
    %cst_28 = arith.constant dense<0.000000e+00> : vector<128x128xf32>
    %56 = tpu.matmul %54, %48, %cst_28 {dimension_numbers = #tpu.dot_dimension_numbers<[1], [0], [0], [1], [0, 0, 1, 1], [], []>} : vector<128x256xf32>, vector<256x128xf32>, vector<128x128xf32> -> vector<128x128xf32>
    %57 = arith.addf %55, %56 : vector<128x128xf32>
    %c0_29 = arith.constant 0 : index
    %c0_30 = arith.constant 0 : index
    %58 = vector.load %arg13[%c0_29, %c0_30] : memref<128x128xf32, #tpu.memory_space<vmem>>, vector<128x128xf32>
    tpu.vector_store %arg13[%c0_29, %c0_30], %57 {strides = array<i32>} : memref<128x128xf32, #tpu.memory_space<vmem>>, vector<128x128xf32>,
    %c0_i32_31 = arith.constant 0 : i32
    %59 = arith.cmpi eq, %arg0, %c0_i32_31 : i32
    %60 = arith.extui %59 : i1 to i32
    %c0_i32_32 = arith.constant 0 : i32
    %61 = arith.cmpi ne, %60, %c0_i32_32 : i32
    scf.if %61 {
      %c0_33 = arith.constant 0 : index
      %c0_34 = arith.constant 0 : index
      %62 = vector.load %arg13[%c0_33, %c0_34] : memref<128x128xf32, #tpu.memory_space<vmem>>, vector<128x128xf32>
      %c0_35 = arith.constant 0 : index
      %c0_36 = arith.constant 0 : index
      %63 = vector.load %arg10[%c0_35, %c0_36] : memref<128x128xf32, #tpu.memory_space<vmem>>, vector<128x128xf32>
      %cst_37 = arith.constant dense<0.000000e+00> : vector<128x128xf32>
      %64 = tpu.matmul %62, %63, %cst_37 {dimension_numbers = #tpu.dot_dimension_numbers<[1], [0], [0], [1], [0, 0, 1, 1], [], []>} : vector<128x128xf32>, vector<128x128xf32>, vector<128x128xf32> -> vector<128x128xf32>
      %c0_38 = arith.constant 0 : index
      %c0_39 = arith.constant 0 : index
      %65 = vector.load %arg11[%c0_38, %c0_39] : memref<1x128xf32, #tpu.memory_space<vmem>>, vector<1x128xf32>
      %66 = vector.broadcast %65 : vector<1x128xf32> to vector<128x128xf32>
      %67 = arith.addf %64, %66 : vector<128x128xf32>
      %cst_40 = arith.constant 0.000000e+00 : f32
      %68 = vector.broadcast %cst_40 : f32 to vector<128x128xf32>
      %69 = arith.maximumf %67, %68 : vector<128x128xf32>
      %70 = vector.broadcast %cst_40 : f32 to vector<128x128xf32>
      %71 = arith.subf %67, %70 : vector<128x128xf32>
      %72 = arith.cmpf one, %71, %71 : vector<128x128xf32>
      %73 = vector.broadcast %cst_40 : f32 to vector<128x128xf32>
      %74 = arith.addf %67, %73 : vector<128x128xf32>
      %75 = math.absf %71 : vector<128x128xf32>
      %cst_41 = arith.constant 0.000000e+00 : f32
      %76 = vector.broadcast %cst_41 : f32 to vector<128x128xf32>
      %77 = arith.subf %76, %75 : vector<128x128xf32>
      %78 = math.exp %77 : vector<128x128xf32>
      %79 = math.log1p %78 : vector<128x128xf32>
      %80 = arith.addf %69, %79 : vector<128x128xf32>
      %81 = arith.select %72, %74, %80 : vector<128x128xi1>, vector<128x128xf32>
      %cst_42 = arith.constant 0.693147182 : f32
      %82 = vector.broadcast %cst_42 : f32 to vector<128x128xf32>
      %83 = arith.subf %81, %82 : vector<128x128xf32>
      %c0_43 = arith.constant 0 : index
      %c0_44 = arith.constant 0 : index
      %84 = vector.load %arg12[%c0_43, %c0_44] : memref<128x128xf32, #tpu.memory_space<vmem>>, vector<128x128xf32>
      tpu.vector_store %arg12[%c0_43, %c0_44], %83 {strides = array<i32>} : memref<128x128xf32, #tpu.memory_space<vmem>>, vector<128x128xf32>,
    } else {
    }
    return
  }
  func.func @transform_0(%arg0: i32) -> (i32, i32) {
    %c0_i32 = arith.constant 0 : i32
    %c0_i32_0 = arith.constant 0 : i32
    %c0_i32_1 = arith.constant 0 : i32
    return %c0_i32, %c0_i32_0 : i32, i32
  }
  func.func @transform_1(%arg0: i32) -> (i32, i32) {
    %c0_i32 = arith.constant 0 : i32
    %c0_i32_0 = arith.constant 0 : i32
    return %arg0, %c0_i32 : i32, i32
  }
  func.func @transform_2(%arg0: i32) -> (i32, i32) {
    %c0_i32 = arith.constant 0 : i32
    %c0_i32_0 = arith.constant 0 : i32
    return %c0_i32, %arg0 : i32, i32
  }
  func.func @transform_3(%arg0: i32) -> (i32, i32) {
    %c0_i32 = arith.constant 0 : i32
    %c0_i32_0 = arith.constant 0 : i32
    return %arg0, %c0_i32 : i32, i32
  }
  func.func @transform_4(%arg0: i32) -> (i32, i32) {
    %c0_i32 = arith.constant 0 : i32
    %c0_i32_0 = arith.constant 0 : i32
    return %arg0, %c0_i32 : i32, i32
  }
  func.func @transform_5(%arg0: i32) -> (i32, i32) {
    %c0_i32 = arith.constant 0 : i32
    %c0_i32_0 = arith.constant 0 : i32
    %c0_i32_1 = arith.constant 0 : i32
    return %c0_i32, %c0_i32_0 : i32, i32
  }
  func.func @transform_6(%arg0: i32) -> (i32, i32) {
    %c0_i32 = arith.constant 0 : i32
    %c0_i32_0 = arith.constant 0 : i32
    %c0_i32_1 = arith.constant 0 : i32
    return %c0_i32, %c0_i32_0 : i32, i32
  }
  func.func @transform_7(%arg0: i32) -> (i32, i32) {
    %c0_i32 = arith.constant 0 : i32
    %c0_i32_0 = arith.constant 0 : i32
    %c0_i32_1 = arith.constant 0 : i32
    return %c0_i32, %c0_i32_0 : i32, i32
  }
  func.func @transform_8(%arg0: i32) -> (i32, i32) {
    %c0_i32 = arith.constant 0 : i32
    %c0_i32_0 = arith.constant 0 : i32
    %c0_i32_1 = arith.constant 0 : i32
    return %c0_i32, %c0_i32_0 : i32, i32
  }
  func.func @transform_9(%arg0: i32) -> (i32, i32) {
    %c0_i32 = arith.constant 0 : i32
    %c0_i32_0 = arith.constant 0 : i32
    %c0_i32_1 = arith.constant 0 : i32
    return %c0_i32, %c0_i32_0 : i32, i32
  }
  func.func @transform_10(%arg0: i32) -> (i32, i32) {
    %c0_i32 = arith.constant 0 : i32
    %c0_i32_0 = arith.constant 0 : i32
    %c0_i32_1 = arith.constant 0 : i32
    return %c0_i32, %c0_i32_0 : i32, i32
  }
  func.func @transform_11(%arg0: i32) -> (i32, i32) {
    %c0_i32 = arith.constant 0 : i32
    %c0_i32_0 = arith.constant 0 : i32
    %c0_i32_1 = arith.constant 0 : i32
    return %c0_i32, %c0_i32_0 : i32, i32
  }
}

</mosaic_0001>

<llo_original>
// kernel: tpu_custom_call.1
$region0: #{tpu_custom_call.1}
  #allocation0 [shape = 'u32[]', space=smem, size = 0x4, offset = 0x4, fixed_abs, tag = 'smem constant byte address 0x4 - core index']
  #allocation1 [shape = 'u32[144,128]{1,0:T(1,128)}', space=vmem, size = 0x12000, scoped, tag = 'internal scratch']
  #allocation2 [shape = 'f32[128,128]{1,0:T(8,128)}', space=vmem, size = 0x10000, scoped, tag = 'scratch operand']
  %s0 = inlined_call_operand.vmem [shape: f32[128,128], index: 0, kind: input, shape index: {}]
  %s1 = inlined_call_operand.vmem [shape: s32[256,1], index: 1, kind: input, shape index: {}]
  %s2 = inlined_call_operand.vmem [shape: s32[1,256], index: 2, kind: input, shape index: {}]
  %s3 = inlined_call_operand.vmem [shape: f32[256,1], index: 3, kind: input, shape index: {}]
  %s4 = inlined_call_operand.vmem [shape: f32[256,16], index: 4, kind: input, shape index: {}]
  %s5 = inlined_call_operand.vmem [shape: f32[16,128], index: 5, kind: input, shape index: {}]
  %s6 = inlined_call_operand.vmem [shape: f32[1,128], index: 6, kind: input, shape index: {}]
  %s7 = inlined_call_operand.vmem [shape: f32[128,128], index: 7, kind: input, shape index: {}]
  %s8 = inlined_call_operand.vmem [shape: f32[1,128], index: 8, kind: input, shape index: {}]
  %s9 = inlined_call_operand.vmem [shape: f32[128,128], index: 9, kind: input, shape index: {}]
  %s10 = inlined_call_operand.vmem [shape: f32[1,128], index: 10, kind: input, shape index: {}]
  %s11 = inlined_call_operand.hbm [shape: f32[128,128], index: 11, kind: output, shape index: {}]
  %s12 = sld [smem:[#allocation0]]
  $region62: #{tpu_custom_call.1} parent=0
    _
  %s14 = ssub.s32 1, %s12
  %s15 = scalar_select 0, %s14, %s12
  $region1: #{tpu_custom_call.1} parent=0
    #allocation3 [shape = 'u8[65536]{0}', space=vmem, size = 0x10000, scoped, tag = 'output window, operand 0, single buffered']
    #allocation4 [shape = 's32[1]{0}', space=sflag, size = 0x4, scoped, tag = 'scoped memory for tpu_custom_call.1']
    %16 = vsyncpa [#allocation4], 0
    // Predicated region
    $region2: #{tpu_custom_call.1} parent=1 // pred_check
      _
    $region3: #{tpu_custom_call.1} parent=1 // pred_check_branch
      %18 = sbr.rel (0) target = $region5
    $region4: #{tpu_custom_call.1} parent=1 // pred_region
      _
    $region5: #{tpu_custom_call.1} parent=1 // pred_fallthru
      _
    // Predicated region
    $region6: #{tpu_custom_call.1} parent=1 // pred_check
      _
    $region7: #{tpu_custom_call.1} parent=1 // pred_check_branch
      %20 = sbr.rel (0) target = $region9
    $region8: #{tpu_custom_call.1} parent=1 // pred_region
      _
    $region9: #{tpu_custom_call.1} parent=1 // pred_fallthru
      _
    // Predicated region
    $region10: #{tpu_custom_call.1} parent=1 // pred_check
      _
    $region11: #{tpu_custom_call.1} parent=1 // pred_check_branch
      %22 = sbr.rel (0) target = $region13
    $region12: #{tpu_custom_call.1} parent=1 // pred_region
      _
    $region13: #{tpu_custom_call.1} parent=1 // pred_fallthru
      _
    // Predicated region
    $region14: #{tpu_custom_call.1} parent=1 // pred_check
      _
    $region15: #{tpu_custom_call.1} parent=1 // pred_check_branch
      %24 = sbr.rel (0) target = $region17
    $region16: #{tpu_custom_call.1} parent=1 // pred_region
      _
    $region17: #{tpu_custom_call.1} parent=1 // pred_fallthru
      _
    // Predicated region
    $region18: #{tpu_custom_call.1} parent=1 // pred_check
      _
    $region19: #{tpu_custom_call.1} parent=1 // pred_check_branch
      %26 = sbr.rel (0) target = $region21
    $region20: #{tpu_custom_call.1} parent=1 // pred_region
      _
    $region21: #{tpu_custom_call.1} parent=1 // pred_fallthru
      _
    // Predicated region
    $region22: #{tpu_custom_call.1} parent=1 // pred_check
      _
    $region23: #{tpu_custom_call.1} parent=1 // pred_check_branch
      %28 = sbr.rel (0) target = $region25
    $region24: #{tpu_custom_call.1} parent=1 // pred_region
      _
    $region25: #{tpu_custom_call.1} parent=1 // pred_fallthru
      _
    // Predicated region
    $region26: #{tpu_custom_call.1} parent=1 // pred_check
      _
    $region27: #{tpu_custom_call.1} parent=1 // pred_check_branch
      %30 = sbr.rel (0) target = $region29
    $region28: #{tpu_custom_call.1} parent=1 // pred_region
      _
    $region29: #{tpu_custom_call.1} parent=1 // pred_fallthru
      _
    // Predicated region
    $region30: #{tpu_custom_call.1} parent=1 // pred_check
      _
    $region31: #{tpu_custom_call.1} parent=1 // pred_check_branch
      %32 = sbr.rel (0) target = $region33
    $region32: #{tpu_custom_call.1} parent=1 // pred_region
      _
    $region33: #{tpu_custom_call.1} parent=1 // pred_fallthru
      _
    // Predicated region
    $region34: #{tpu_custom_call.1} parent=1 // pred_check
      _
    $region35: #{tpu_custom_call.1} parent=1 // pred_check_branch
      %34 = sbr.rel (0) target = $region37
    $region36: #{tpu_custom_call.1} parent=1 // pred_region
      _
    $region37: #{tpu_custom_call.1} parent=1 // pred_fallthru
      _
    // Predicated region
    $region38: #{tpu_custom_call.1} parent=1 // pred_check
      _
    $region39: #{tpu_custom_call.1} parent=1 // pred_check_branch
      %36 = sbr.rel (0) target = $region41
    $region40: #{tpu_custom_call.1} parent=1 // pred_region
      _
    $region41: #{tpu_custom_call.1} parent=1 // pred_fallthru
      _
    // Predicated region
    $region42: #{tpu_custom_call.1} parent=1 // pred_check
      _
    $region43: #{tpu_custom_call.1} parent=1 // pred_check_branch
      %38 = sbr.rel (0) target = $region45
    $region44: #{tpu_custom_call.1} parent=1 // pred_region
      _
    $region45: #{tpu_custom_call.1} parent=1 // pred_fallthru
      _
    %p39 = scmp.eq.s32.totalorder 0, 0
    // Predicated region
    $region46: #{tpu_custom_call.1} parent=1 // pred_check
      %p40 = pneg %p39
    $region47: #{tpu_custom_call.1} parent=1 // pred_check_branch
      %42 = sbr.rel (%p40) target = $region49
    $region48: #{tpu_custom_call.1} parent=1 // pred_region
      %43 = vst [vmem:[#allocation2] sm:$0xff] 0.0
      %44 = vst [vmem:[#allocation2 + $0x8] sm:$0xff] 0.0
      %45 = vst [vmem:[#allocation2 + $0x10] sm:$0xff] 0.0
      %46 = vst [vmem:[#allocation2 + $0x18] sm:$0xff] 0.0
      %47 = vst [vmem:[#allocation2 + $0x20] sm:$0xff] 0.0
      %48 = vst [vmem:[#allocation2 + $0x28] sm:$0xff] 0.0
      %49 = vst [vmem:[#allocation2 + $0x30] sm:$0xff] 0.0
      %50 = vst [vmem:[#allocation2 + $0x38] sm:$0xff] 0.0
      %51 = vst [vmem:[#allocation2 + $0x40] sm:$0xff] 0.0
      %52 = vst [vmem:[#allocation2 + $0x48] sm:$0xff] 0.0
      %53 = vst [vmem:[#allocation2 + $0x50] sm:$0xff] 0.0
      %54 = vst [vmem:[#allocation2 + $0x58] sm:$0xff] 0.0
      %55 = vst [vmem:[#allocation2 + $0x60] sm:$0xff] 0.0
      %56 = vst [vmem:[#allocation2 + $0x68] sm:$0xff] 0.0
      %57 = vst [vmem:[#allocation2 + $0x70] sm:$0xff] 0.0
      %58 = vst [vmem:[#allocation2 + $0x78] sm:$0xff] 0.0
    $region49: #{tpu_custom_call.1} parent=1 // pred_fallthru
      _
    %v59 = vld [vmem:[%s4] sm:$0xff]
    %v60 = vld [vmem:[%s4 + $0x8] sm:$0xff]
    %v61 = vld [vmem:[%s4 + $0x10] sm:$0xff]
    %v62 = vld [vmem:[%s4 + $0x18] sm:$0xff]
    %v63 = vld [vmem:[%s4 + $0x20] sm:$0xff]
    %v64 = vld [vmem:[%s4 + $0x28] sm:$0xff]
    %v65 = vld [vmem:[%s4 + $0x30] sm:$0xff]
    %v66 = vld [vmem:[%s4 + $0x38] sm:$0xff]
    %v67 = vld [vmem:[%s4 + $0x40] sm:$0xff]
    %v68 = vld [vmem:[%s4 + $0x48] sm:$0xff]
    %v69 = vld [vmem:[%s4 + $0x50] sm:$0xff]
    %v70 = vld [vmem:[%s4 + $0x58] sm:$0xff]
    %v71 = vld [vmem:[%s4 + $0x60] sm:$0xff]
    %v72 = vld [vmem:[%s4 + $0x68] sm:$0xff]
    %v73 = vld [vmem:[%s4 + $0x70] sm:$0xff]
    %v74 = vld [vmem:[%s4 + $0x78] sm:$0xff]
    %v75 = vld [vmem:[%s4 + $0x80] sm:$0xff]
    %v76 = vld [vmem:[%s4 + $0x88] sm:$0xff]
    %v77 = vld [vmem:[%s4 + $0x90] sm:$0xff]
    %v78 = vld [vmem:[%s4 + $0x98] sm:$0xff]
    %v79 = vld [vmem:[%s4 + $0xa0] sm:$0xff]
    %v80 = vld [vmem:[%s4 + $0xa8] sm:$0xff]
    %v81 = vld [vmem:[%s4 + $0xb0] sm:$0xff]
    %v82 = vld [vmem:[%s4 + $0xb8] sm:$0xff]
    %v83 = vld [vmem:[%s4 + $0xc0] sm:$0xff]
    %v84 = vld [vmem:[%s4 + $0xc8] sm:$0xff]
    %v85 = vld [vmem:[%s4 + $0xd0] sm:$0xff]
    %v86 = vld [vmem:[%s4 + $0xd8] sm:$0xff]
    %v87 = vld [vmem:[%s4 + $0xe0] sm:$0xff]
    %v88 = vld [vmem:[%s4 + $0xe8] sm:$0xff]
    %v89 = vld [vmem:[%s4 + $0xf0] sm:$0xff]
    %v90 = vld [vmem:[%s4 + $0xf8] sm:$0xff]
    %v91 = vld [vmem:[%s5] sm:$0xff]
    %v92 = vld [vmem:[%s5 + $0x8] sm:$0xff]
    %v93 = vld [vmem:[%s6] sm:$0x1]
    %v95 = vlaneseq
    %v96 = vshrl.u32 %v95, 7
    %v97 = vsub.s32 0, %v96
    %v98 = vrot.slane %v93, %v97
    %vm100 = vcmask 130048
    %v102 = vsel %vm100, %v59, 0
    %v105 = vsel %vm100, %v60, 0
    %v108 = vsel %vm100, %v61, 0
    %v111 = vsel %vm100, %v62, 0
    %v114 = vsel %vm100, %v63, 0
    %v117 = vsel %vm100, %v64, 0
    %v120 = vsel %vm100, %v65, 0
    %v123 = vsel %vm100, %v66, 0
    %v126 = vsel %vm100, %v67, 0
    %v129 = vsel %vm100, %v68, 0
    %v132 = vsel %vm100, %v69, 0
    %v135 = vsel %vm100, %v70, 0
    %v138 = vsel %vm100, %v71, 0
    %v141 = vsel %vm100, %v72, 0
    %v144 = vsel %vm100, %v73, 0
    %v147 = vsel %vm100, %v74, 0
    %v150 = vsel %vm100, %v75, 0
    %v153 = vsel %vm100, %v76, 0
    %v156 = vsel %vm100, %v77, 0
    %v159 = vsel %vm100, %v78, 0
    %v162 = vsel %vm100, %v79, 0
    %v165 = vsel %vm100, %v80, 0
    %v168 = vsel %vm100, %v81, 0
    %v171 = vsel %vm100, %v82, 0
    %v174 = vsel %vm100, %v83, 0
    %v177 = vsel %vm100, %v84, 0
    %v180 = vsel %vm100, %v85, 0
    %v183 = vsel %vm100, %v86, 0
    %v186 = vsel %vm100, %v87, 0
    %v189 = vsel %vm100, %v88, 0
    %v192 = vsel %vm100, %v89, 0
    %v195 = vsel %vm100, %v90, 0
    %197 = vmatprep.subr.mxu0 0.0
    %198 = vmatpush1.msra.mxu0 %v91
    %199 = vmatprep.subr.mxu0 0.0
    %200 = vmatpush1.msra.mxu0 %v92
    %201 = vmatprep.subr.mxu0 0.0
    %202 = vmatpush1.msra.mxu0 0.0
    %203 = vmatprep.subr.mxu0 0.0
    %204 = vmatpush1.msra.mxu0 0.0
    %205 = vmatprep.subr.mxu0 0.0
    %206 = vmatpush1.msra.mxu0 0.0
    %207 = vmatprep.subr.mxu0 0.0
    %208 = vmatpush1.msra.mxu0 0.0
    %209 = vmatprep.subr.mxu0 0.0
    %210 = vmatpush1.msra.mxu0 0.0
    %211 = vmatprep.subr.mxu0 0.0
    %212 = vmatpush1.msra.mxu0 0.0
    %213 = vmatprep.subr.mxu0 0.0
    %214 = vmatpush1.msra.mxu0 0.0
    %215 = vmatprep.subr.mxu0 0.0
    %216 = vmatpush1.msra.mxu0 0.0
    %217 = vmatprep.subr.mxu0 0.0
    %218 = vmatpush1.msra.mxu0 0.0
    %219 = vmatprep.subr.mxu0 0.0
    %220 = vmatpush1.msra.mxu0 0.0
    %221 = vmatprep.subr.mxu0 0.0
    %222 = vmatpush1.msra.mxu0 0.0
    %223 = vmatprep.subr.mxu0 0.0
    %224 = vmatpush1.msra.mxu0 0.0
    %225 = vmatprep.subr.mxu0 0.0
    %226 = vmatpush1.msra.mxu0 0.0
    %227 = vmatprep.subr.mxu0 0.0
    %228 = vmatpush1.msra.mxu0 0.0
    %229 = vmatprep.subr.mxu0 0.0
    %230 = vmatpush1.msra.mxu0 0.0
    %231 = vmatprep.subr.mxu0 0.0
    %232 = vmatpush1.msra.mxu0 0.0
    %233 = vmatprep.subr.mxu0 0.0
    %234 = vmatpush1.msra.mxu0 0.0
    %235 = vmatprep.subr.mxu0 0.0
    %236 = vmatpush1.msra.mxu0 0.0
    %237 = vmatprep.subr.mxu0 0.0
    %238 = vmatpush1.msra.mxu0 0.0
    %239 = vmatprep.subr.mxu0 0.0
    %240 = vmatpush1.msra.mxu0 0.0
    %241 = vmatprep.subr.mxu0 0.0
    %242 = vmatpush1.msra.mxu0 0.0
    %243 = vmatprep.subr.mxu0 0.0
    %244 = vmatpush1.msra.mxu0 0.0
    %245 = vmatprep.subr.mxu0 0.0
    %246 = vmatpush1.msra.mxu0 0.0
    %247 = vmatprep.subr.mxu0 0.0
    %248 = vmatpush1.msra.mxu0 0.0
    %249 = vmatprep.subr.mxu0 0.0
    %250 = vmatpush1.msra.mxu0 0.0
    %251 = vmatprep.subr.mxu0 0.0
    %252 = vmatpush1.msra.mxu0 0.0
    %253 = vmatprep.subr.mxu0 0.0
    %254 = vmatpush1.msra.mxu0 0.0
    %255 = vmatprep.subr.mxu0 0.0
    %256 = vmatpush1.msra.mxu0 0.0
    %257 = vmatprep.subr.mxu0 0.0
    %258 = vmatpush1.msra.mxu0 0.0
    %259 = vmatprep.subr.mxu0 0.0
    %260 = vmatpush1.msra.mxu0 0.0
    %261 = vmatprep.mubr.f32.mxu0 0.0
    %262 = vmatmul.mubr.f32.gmra.mrb[0].mxu0 %v102
    %v263 = vpop.f32.mrb[0].mxu0
    %v264 = vadd.f32 %v98, %v263
    %v265 = vpop.f32.mrb[0].mxu0
    %266 = vmatprep.mubr.f32.mxu0 0.0
    %267 = vmatmul.mubr.f32.gmra.mrb[0].mxu0 %v105
    %v268 = vpop.f32.mrb[0].mxu0
    %v269 = vadd.f32 %v98, %v268
    %v270 = vpop.f32.mrb[0].mxu0
    %271 = vmatprep.mubr.f32.mxu0 0.0
    %272 = vmatmul.mubr.f32.gmra.mrb[0].mxu0 %v108
    %v273 = vpop.f32.mrb[0].mxu0
    %v274 = vadd.f32 %v98, %v273
    %v275 = vpop.f32.mrb[0].mxu0
    %276 = vmatprep.mubr.f32.mxu0 0.0
    %277 = vmatmul.mubr.f32.gmra.mrb[0].mxu0 %v111
    %v278 = vpop.f32.mrb[0].mxu0
    %v279 = vadd.f32 %v98, %v278
    %v280 = vpop.f32.mrb[0].mxu0
    %281 = vmatprep.mubr.f32.mxu0 0.0
    %282 = vmatmul.mubr.f32.gmra.mrb[0].mxu0 %v114
    %v283 = vpop.f32.mrb[0].mxu0
    %v284 = vadd.f32 %v98, %v283
    %v285 = vpop.f32.mrb[0].mxu0
    %286 = vmatprep.mubr.f32.mxu0 0.0
    %287 = vmatmul.mubr.f32.gmra.mrb[0].mxu0 %v117
    %v288 = vpop.f32.mrb[0].mxu0
    %v289 = vadd.f32 %v98, %v288
    %v290 = vpop.f32.mrb[0].mxu0
    %291 = vmatprep.mubr.f32.mxu0 0.0
    %292 = vmatmul.mubr.f32.gmra.mrb[0].mxu0 %v120
    %v293 = vpop.f32.mrb[0].mxu0
    %v294 = vadd.f32 %v98, %v293
    %v295 = vpop.f32.mrb[0].mxu0
    %296 = vmatprep.mubr.f32.mxu0 0.0
    %297 = vmatmul.mubr.f32.gmra.mrb[0].mxu0 %v123
    %v298 = vpop.f32.mrb[0].mxu0
    %v299 = vadd.f32 %v98, %v298
    %v300 = vpop.f32.mrb[0].mxu0
    %301 = vmatprep.mubr.f32.mxu0 0.0
    %302 = vmatmul.mubr.f32.gmra.mrb[0].mxu0 %v126
    %v303 = vpop.f32.mrb[0].mxu0
    %v304 = vadd.f32 %v98, %v303
    %v305 = vpop.f32.mrb[0].mxu0
    %306 = vmatprep.mubr.f32.mxu0 0.0
    %307 = vmatmul.mubr.f32.gmra.mrb[0].mxu0 %v129
    %v308 = vpop.f32.mrb[0].mxu0
    %v309 = vadd.f32 %v98, %v308
    %v310 = vpop.f32.mrb[0].mxu0
    %311 = vmatprep.mubr.f32.mxu0 0.0
    %312 = vmatmul.mubr.f32.gmra.mrb[0].mxu0 %v132
    %v313 = vpop.f32.mrb[0].mxu0
    %v314 = vadd.f32 %v98, %v313
    %v315 = vpop.f32.mrb[0].mxu0
    %316 = vmatprep.mubr.f32.mxu0 0.0
    %317 = vmatmul.mubr.f32.gmra.mrb[0].mxu0 %v135
    %v318 = vpop.f32.mrb[0].mxu0
    %v319 = vadd.f32 %v98, %v318
    %v320 = vpop.f32.mrb[0].mxu0
    %321 = vmatprep.mubr.f32.mxu0 0.0
    %322 = vmatmul.mubr.f32.gmra.mrb[0].mxu0 %v138
    %v323 = vpop.f32.mrb[0].mxu0
    %v324 = vadd.f32 %v98, %v323
    %v325 = vpop.f32.mrb[0].mxu0
    %326 = vmatprep.mubr.f32.mxu0 0.0
    %327 = vmatmul.mubr.f32.gmra.mrb[0].mxu0 %v141
    %v328 = vpop.f32.mrb[0].mxu0
    %v329 = vadd.f32 %v98, %v328
    %v330 = vpop.f32.mrb[0].mxu0
    %331 = vmatprep.mubr.f32.mxu0 0.0
    %332 = vmatmul.mubr.f32.gmra.mrb[0].mxu0 %v144
    %v333 = vpop.f32.mrb[0].mxu0
    %v334 = vadd.f32 %v98, %v333
    %v335 = vpop.f32.mrb[0].mxu0
    %336 = vmatprep.mubr.f32.mxu0 0.0
    %337 = vmatmul.mubr.f32.gmra.mrb[0].mxu0 %v147
    %v338 = vpop.f32.mrb[0].mxu0
    %v339 = vadd.f32 %v98, %v338
    %v340 = vpop.f32.mrb[0].mxu0
    %341 = vmatprep.mubr.f32.mxu0 0.0
    %342 = vmatmul.mubr.f32.gmra.mrb[0].mxu0 %v150
    %v343 = vpop.f32.mrb[0].mxu0
    %v344 = vadd.f32 %v98, %v343
    %v345 = vpop.f32.mrb[0].mxu0
    %346 = vmatprep.mubr.f32.mxu0 0.0
    %347 = vmatmul.mubr.f32.gmra.mrb[0].mxu0 %v153
    %v348 = vpop.f32.mrb[0].mxu0
    %v349 = vadd.f32 %v98, %v348
    %v350 = vpop.f32.mrb[0].mxu0
    %351 = vmatprep.mubr.f32.mxu0 0.0
    %352 = vmatmul.mubr.f32.gmra.mrb[0].mxu0 %v156
    %v353 = vpop.f32.mrb[0].mxu0
    %v354 = vadd.f32 %v98, %v353
    %v355 = vpop.f32.mrb[0].mxu0
    %356 = vmatprep.mubr.f32.mxu0 0.0
    %357 = vmatmul.mubr.f32.gmra.mrb[0].mxu0 %v159
    %v358 = vpop.f32.mrb[0].mxu0
    %v359 = vadd.f32 %v98, %v358
    %v360 = vpop.f32.mrb[0].mxu0
    %361 = vmatprep.mubr.f32.mxu0 0.0
    %362 = vmatmul.mubr.f32.gmra.mrb[0].mxu0 %v162
    %v363 = vpop.f32.mrb[0].mxu0
    %v364 = vadd.f32 %v98, %v363
    %v365 = vpop.f32.mrb[0].mxu0
    %366 = vmatprep.mubr.f32.mxu0 0.0
    %367 = vmatmul.mubr.f32.gmra.mrb[0].mxu0 %v165
    %v368 = vpop.f32.mrb[0].mxu0
    %v369 = vadd.f32 %v98, %v368
    %v370 = vpop.f32.mrb[0].mxu0
    %371 = vmatprep.mubr.f32.mxu0 0.0
    %372 = vmatmul.mubr.f32.gmra.mrb[0].mxu0 %v168
    %v373 = vpop.f32.mrb[0].mxu0
    %v374 = vadd.f32 %v98, %v373
    %v375 = vpop.f32.mrb[0].mxu0
    %376 = vmatprep.mubr.f32.mxu0 0.0
    %377 = vmatmul.mubr.f32.gmra.mrb[0].mxu0 %v171
    %v378 = vpop.f32.mrb[0].mxu0
    %v379 = vadd.f32 %v98, %v378
    %v380 = vpop.f32.mrb[0].mxu0
    %381 = vmatprep.mubr.f32.mxu0 0.0
    %382 = vmatmul.mubr.f32.gmra.mrb[0].mxu0 %v174
    %v383 = vpop.f32.mrb[0].mxu0
    %v384 = vadd.f32 %v98, %v383
    %v385 = vpop.f32.mrb[0].mxu0
    %386 = vmatprep.mubr.f32.mxu0 0.0
    %387 = vmatmul.mubr.f32.gmra.mrb[0].mxu0 %v177
    %v388 = vpop.f32.mrb[0].mxu0
    %v389 = vadd.f32 %v98, %v388
    %v390 = vpop.f32.mrb[0].mxu0
    %391 = vmatprep.mubr.f32.mxu0 0.0
    %392 = vmatmul.mubr.f32.gmra.mrb[0].mxu0 %v180
    %v393 = vpop.f32.mrb[0].mxu0
    %v394 = vadd.f32 %v98, %v393
    %v395 = vpop.f32.mrb[0].mxu0
    %396 = vmatprep.mubr.f32.mxu0 0.0
    %397 = vmatmul.mubr.f32.gmra.mrb[0].mxu0 %v183
    %v398 = vpop.f32.mrb[0].mxu0
    %v399 = vadd.f32 %v98, %v398
    %v400 = vpop.f32.mrb[0].mxu0
    %401 = vmatprep.mubr.f32.mxu0 0.0
    %402 = vmatmul.mubr.f32.gmra.mrb[0].mxu0 %v186
    %v403 = vpop.f32.mrb[0].mxu0
    %v404 = vadd.f32 %v98, %v403
    %v405 = vpop.f32.mrb[0].mxu0
    %406 = vmatprep.mubr.f32.mxu0 0.0
    %407 = vmatmul.mubr.f32.gmra.mrb[0].mxu0 %v189
    %v408 = vpop.f32.mrb[0].mxu0
    %v409 = vadd.f32 %v98, %v408
    %v410 = vpop.f32.mrb[0].mxu0
    %411 = vmatprep.mubr.f32.mxu0 0.0
    %412 = vmatmul.mubr.f32.gmra.mrb[0].mxu0 %v192
    %v413 = vpop.f32.mrb[0].mxu0
    %v414 = vadd.f32 %v98, %v413
    %v415 = vpop.f32.mrb[0].mxu0
    %416 = vmatprep.mubr.f32.mxu0 0.0
    %417 = vmatmul.mubr.f32.gmra.mrb[0].mxu0 %v195
    %v418 = vpop.f32.mrb[0].mxu0
    %v419 = vadd.f32 %v98, %v418
    %v420 = vpop.f32.mrb[0].mxu0
    %421 = vdwg.mxu0
    %v422 = vmax.f32 %v264, 0.0
    %v423 = vmax.f32 %v269, 0.0
    %v424 = vmax.f32 %v274, 0.0
    %v425 = vmax.f32 %v279, 0.0
    %v426 = vmax.f32 %v284, 0.0
    %v427 = vmax.f32 %v289, 0.0
    %v428 = vmax.f32 %v294, 0.0
    %v429 = vmax.f32 %v299, 0.0
    %v430 = vmax.f32 %v304, 0.0
    %v431 = vmax.f32 %v309, 0.0
    %v432 = vmax.f32 %v314, 0.0
    %v433 = vmax.f32 %v319, 0.0
    %v434 = vmax.f32 %v324, 0.0
    %v435 = vmax.f32 %v329, 0.0
    %v436 = vmax.f32 %v334, 0.0
    %v437 = vmax.f32 %v339, 0.0
    %v438 = vmax.f32 %v344, 0.0
    %v439 = vmax.f32 %v349, 0.0
    %v440 = vmax.f32 %v354, 0.0
    %v441 = vmax.f32 %v359, 0.0
    %v442 = vmax.f32 %v364, 0.0
    %v443 = vmax.f32 %v369, 0.0
    %v444 = vmax.f32 %v374, 0.0
    %v445 = vmax.f32 %v379, 0.0
    %v446 = vmax.f32 %v384, 0.0
    %v447 = vmax.f32 %v389, 0.0
    %v448 = vmax.f32 %v394, 0.0
    %v449 = vmax.f32 %v399, 0.0
    %v450 = vmax.f32 %v404, 0.0
    %v451 = vmax.f32 %v409, 0.0
    %v452 = vmax.f32 %v414, 0.0
    %v453 = vmax.f32 %v419, 0.0
    %vm454 = vcmp.ne.f32.partialorder %v264, %v264
    %vm455 = vcmp.ne.f32.partialorder %v269, %v269
    %vm456 = vcmp.ne.f32.partialorder %v274, %v274
    %vm457 = vcmp.ne.f32.partialorder %v279, %v279
    %vm458 = vcmp.ne.f32.partialorder %v284, %v284
    %vm459 = vcmp.ne.f32.partialorder %v289, %v289
    %vm460 = vcmp.ne.f32.partialorder %v294, %v294
    %vm461 = vcmp.ne.f32.partialorder %v299, %v299
    %vm462 = vcmp.ne.f32.partialorder %v304, %v304
    %vm463 = vcmp.ne.f32.partialorder %v309, %v309
    %vm464 = vcmp.ne.f32.partialorder %v314, %v314
    %vm465 = vcmp.ne.f32.partialorder %v319, %v319
    %vm466 = vcmp.ne.f32.partialorder %v324, %v324
    %vm467 = vcmp.ne.f32.partialorder %v329, %v329
    %vm468 = vcmp.ne.f32.partialorder %v334, %v334
    %vm469 = vcmp.ne.f32.partialorder %v339, %v339
    %vm470 = vcmp.ne.f32.partialorder %v344, %v344
    %vm471 = vcmp.ne.f32.partialorder %v349, %v349
    %vm472 = vcmp.ne.f32.partialorder %v354, %v354
    %vm473 = vcmp.ne.f32.partialorder %v359, %v359
    %vm474 = vcmp.ne.f32.partialorder %v364, %v364
    %vm475 = vcmp.ne.f32.partialorder %v369, %v369
    %vm476 = vcmp.ne.f32.partialorder %v374, %v374
    %vm477 = vcmp.ne.f32.partialorder %v379, %v379
    %vm478 = vcmp.ne.f32.partialorder %v384, %v384
    %vm479 = vcmp.ne.f32.partialorder %v389, %v389
    %vm480 = vcmp.ne.f32.partialorder %v394, %v394
    %vm481 = vcmp.ne.f32.partialorder %v399, %v399
    %vm482 = vcmp.ne.f32.partialorder %v404, %v404
    %vm483 = vcmp.ne.f32.partialorder %v409, %v409
    %vm484 = vcmp.ne.f32.partialorder %v414, %v414
    %vm485 = vcmp.ne.f32.partialorder %v419, %v419
    %v486 = vadd.f32 %v264, 0.0
    %v487 = vadd.f32 %v269, 0.0
    %v488 = vadd.f32 %v274, 0.0
    %v489 = vadd.f32 %v279, 0.0
    %v490 = vadd.f32 %v284, 0.0
    %v491 = vadd.f32 %v289, 0.0
    %v492 = vadd.f32 %v294, 0.0
    %v493 = vadd.f32 %v299, 0.0
    %v494 = vadd.f32 %v304, 0.0
    %v495 = vadd.f32 %v309, 0.0
    %v496 = vadd.f32 %v314, 0.0
    %v497 = vadd.f32 %v319, 0.0
    %v498 = vadd.f32 %v324, 0.0
    %v499 = vadd.f32 %v329, 0.0
    %v500 = vadd.f32 %v334, 0.0
    %v501 = vadd.f32 %v339, 0.0
    %v502 = vadd.f32 %v344, 0.0
    %v503 = vadd.f32 %v349, 0.0
    %v504 = vadd.f32 %v354, 0.0
    %v505 = vadd.f32 %v359, 0.0
    %v506 = vadd.f32 %v364, 0.0
    %v507 = vadd.f32 %v369, 0.0
    %v508 = vadd.f32 %v374, 0.0
    %v509 = vadd.f32 %v379, 0.0
    %v510 = vadd.f32 %v384, 0.0
    %v511 = vadd.f32 %v389, 0.0
    %v512 = vadd.f32 %v394, 0.0
    %v513 = vadd.f32 %v399, 0.0
    %v514 = vadd.f32 %v404, 0.0
    %v515 = vadd.f32 %v409, 0.0
    %v516 = vadd.f32 %v414, 0.0
    %v517 = vadd.f32 %v419, 0.0
    %v518 = vand.u32 2147483647, %v264
    %v519 = vand.u32 2147483647, %v269
    %v520 = vand.u32 2147483647, %v274
    %v521 = vand.u32 2147483647, %v279
    %v522 = vand.u32 2147483647, %v284
    %v523 = vand.u32 2147483647, %v289
    %v524 = vand.u32 2147483647, %v294
    %v525 = vand.u32 2147483647, %v299
    %v526 = vand.u32 2147483647, %v304
    %v527 = vand.u32 2147483647, %v309
    %v528 = vand.u32 2147483647, %v314
    %v529 = vand.u32 2147483647, %v319
    %v530 = vand.u32 2147483647, %v324
    %v531 = vand.u32 2147483647, %v329
    %v532 = vand.u32 2147483647, %v334
    %v533 = vand.u32 2147483647, %v339
    %v534 = vand.u32 2147483647, %v344
    %v535 = vand.u32 2147483647, %v349
    %v536 = vand.u32 2147483647, %v354
    %v537 = vand.u32 2147483647, %v359
    %v538 = vand.u32 2147483647, %v364
    %v539 = vand.u32 2147483647, %v369
    %v540 = vand.u32 2147483647, %v374
    %v541 = vand.u32 2147483647, %v379
    %v542 = vand.u32 2147483647, %v384
    %v543 = vand.u32 2147483647, %v389
    %v544 = vand.u32 2147483647, %v394
    %v545 = vand.u32 2147483647, %v399
    %v546 = vand.u32 2147483647, %v404
    %v547 = vand.u32 2147483647, %v409
    %v548 = vand.u32 2147483647, %v414
    %v549 = vand.u32 2147483647, %v419
    %v550 = vsub.f32 0.0, %v518
    %v551 = vsub.f32 0.0, %v519
    %v552 = vsub.f32 0.0, %v520
    %v553 = vsub.f32 0.0, %v521
    %v554 = vsub.f32 0.0, %v522
    %v555 = vsub.f32 0.0, %v523
    %v556 = vsub.f32 0.0, %v524
    %v557 = vsub.f32 0.0, %v525
    %v558 = vsub.f32 0.0, %v526
    %v559 = vsub.f32 0.0, %v527
    %v560 = vsub.f32 0.0, %v528
    %v561 = vsub.f32 0.0, %v529
    %v562 = vsub.f32 0.0, %v530
    %v563 = vsub.f32 0.0, %v531
    %v564 = vsub.f32 0.0, %v532
    %v565 = vsub.f32 0.0, %v533
    %v566 = vsub.f32 0.0, %v534
    %v567 = vsub.f32 0.0, %v535
    %v568 = vsub.f32 0.0, %v536
    %v569 = vsub.f32 0.0, %v537
    %v570 = vsub.f32 0.0, %v538
    %v571 = vsub.f32 0.0, %v539
    %v572 = vsub.f32 0.0, %v540
    %v573 = vsub.f32 0.0, %v541
    %v574 = vsub.f32 0.0, %v542
    %v575 = vsub.f32 0.0, %v543
    %v576 = vsub.f32 0.0, %v544
    %v577 = vsub.f32 0.0, %v545
    %v578 = vsub.f32 0.0, %v546
    %v579 = vsub.f32 0.0, %v547
    %v580 = vsub.f32 0.0, %v548
    %v581 = vsub.f32 0.0, %v549
    %v582 = vmul.f32 %v550, 1.442695
    %v583 = vpow.pop %v582
    %v584 = vmul.f32 %v551, 1.442695
    %v585 = vpow.pop %v584
    %v586 = vmul.f32 %v552, 1.442695
    %v587 = vpow.pop %v586
    %v588 = vmul.f32 %v553, 1.442695
    %v589 = vpow.pop %v588
    %v590 = vmul.f32 %v554, 1.442695
    %v591 = vpow.pop %v590
    %v592 = vmul.f32 %v555, 1.442695
    %v593 = vpow.pop %v592
    %v594 = vmul.f32 %v556, 1.442695
    %v595 = vpow.pop %v594
    %v596 = vmul.f32 %v557, 1.442695
    %v597 = vpow.pop %v596
    %v598 = vmul.f32 %v558, 1.442695
    %v599 = vpow.pop %v598
    %v600 = vmul.f32 %v559, 1.442695
    %v601 = vpow.pop %v600
    %v602 = vmul.f32 %v560, 1.442695
    %v603 = vpow.pop %v602
    %v604 = vmul.f32 %v561, 1.442695
    %v605 = vpow.pop %v604
    %v606 = vmul.f32 %v562, 1.442695
    %v607 = vpow.pop %v606
    %v608 = vmul.f32 %v563, 1.442695
    %v609 = vpow.pop %v608
    %v610 = vmul.f32 %v564, 1.442695
    %v611 = vpow.pop %v610
    %v612 = vmul.f32 %v565, 1.442695
    %v613 = vpow.pop %v612
    %v614 = vmul.f32 %v566, 1.442695
    %v615 = vpow.pop %v614
    %v616 = vmul.f32 %v567, 1.442695
    %v617 = vpow.pop %v616
    %v618 = vmul.f32 %v568, 1.442695
    %v619 = vpow.pop %v618
    %v620 = vmul.f32 %v569, 1.442695
    %v621 = vpow.pop %v620
    %v622 = vmul.f32 %v570, 1.442695
    %v623 = vpow.pop %v622
    %v624 = vmul.f32 %v571, 1.442695
    %v625 = vpow.pop %v624
    %v626 = vmul.f32 %v572, 1.442695
    %v627 = vpow.pop %v626
    %v628 = vmul.f32 %v573, 1.442695
    %v629 = vpow.pop %v628
    %v630 = vmul.f32 %v574, 1.442695
    %v631 = vpow.pop %v630
    %v632 = vmul.f32 %v575, 1.442695
    %v633 = vpow.pop %v632
    %v634 = vmul.f32 %v576, 1.442695
    %v635 = vpow.pop %v634
    %v636 = vmul.f32 %v577, 1.442695
    %v637 = vpow.pop %v636
    %v638 = vmul.f32 %v578, 1.442695
    %v639 = vpow.pop %v638
    %v640 = vmul.f32 %v579, 1.442695
    %v641 = vpow.pop %v640
    %v642 = vmul.f32 %v580, 1.442695
    %v643 = vpow.pop %v642
    %v644 = vmul.f32 %v581, 1.442695
    %v645 = vpow.pop %v644
    %v646 = vadd.f32 %v583, 1.0
    %v647 = vlog2.pop %v646
    %v648 = vmul.f32 %v647, 0.6931472
    %v649 = vmul.f32 -0.5, %v583
    %v650 = vadd.f32 %v649, 1.0
    %v651 = vmul.f32 %v650, %v583
    %v652 = vand.u32 2147483647, %v583
    %vm653 = vcmp.lt.f32.partialorder %v652, 0.0004427343
    %v654 = vsel %vm653, %v651, %v648
    %v655 = vadd.f32 %v585, 1.0
    %v656 = vlog2.pop %v655
    %v657 = vmul.f32 %v656, 0.6931472
    %v658 = vmul.f32 -0.5, %v585
    %v659 = vadd.f32 %v658, 1.0
    %v660 = vmul.f32 %v659, %v585
    %v661 = vand.u32 2147483647, %v585
    %vm662 = vcmp.lt.f32.partialorder %v661, 0.0004427343
    %v663 = vsel %vm662, %v660, %v657
    %v664 = vadd.f32 %v587, 1.0
    %v665 = vlog2.pop %v664
    %v666 = vmul.f32 %v665, 0.6931472
    %v667 = vmul.f32 -0.5, %v587
    %v668 = vadd.f32 %v667, 1.0
    %v669 = vmul.f32 %v668, %v587
    %v670 = vand.u32 2147483647, %v587
    %vm671 = vcmp.lt.f32.partialorder %v670, 0.0004427343
    %v672 = vsel %vm671, %v669, %v666
    %v673 = vadd.f32 %v589, 1.0
    %v674 = vlog2.pop %v673
    %v675 = vmul.f32 %v674, 0.6931472
    %v676 = vmul.f32 -0.5, %v589
    %v677 = vadd.f32 %v676, 1.0
    %v678 = vmul.f32 %v677, %v589
    %v679 = vand.u32 2147483647, %v589
    %vm680 = vcmp.lt.f32.partialorder %v679, 0.0004427343
    %v681 = vsel %vm680, %v678, %v675
    %v682 = vadd.f32 %v591, 1.0
    %v683 = vlog2.pop %v682
    %v684 = vmul.f32 %v683, 0.6931472
    %v685 = vmul.f32 -0.5, %v591
    %v686 = vadd.f32 %v685, 1.0
    %v687 = vmul.f32 %v686, %v591
    %v688 = vand.u32 2147483647, %v591
    %vm689 = vcmp.lt.f32.partialorder %v688, 0.0004427343
    %v690 = vsel %vm689, %v687, %v684
    %v691 = vadd.f32 %v593, 1.0
    %v692 = vlog2.pop %v691
    %v693 = vmul.f32 %v692, 0.6931472
    %v694 = vmul.f32 -0.5, %v593
    %v695 = vadd.f32 %v694, 1.0
    %v696 = vmul.f32 %v695, %v593
    %v697 = vand.u32 2147483647, %v593
    %vm698 = vcmp.lt.f32.partialorder %v697, 0.0004427343
    %v699 = vsel %vm698, %v696, %v693
    %v700 = vadd.f32 %v595, 1.0
    %v701 = vlog2.pop %v700
    %v702 = vmul.f32 %v701, 0.6931472
    %v703 = vmul.f32 -0.5, %v595
    %v704 = vadd.f32 %v703, 1.0
    %v705 = vmul.f32 %v704, %v595
    %v706 = vand.u32 2147483647, %v595
    %vm707 = vcmp.lt.f32.partialorder %v706, 0.0004427343
    %v708 = vsel %vm707, %v705, %v702
    %v709 = vadd.f32 %v597, 1.0
    %v710 = vlog2.pop %v709
    %v711 = vmul.f32 %v710, 0.6931472
    %v712 = vmul.f32 -0.5, %v597
    %v713 = vadd.f32 %v712, 1.0
    %v714 = vmul.f32 %v713, %v597
    %v715 = vand.u32 2147483647, %v597
    %vm716 = vcmp.lt.f32.partialorder %v715, 0.0004427343
    %v717 = vsel %vm716, %v714, %v711
    %v718 = vadd.f32 %v599, 1.0
    %v719 = vlog2.pop %v718
    %v720 = vmul.f32 %v719, 0.6931472
    %v721 = vmul.f32 -0.5, %v599
    %v722 = vadd.f32 %v721, 1.0
    %v723 = vmul.f32 %v722, %v599
    %v724 = vand.u32 2147483647, %v599
    %vm725 = vcmp.lt.f32.partialorder %v724, 0.0004427343
    %v726 = vsel %vm725, %v723, %v720
    %v727 = vadd.f32 %v601, 1.0
    %v728 = vlog2.pop %v727
    %v729 = vmul.f32 %v728, 0.6931472
    %v730 = vmul.f32 -0.5, %v601
    %v731 = vadd.f32 %v730, 1.0
    %v732 = vmul.f32 %v731, %v601
    %v733 = vand.u32 2147483647, %v601
    %vm734 = vcmp.lt.f32.partialorder %v733, 0.0004427343
    %v735 = vsel %vm734, %v732, %v729
    %v736 = vadd.f32 %v603, 1.0
    %v737 = vlog2.pop %v736
    %v738 = vmul.f32 %v737, 0.6931472
    %v739 = vmul.f32 -0.5, %v603
    %v740 = vadd.f32 %v739, 1.0
    %v741 = vmul.f32 %v740, %v603
    %v742 = vand.u32 2147483647, %v603
    %vm743 = vcmp.lt.f32.partialorder %v742, 0.0004427343
    %v744 = vsel %vm743, %v741, %v738
    %v745 = vadd.f32 %v605, 1.0
    %v746 = vlog2.pop %v745
    %v747 = vmul.f32 %v746, 0.6931472
    %v748 = vmul.f32 -0.5, %v605
    %v749 = vadd.f32 %v748, 1.0
    %v750 = vmul.f32 %v749, %v605
    %v751 = vand.u32 2147483647, %v605
    %vm752 = vcmp.lt.f32.partialorder %v751, 0.0004427343
    %v753 = vsel %vm752, %v750, %v747
    %v754 = vadd.f32 %v607, 1.0
    %v755 = vlog2.pop %v754
    %v756 = vmul.f32 %v755, 0.6931472
    %v757 = vmul.f32 -0.5, %v607
    %v758 = vadd.f32 %v757, 1.0
    %v759 = vmul.f32 %v758, %v607
    %v760 = vand.u32 2147483647, %v607
    %vm761 = vcmp.lt.f32.partialorder %v760, 0.0004427343
    %v762 = vsel %vm761, %v759, %v756
    %v763 = vadd.f32 %v609, 1.0
    %v764 = vlog2.pop %v763
    %v765 = vmul.f32 %v764, 0.6931472
    %v766 = vmul.f32 -0.5, %v609
    %v767 = vadd.f32 %v766, 1.0
    %v768 = vmul.f32 %v767, %v609
    %v769 = vand.u32 2147483647, %v609
    %vm770 = vcmp.lt.f32.partialorder %v769, 0.0004427343
    %v771 = vsel %vm770, %v768, %v765
    %v772 = vadd.f32 %v611, 1.0
    %v773 = vlog2.pop %v772
    %v774 = vmul.f32 %v773, 0.6931472
    %v775 = vmul.f32 -0.5, %v611
    %v776 = vadd.f32 %v775, 1.0
    %v777 = vmul.f32 %v776, %v611
    %v778 = vand.u32 2147483647, %v611
    %vm779 = vcmp.lt.f32.partialorder %v778, 0.0004427343
    %v780 = vsel %vm779, %v777, %v774
    %v781 = vadd.f32 %v613, 1.0
    %v782 = vlog2.pop %v781
    %v783 = vmul.f32 %v782, 0.6931472
    %v784 = vmul.f32 -0.5, %v613
    %v785 = vadd.f32 %v784, 1.0
    %v786 = vmul.f32 %v785, %v613
    %v787 = vand.u32 2147483647, %v613
    %vm788 = vcmp.lt.f32.partialorder %v787, 0.0004427343
    %v789 = vsel %vm788, %v786, %v783
    %v790 = vadd.f32 %v615, 1.0
    %v791 = vlog2.pop %v790
    %v792 = vmul.f32 %v791, 0.6931472
    %v793 = vmul.f32 -0.5, %v615
    %v794 = vadd.f32 %v793, 1.0
    %v795 = vmul.f32 %v794, %v615
    %v796 = vand.u32 2147483647, %v615
    %vm797 = vcmp.lt.f32.partialorder %v796, 0.0004427343
    %v798 = vsel %vm797, %v795, %v792
    %v799 = vadd.f32 %v617, 1.0
    %v800 = vlog2.pop %v799
    %v801 = vmul.f32 %v800, 0.6931472
    %v802 = vmul.f32 -0.5, %v617
    %v803 = vadd.f32 %v802, 1.0
    %v804 = vmul.f32 %v803, %v617
    %v805 = vand.u32 2147483647, %v617
    %vm806 = vcmp.lt.f32.partialorder %v805, 0.0004427343
    %v807 = vsel %vm806, %v804, %v801
    %v808 = vadd.f32 %v619, 1.0
    %v809 = vlog2.pop %v808
    %v810 = vmul.f32 %v809, 0.6931472
    %v811 = vmul.f32 -0.5, %v619
    %v812 = vadd.f32 %v811, 1.0
    %v813 = vmul.f32 %v812, %v619
    %v814 = vand.u32 2147483647, %v619
    %vm815 = vcmp.lt.f32.partialorder %v814, 0.0004427343
    %v816 = vsel %vm815, %v813, %v810
    %v817 = vadd.f32 %v621, 1.0
    %v818 = vlog2.pop %v817
    %v819 = vmul.f32 %v818, 0.6931472
    %v820 = vmul.f32 -0.5, %v621
    %v821 = vadd.f32 %v820, 1.0
    %v822 = vmul.f32 %v821, %v621
    %v823 = vand.u32 2147483647, %v621
    %vm824 = vcmp.lt.f32.partialorder %v823, 0.0004427343
    %v825 = vsel %vm824, %v822, %v819
    %v826 = vadd.f32 %v623, 1.0
    %v827 = vlog2.pop %v826
    %v828 = vmul.f32 %v827, 0.6931472
    %v829 = vmul.f32 -0.5, %v623
    %v830 = vadd.f32 %v829, 1.0
    %v831 = vmul.f32 %v830, %v623
    %v832 = vand.u32 2147483647, %v623
    %vm833 = vcmp.lt.f32.partialorder %v832, 0.0004427343
    %v834 = vsel %vm833, %v831, %v828
    %v835 = vadd.f32 %v625, 1.0
    %v836 = vlog2.pop %v835
    %v837 = vmul.f32 %v836, 0.6931472
    %v838 = vmul.f32 -0.5, %v625
    %v839 = vadd.f32 %v838, 1.0
    %v840 = vmul.f32 %v839, %v625
    %v841 = vand.u32 2147483647, %v625
    %vm842 = vcmp.lt.f32.partialorder %v841, 0.0004427343
    %v843 = vsel %vm842, %v840, %v837
    %v844 = vadd.f32 %v627, 1.0
    %v845 = vlog2.pop %v844
    %v846 = vmul.f32 %v845, 0.6931472
    %v847 = vmul.f32 -0.5, %v627
    %v848 = vadd.f32 %v847, 1.0
    %v849 = vmul.f32 %v848, %v627
    %v850 = vand.u32 2147483647, %v627
    %vm851 = vcmp.lt.f32.partialorder %v850, 0.0004427343
    %v852 = vsel %vm851, %v849, %v846
    %v853 = vadd.f32 %v629, 1.0
    %v854 = vlog2.pop %v853
    %v855 = vmul.f32 %v854, 0.6931472
    %v856 = vmul.f32 -0.5, %v629
    %v857 = vadd.f32 %v856, 1.0
    %v858 = vmul.f32 %v857, %v629
    %v859 = vand.u32 2147483647, %v629
    %vm860 = vcmp.lt.f32.partialorder %v859, 0.0004427343
    %v861 = vsel %vm860, %v858, %v855
    %v862 = vadd.f32 %v631, 1.0
    %v863 = vlog2.pop %v862
    %v864 = vmul.f32 %v863, 0.6931472
    %v865 = vmul.f32 -0.5, %v631
    %v866 = vadd.f32 %v865, 1.0
    %v867 = vmul.f32 %v866, %v631
    %v868 = vand.u32 2147483647, %v631
    %vm869 = vcmp.lt.f32.partialorder %v868, 0.0004427343
    %v870 = vsel %vm869, %v867, %v864
    %v871 = vadd.f32 %v633, 1.0
    %v872 = vlog2.pop %v871
    %v873 = vmul.f32 %v872, 0.6931472
    %v874 = vmul.f32 -0.5, %v633
    %v875 = vadd.f32 %v874, 1.0
    %v876 = vmul.f32 %v875, %v633
    %v877 = vand.u32 2147483647, %v633
    %vm878 = vcmp.lt.f32.partialorder %v877, 0.0004427343
    %v879 = vsel %vm878, %v876, %v873
    %v880 = vadd.f32 %v635, 1.0
    %v881 = vlog2.pop %v880
    %v882 = vmul.f32 %v881, 0.6931472
    %v883 = vmul.f32 -0.5, %v635
    %v884 = vadd.f32 %v883, 1.0
    %v885 = vmul.f32 %v884, %v635
    %v886 = vand.u32 2147483647, %v635
    %vm887 = vcmp.lt.f32.partialorder %v886, 0.0004427343
    %v888 = vsel %vm887, %v885, %v882
    %v889 = vadd.f32 %v637, 1.0
    %v890 = vlog2.pop %v889
    %v891 = vmul.f32 %v890, 0.6931472
    %v892 = vmul.f32 -0.5, %v637
    %v893 = vadd.f32 %v892, 1.0
    %v894 = vmul.f32 %v893, %v637
    %v895 = vand.u32 2147483647, %v637
    %vm896 = vcmp.lt.f32.partialorder %v895, 0.0004427343
    %v897 = vsel %vm896, %v894, %v891
    %v898 = vadd.f32 %v639, 1.0
    %v899 = vlog2.pop %v898
    %v900 = vmul.f32 %v899, 0.6931472
    %v901 = vmul.f32 -0.5, %v639
    %v902 = vadd.f32 %v901, 1.0
    %v903 = vmul.f32 %v902, %v639
    %v904 = vand.u32 2147483647, %v639
    %vm905 = vcmp.lt.f32.partialorder %v904, 0.0004427343
    %v906 = vsel %vm905, %v903, %v900
    %v907 = vadd.f32 %v641, 1.0
    %v908 = vlog2.pop %v907
    %v909 = vmul.f32 %v908, 0.6931472
    %v910 = vmul.f32 -0.5, %v641
    %v911 = vadd.f32 %v910, 1.0
    %v912 = vmul.f32 %v911, %v641
    %v913 = vand.u32 2147483647, %v641
    %vm914 = vcmp.lt.f32.partialorder %v913, 0.0004427343
    %v915 = vsel %vm914, %v912, %v909
    %v916 = vadd.f32 %v643, 1.0
    %v917 = vlog2.pop %v916
    %v918 = vmul.f32 %v917, 0.6931472
    %v919 = vmul.f32 -0.5, %v643
    %v920 = vadd.f32 %v919, 1.0
    %v921 = vmul.f32 %v920, %v643
    %v922 = vand.u32 2147483647, %v643
    %vm923 = vcmp.lt.f32.partialorder %v922, 0.0004427343
    %v924 = vsel %vm923, %v921, %v918
    %v925 = vadd.f32 %v645, 1.0
    %v926 = vlog2.pop %v925
    %v927 = vmul.f32 %v926, 0.6931472
    %v928 = vmul.f32 -0.5, %v645
    %v929 = vadd.f32 %v928, 1.0
    %v930 = vmul.f32 %v929, %v645
    %v931 = vand.u32 2147483647, %v645
    %vm932 = vcmp.lt.f32.partialorder %v931, 0.0004427343
    %v933 = vsel %vm932, %v930, %v927
    %v934 = vadd.f32 %v422, %v654
    %v935 = vadd.f32 %v423, %v663
    %v936 = vadd.f32 %v424, %v672
    %v937 = vadd.f32 %v425, %v681
    %v938 = vadd.f32 %v426, %v690
    %v939 = vadd.f32 %v427, %v699
    %v940 = vadd.f32 %v428, %v708
    %v941 = vadd.f32 %v429, %v717
    %v942 = vadd.f32 %v430, %v726
    %v943 = vadd.f32 %v431, %v735
    %v944 = vadd.f32 %v432, %v744
    %v945 = vadd.f32 %v433, %v753
    %v946 = vadd.f32 %v434, %v762
    %v947 = vadd.f32 %v435, %v771
    %v948 = vadd.f32 %v436, %v780
    %v949 = vadd.f32 %v437, %v789
    %v950 = vadd.f32 %v438, %v798
    %v951 = vadd.f32 %v439, %v807
    %v952 = vadd.f32 %v440, %v816
    %v953 = vadd.f32 %v441, %v825
    %v954 = vadd.f32 %v442, %v834
    %v955 = vadd.f32 %v443, %v843
    %v956 = vadd.f32 %v444, %v852
    %v957 = vadd.f32 %v445, %v861
    %v958 = vadd.f32 %v446, %v870
    %v959 = vadd.f32 %v447, %v879
    %v960 = vadd.f32 %v448, %v888
    %v961 = vadd.f32 %v449, %v897
    %v962 = vadd.f32 %v450, %v906
    %v963 = vadd.f32 %v451, %v915
    %v964 = vadd.f32 %v452, %v924
    %v965 = vadd.f32 %v453, %v933
    %v966 = vsel %vm454, %v486, %v934
    %v967 = vsel %vm455, %v487, %v935
    %v968 = vsel %vm456, %v488, %v936
    %v969 = vsel %vm457, %v489, %v937
    %v970 = vsel %vm458, %v490, %v938
    %v971 = vsel %vm459, %v491, %v939
    %v972 = vsel %vm460, %v492, %v940
    %v973 = vsel %vm461, %v493, %v941
    %v974 = vsel %vm462, %v494, %v942
    %v975 = vsel %vm463, %v495, %v943
    %v976 = vsel %vm464, %v496, %v944
    %v977 = vsel %vm465, %v497, %v945
    %v978 = vsel %vm466, %v498, %v946
    %v979 = vsel %vm467, %v499, %v947
    %v980 = vsel %vm468, %v500, %v948
    %v981 = vsel %vm469, %v501, %v949
    %v982 = vsel %vm470, %v502, %v950
    %v983 = vsel %vm471, %v503, %v951
    %v984 = vsel %vm472, %v504, %v952
    %v985 = vsel %vm473, %v505, %v953
    %v986 = vsel %vm474, %v506, %v954
    %v987 = vsel %vm475, %v507, %v955
    %v988 = vsel %vm476, %v508, %v956
    %v989 = vsel %vm477, %v509, %v957
    %v990 = vsel %vm478, %v510, %v958
    %v991 = vsel %vm479, %v511, %v959
    %v992 = vsel %vm480, %v512, %v960
    %v993 = vsel %vm481, %v513, %v961
    %v994 = vsel %vm482, %v514, %v962
    %v995 = vsel %vm483, %v515, %v963
    %v996 = vsel %vm484, %v516, %v964
    %v997 = vsel %vm485, %v517, %v965
    %v998 = vsub.f32 %v966, 0.6931472
    %v999 = vsub.f32 %v967, 0.6931472
    %v1000 = vsub.f32 %v968, 0.6931472
    %v1001 = vsub.f32 %v969, 0.6931472
    %v1002 = vsub.f32 %v970, 0.6931472
    %v1003 = vsub.f32 %v971, 0.6931472
    %v1004 = vsub.f32 %v972, 0.6931472
    %v1005 = vsub.f32 %v973, 0.6931472
    %v1006 = vsub.f32 %v974, 0.6931472
    %v1007 = vsub.f32 %v975, 0.6931472
    %v1008 = vsub.f32 %v976, 0.6931472
    %v1009 = vsub.f32 %v977, 0.6931472
    %v1010 = vsub.f32 %v978, 0.6931472
    %v1011 = vsub.f32 %v979, 0.6931472
    %v1012 = vsub.f32 %v980, 0.6931472
    %v1013 = vsub.f32 %v981, 0.6931472
    %v1014 = vsub.f32 %v982, 0.6931472
    %v1015 = vsub.f32 %v983, 0.6931472
    %v1016 = vsub.f32 %v984, 0.6931472
    %v1017 = vsub.f32 %v985, 0.6931472
    %v1018 = vsub.f32 %v986, 0.6931472
    %v1019 = vsub.f32 %v987, 0.6931472
    %v1020 = vsub.f32 %v988, 0.6931472
    %v1021 = vsub.f32 %v989, 0.6931472
    %v1022 = vsub.f32 %v990, 0.6931472
    %v1023 = vsub.f32 %v991, 0.6931472
    %v1024 = vsub.f32 %v992, 0.6931472
    %v1025 = vsub.f32 %v993, 0.6931472
    %v1026 = vsub.f32 %v994, 0.6931472
    %v1027 = vsub.f32 %v995, 0.6931472
    %v1028 = vsub.f32 %v996, 0.6931472
    %v1029 = vsub.f32 %v997, 0.6931472
    %v1030 = vld [vmem:[%s7] sm:$0xff]
    %v1031 = vld [vmem:[%s7 + $0x8] sm:$0xff]
    %v1032 = vld [vmem:[%s7 + $0x10] sm:$0xff]
    %v1033 = vld [vmem:[%s7 + $0x18] sm:$0xff]
    %v1034 = vld [vmem:[%s7 + $0x20] sm:$0xff]
    %v1035 = vld [vmem:[%s7 + $0x28] sm:$0xff]
    %v1036 = vld [vmem:[%s7 + $0x30] sm:$0xff]
    %v1037 = vld [vmem:[%s7 + $0x38] sm:$0xff]
    %v1038 = vld [vmem:[%s7 + $0x40] sm:$0xff]
    %v1039 = vld [vmem:[%s7 + $0x48] sm:$0xff]
    %v1040 = vld [vmem:[%s7 + $0x50] sm:$0xff]
    %v1041 = vld [vmem:[%s7 + $0x58] sm:$0xff]
    %v1042 = vld [vmem:[%s7 + $0x60] sm:$0xff]
    %v1043 = vld [vmem:[%s7 + $0x68] sm:$0xff]
    %v1044 = vld [vmem:[%s7 + $0x70] sm:$0xff]
    %v1045 = vld [vmem:[%s7 + $0x78] sm:$0xff]
    %v1046 = vld [vmem:[%s8] sm:$0x1]
    %v1048 = vlaneseq
    %v1049 = vshrl.u32 %v1048, 7
    %v1050 = vsub.s32 0, %v1049
    %v1051 = vrot.slane %v1046, %v1050
    %1053 = vmatprep.subr.mxu0 0.0
    %1054 = vmatpush1.msra.mxu0 %v1030
    %1055 = vmatprep.subr.mxu0 0.0
    %1056 = vmatpush1.msra.mxu0 %v1031
    %1057 = vmatprep.subr.mxu0 0.0
    %1058 = vmatpush1.msra.mxu0 %v1032
    %1059 = vmatprep.subr.mxu0 0.0
    %1060 = vmatpush1.msra.mxu0 %v1033
    %1061 = vmatprep.subr.mxu0 0.0
    %1062 = vmatpush1.msra.mxu0 %v1034
    %1063 = vmatprep.subr.mxu0 0.0
    %1064 = vmatpush1.msra.mxu0 %v1035
    %1065 = vmatprep.subr.mxu0 0.0
    %1066 = vmatpush1.msra.mxu0 %v1036
    %1067 = vmatprep.subr.mxu0 0.0
    %1068 = vmatpush1.msra.mxu0 %v1037
    %1069 = vmatprep.subr.mxu0 0.0
    %1070 = vmatpush1.msra.mxu0 %v1038
    %1071 = vmatprep.subr.mxu0 0.0
    %1072 = vmatpush1.msra.mxu0 %v1039
    %1073 = vmatprep.subr.mxu0 0.0
    %1074 = vmatpush1.msra.mxu0 %v1040
    %1075 = vmatprep.subr.mxu0 0.0
    %1076 = vmatpush1.msra.mxu0 %v1041
    %1077 = vmatprep.subr.mxu0 0.0
    %1078 = vmatpush1.msra.mxu0 %v1042
    %1079 = vmatprep.subr.mxu0 0.0
    %1080 = vmatpush1.msra.mxu0 %v1043
    %1081 = vmatprep.subr.mxu0 0.0
    %1082 = vmatpush1.msra.mxu0 %v1044
    %1083 = vmatprep.subr.mxu0 0.0
    %1084 = vmatpush1.msra.mxu0 %v1045
    %1085 = vmatprep.subr.mxu0 0.0
    %1086 = vmatpush1.msra.mxu0 0.0
    %1087 = vmatprep.subr.mxu0 0.0
    %1088 = vmatpush1.msra.mxu0 0.0
    %1089 = vmatprep.subr.mxu0 0.0
    %1090 = vmatpush1.msra.mxu0 0.0
    %1091 = vmatprep.subr.mxu0 0.0
    %1092 = vmatpush1.msra.mxu0 0.0
    %1093 = vmatprep.subr.mxu0 0.0
    %1094 = vmatpush1.msra.mxu0 0.0
    %1095 = vmatprep.subr.mxu0 0.0
    %1096 = vmatpush1.msra.mxu0 0.0
    %1097 = vmatprep.subr.mxu0 0.0
    %1098 = vmatpush1.msra.mxu0 0.0
    %1099 = vmatprep.subr.mxu0 0.0
    %1100 = vmatpush1.msra.mxu0 0.0
    %1101 = vmatprep.subr.mxu0 0.0
    %1102 = vmatpush1.msra.mxu0 0.0
    %1103 = vmatprep.subr.mxu0 0.0
    %1104 = vmatpush1.msra.mxu0 0.0
    %1105 = vmatprep.subr.mxu0 0.0
    %1106 = vmatpush1.msra.mxu0 0.0
    %1107 = vmatprep.subr.mxu0 0.0
    %1108 = vmatpush1.msra.mxu0 0.0
    %1109 = vmatprep.subr.mxu0 0.0
    %1110 = vmatpush1.msra.mxu0 0.0
    %1111 = vmatprep.subr.mxu0 0.0
    %1112 = vmatpush1.msra.mxu0 0.0
    %1113 = vmatprep.subr.mxu0 0.0
    %1114 = vmatpush1.msra.mxu0 0.0
    %1115 = vmatprep.subr.mxu0 0.0
    %1116 = vmatpush1.msra.mxu0 0.0
    %1117 = vmatprep.mubr.f32.mxu0 0.0
    %1118 = vmatmul.mubr.f32.gmra.mrb[0].mxu0 %v998
    %v1119 = vpop.f32.mrb[0].mxu0
    %v1120 = vadd.f32 %v1051, %v1119
    %v1121 = vpop.f32.mrb[0].mxu0
    %1122 = vmatprep.mubr.f32.mxu0 0.0
    %1123 = vmatmul.mubr.f32.gmra.mrb[0].mxu0 %v999
    %v1124 = vpop.f32.mrb[0].mxu0
    %v1125 = vadd.f32 %v1051, %v1124
    %v1126 = vpop.f32.mrb[0].mxu0
    %1127 = vmatprep.mubr.f32.mxu0 0.0
    %1128 = vmatmul.mubr.f32.gmra.mrb[0].mxu0 %v1000
    %v1129 = vpop.f32.mrb[0].mxu0
    %v1130 = vadd.f32 %v1051, %v1129
    %v1131 = vpop.f32.mrb[0].mxu0
    %1132 = vmatprep.mubr.f32.mxu0 0.0
    %1133 = vmatmul.mubr.f32.gmra.mrb[0].mxu0 %v1001
    %v1134 = vpop.f32.mrb[0].mxu0
    %v1135 = vadd.f32 %v1051, %v1134
    %v1136 = vpop.f32.mrb[0].mxu0
    %1137 = vmatprep.mubr.f32.mxu0 0.0
    %1138 = vmatmul.mubr.f32.gmra.mrb[0].mxu0 %v1002
    %v1139 = vpop.f32.mrb[0].mxu0
    %v1140 = vadd.f32 %v1051, %v1139
    %v1141 = vpop.f32.mrb[0].mxu0
    %1142 = vmatprep.mubr.f32.mxu0 0.0
    %1143 = vmatmul.mubr.f32.gmra.mrb[0].mxu0 %v1003
    %v1144 = vpop.f32.mrb[0].mxu0
    %v1145 = vadd.f32 %v1051, %v1144
    %v1146 = vpop.f32.mrb[0].mxu0
    %1147 = vmatprep.mubr.f32.mxu0 0.0
    %1148 = vmatmul.mubr.f32.gmra.mrb[0].mxu0 %v1004
    %v1149 = vpop.f32.mrb[0].mxu0
    %v1150 = vadd.f32 %v1051, %v1149
    %v1151 = vpop.f32.mrb[0].mxu0
    %1152 = vmatprep.mubr.f32.mxu0 0.0
    %1153 = vmatmul.mubr.f32.gmra.mrb[0].mxu0 %v1005
    %v1154 = vpop.f32.mrb[0].mxu0
    %v1155 = vadd.f32 %v1051, %v1154
    %v1156 = vpop.f32.mrb[0].mxu0
    %1157 = vmatprep.mubr.f32.mxu0 0.0
    %1158 = vmatmul.mubr.f32.gmra.mrb[0].mxu0 %v1006
    %v1159 = vpop.f32.mrb[0].mxu0
    %v1160 = vadd.f32 %v1051, %v1159
    %v1161 = vpop.f32.mrb[0].mxu0
    %1162 = vmatprep.mubr.f32.mxu0 0.0
    %1163 = vmatmul.mubr.f32.gmra.mrb[0].mxu0 %v1007
    %v1164 = vpop.f32.mrb[0].mxu0
    %v1165 = vadd.f32 %v1051, %v1164
    %v1166 = vpop.f32.mrb[0].mxu0
    %1167 = vmatprep.mubr.f32.mxu0 0.0
    %1168 = vmatmul.mubr.f32.gmra.mrb[0].mxu0 %v1008
    %v1169 = vpop.f32.mrb[0].mxu0
    %v1170 = vadd.f32 %v1051, %v1169
    %v1171 = vpop.f32.mrb[0].mxu0
    %1172 = vmatprep.mubr.f32.mxu0 0.0
    %1173 = vmatmul.mubr.f32.gmra.mrb[0].mxu0 %v1009
    %v1174 = vpop.f32.mrb[0].mxu0
    %v1175 = vadd.f32 %v1051, %v1174
    %v1176 = vpop.f32.mrb[0].mxu0
    %1177 = vmatprep.mubr.f32.mxu0 0.0
    %1178 = vmatmul.mubr.f32.gmra.mrb[0].mxu0 %v1010
    %v1179 = vpop.f32.mrb[0].mxu0
    %v1180 = vadd.f32 %v1051, %v1179
    %v1181 = vpop.f32.mrb[0].mxu0
    %1182 = vmatprep.mubr.f32.mxu0 0.0
    %1183 = vmatmul.mubr.f32.gmra.mrb[0].mxu0 %v1011
    %v1184 = vpop.f32.mrb[0].mxu0
    %v1185 = vadd.f32 %v1051, %v1184
    %v1186 = vpop.f32.mrb[0].mxu0
    %1187 = vmatprep.mubr.f32.mxu0 0.0
    %1188 = vmatmul.mubr.f32.gmra.mrb[0].mxu0 %v1012
    %v1189 = vpop.f32.mrb[0].mxu0
    %v1190 = vadd.f32 %v1051, %v1189
    %v1191 = vpop.f32.mrb[0].mxu0
    %1192 = vmatprep.mubr.f32.mxu0 0.0
    %1193 = vmatmul.mubr.f32.gmra.mrb[0].mxu0 %v1013
    %v1194 = vpop.f32.mrb[0].mxu0
    %v1195 = vadd.f32 %v1051, %v1194
    %v1196 = vpop.f32.mrb[0].mxu0
    %1197 = vmatprep.mubr.f32.mxu0 0.0
    %1198 = vmatmul.mubr.f32.gmra.mrb[0].mxu0 %v1014
    %v1199 = vpop.f32.mrb[0].mxu0
    %v1200 = vadd.f32 %v1051, %v1199
    %v1201 = vpop.f32.mrb[0].mxu0
    %1202 = vmatprep.mubr.f32.mxu0 0.0
    %1203 = vmatmul.mubr.f32.gmra.mrb[0].mxu0 %v1015
    %v1204 = vpop.f32.mrb[0].mxu0
    %v1205 = vadd.f32 %v1051, %v1204
    %v1206 = vpop.f32.mrb[0].mxu0
    %1207 = vmatprep.mubr.f32.mxu0 0.0
    %1208 = vmatmul.mubr.f32.gmra.mrb[0].mxu0 %v1016
    %v1209 = vpop.f32.mrb[0].mxu0
    %v1210 = vadd.f32 %v1051, %v1209
    %v1211 = vpop.f32.mrb[0].mxu0
    %1212 = vmatprep.mubr.f32.mxu0 0.0
    %1213 = vmatmul.mubr.f32.gmra.mrb[0].mxu0 %v1017
    %v1214 = vpop.f32.mrb[0].mxu0
    %v1215 = vadd.f32 %v1051, %v1214
    %v1216 = vpop.f32.mrb[0].mxu0
    %1217 = vmatprep.mubr.f32.mxu0 0.0
    %1218 = vmatmul.mubr.f32.gmra.mrb[0].mxu0 %v1018
    %v1219 = vpop.f32.mrb[0].mxu0
    %v1220 = vadd.f32 %v1051, %v1219
    %v1221 = vpop.f32.mrb[0].mxu0
    %1222 = vmatprep.mubr.f32.mxu0 0.0
    %1223 = vmatmul.mubr.f32.gmra.mrb[0].mxu0 %v1019
    %v1224 = vpop.f32.mrb[0].mxu0
    %v1225 = vadd.f32 %v1051, %v1224
    %v1226 = vpop.f32.mrb[0].mxu0
    %1227 = vmatprep.mubr.f32.mxu0 0.0
    %1228 = vmatmul.mubr.f32.gmra.mrb[0].mxu0 %v1020
    %v1229 = vpop.f32.mrb[0].mxu0
    %v1230 = vadd.f32 %v1051, %v1229
    %v1231 = vpop.f32.mrb[0].mxu0
    %1232 = vmatprep.mubr.f32.mxu0 0.0
    %1233 = vmatmul.mubr.f32.gmra.mrb[0].mxu0 %v1021
    %v1234 = vpop.f32.mrb[0].mxu0
    %v1235 = vadd.f32 %v1051, %v1234
    %v1236 = vpop.f32.mrb[0].mxu0
    %1237 = vmatprep.mubr.f32.mxu0 0.0
    %1238 = vmatmul.mubr.f32.gmra.mrb[0].mxu0 %v1022
    %v1239 = vpop.f32.mrb[0].mxu0
    %v1240 = vadd.f32 %v1051, %v1239
    %v1241 = vpop.f32.mrb[0].mxu0
    %1242 = vmatprep.mubr.f32.mxu0 0.0
    %1243 = vmatmul.mubr.f32.gmra.mrb[0].mxu0 %v1023
    %v1244 = vpop.f32.mrb[0].mxu0
    %v1245 = vadd.f32 %v1051, %v1244
    %v1246 = vpop.f32.mrb[0].mxu0
    %1247 = vmatprep.mubr.f32.mxu0 0.0
    %1248 = vmatmul.mubr.f32.gmra.mrb[0].mxu0 %v1024
    %v1249 = vpop.f32.mrb[0].mxu0
    %v1250 = vadd.f32 %v1051, %v1249
    %v1251 = vpop.f32.mrb[0].mxu0
    %1252 = vmatprep.mubr.f32.mxu0 0.0
    %1253 = vmatmul.mubr.f32.gmra.mrb[0].mxu0 %v1025
    %v1254 = vpop.f32.mrb[0].mxu0
    %v1255 = vadd.f32 %v1051, %v1254
    %v1256 = vpop.f32.mrb[0].mxu0
    %1257 = vmatprep.mubr.f32.mxu0 0.0
    %1258 = vmatmul.mubr.f32.gmra.mrb[0].mxu0 %v1026
    %v1259 = vpop.f32.mrb[0].mxu0
    %v1260 = vadd.f32 %v1051, %v1259
    %v1261 = vpop.f32.mrb[0].mxu0
    %1262 = vmatprep.mubr.f32.mxu0 0.0
    %1263 = vmatmul.mubr.f32.gmra.mrb[0].mxu0 %v1027
    %v1264 = vpop.f32.mrb[0].mxu0
    %v1265 = vadd.f32 %v1051, %v1264
    %v1266 = vpop.f32.mrb[0].mxu0
    %1267 = vmatprep.mubr.f32.mxu0 0.0
    %1268 = vmatmul.mubr.f32.gmra.mrb[0].mxu0 %v1028
    %v1269 = vpop.f32.mrb[0].mxu0
    %v1270 = vadd.f32 %v1051, %v1269
    %v1271 = vpop.f32.mrb[0].mxu0
    %1272 = vmatprep.mubr.f32.mxu0 0.0
    %1273 = vmatmul.mubr.f32.gmra.mrb[0].mxu0 %v1029
    %v1274 = vpop.f32.mrb[0].mxu0
    %v1275 = vadd.f32 %v1051, %v1274
    %v1276 = vpop.f32.mrb[0].mxu0
    %1277 = vdwg.mxu0
    %v1278 = vld [vmem:[%s3] sm:$0xff]
    %v1279 = vld [vmem:[%s3 + $0x8] sm:$0xff]
    %v1280 = vld [vmem:[%s3 + $0x10] sm:$0xff]
    %v1281 = vld [vmem:[%s3 + $0x18] sm:$0xff]
    %v1282 = vld [vmem:[%s3 + $0x20] sm:$0xff]
    %v1283 = vld [vmem:[%s3 + $0x28] sm:$0xff]
    %v1284 = vld [vmem:[%s3 + $0x30] sm:$0xff]
    %v1285 = vld [vmem:[%s3 + $0x38] sm:$0xff]
    %v1286 = vld [vmem:[%s3 + $0x40] sm:$0xff]
    %v1287 = vld [vmem:[%s3 + $0x48] sm:$0xff]
    %v1288 = vld [vmem:[%s3 + $0x50] sm:$0xff]
    %v1289 = vld [vmem:[%s3 + $0x58] sm:$0xff]
    %v1290 = vld [vmem:[%s3 + $0x60] sm:$0xff]
    %v1291 = vld [vmem:[%s3 + $0x68] sm:$0xff]
    %v1292 = vld [vmem:[%s3 + $0x70] sm:$0xff]
    %v1293 = vld [vmem:[%s3 + $0x78] sm:$0xff]
    %v1294 = vld [vmem:[%s3 + $0x80] sm:$0xff]
    %v1295 = vld [vmem:[%s3 + $0x88] sm:$0xff]
    %v1296 = vld [vmem:[%s3 + $0x90] sm:$0xff]
    %v1297 = vld [vmem:[%s3 + $0x98] sm:$0xff]
    %v1298 = vld [vmem:[%s3 + $0xa0] sm:$0xff]
    %v1299 = vld [vmem:[%s3 + $0xa8] sm:$0xff]
    %v1300 = vld [vmem:[%s3 + $0xb0] sm:$0xff]
    %v1301 = vld [vmem:[%s3 + $0xb8] sm:$0xff]
    %v1302 = vld [vmem:[%s3 + $0xc0] sm:$0xff]
    %v1303 = vld [vmem:[%s3 + $0xc8] sm:$0xff]
    %v1304 = vld [vmem:[%s3 + $0xd0] sm:$0xff]
    %v1305 = vld [vmem:[%s3 + $0xd8] sm:$0xff]
    %v1306 = vld [vmem:[%s3 + $0xe0] sm:$0xff]
    %v1307 = vld [vmem:[%s3 + $0xe8] sm:$0xff]
    %v1308 = vld [vmem:[%s3 + $0xf0] sm:$0xff]
    %v1309 = vld [vmem:[%s3 + $0xf8] sm:$0xff]
    %v1310 = vmul.f32 %v1278, 0.31415927
    %v1311 = vmul.f32 %v1279, 0.31415927
    %v1312 = vmul.f32 %v1280, 0.31415927
    %v1313 = vmul.f32 %v1281, 0.31415927
    %v1314 = vmul.f32 %v1282, 0.31415927
    %v1315 = vmul.f32 %v1283, 0.31415927
    %v1316 = vmul.f32 %v1284, 0.31415927
    %v1317 = vmul.f32 %v1285, 0.31415927
    %v1318 = vmul.f32 %v1286, 0.31415927
    %v1319 = vmul.f32 %v1287, 0.31415927
    %v1320 = vmul.f32 %v1288, 0.31415927
    %v1321 = vmul.f32 %v1289, 0.31415927
    %v1322 = vmul.f32 %v1290, 0.31415927
    %v1323 = vmul.f32 %v1291, 0.31415927
    %v1324 = vmul.f32 %v1292, 0.31415927
    %v1325 = vmul.f32 %v1293, 0.31415927
    %v1326 = vmul.f32 %v1294, 0.31415927
    %v1327 = vmul.f32 %v1295, 0.31415927
    %v1328 = vmul.f32 %v1296, 0.31415927
    %v1329 = vmul.f32 %v1297, 0.31415927
    %v1330 = vmul.f32 %v1298, 0.31415927
    %v1331 = vmul.f32 %v1299, 0.31415927
    %v1332 = vmul.f32 %v1300, 0.31415927
    %v1333 = vmul.f32 %v1301, 0.31415927
    %v1334 = vmul.f32 %v1302, 0.31415927
    %v1335 = vmul.f32 %v1303, 0.31415927
    %v1336 = vmul.f32 %v1304, 0.31415927
    %v1337 = vmul.f32 %v1305, 0.31415927
    %v1338 = vmul.f32 %v1306, 0.31415927
    %v1339 = vmul.f32 %v1307, 0.31415927
    %v1340 = vmul.f32 %v1308, 0.31415927
    %v1341 = vmul.f32 %v1309, 0.31415927
    %v1342 = vand.u32 2147483647, %v1310
    %vm1343 = vcmp.le.f32.partialorder %v1342, 0.7853982
    %vm1344 = vcmp.lt.s32.totalorder %v1310, 0
    %v1345 = vand.u32 %v1310, 2139095040
    %v1346 = vshrl.u32 %v1345, 23
    %v1347 = vsub.s32 %v1346, 127
    %v1348 = vand.u32 2147483647, %v1310
    %v1349 = vand.u32 %v1348, 8388607
    %v1350 = vor.u32 %v1349, 8388608
    %v1351 = vsub.s32 0, %v1350
    %v1352 = vadd.s32 %v1347, 1
    %vm1353 = vcmp.gt.s32.totalorder %v1352, 0
    %v1354 = vsel %vm1353, %v1352, 0
    %v1355 = vshrl.u32 %v1354, 5
    %v1356 = vand.u32 %v1354, 31
    %v1357 = vsub.s32 32, %v1356
    %v1358 = vshrl.u32 683565275, %v1357
    %v1359 = vshll.u32 683565275, %v1356
    %v1360 = vshrl.u32 2475754826, %v1357
    %v1361 = vor.u32 %v1359, %v1360
    %v1362 = vshll.u32 2475754826, %v1356
    %v1363 = vshrl.u32 2131351028, %v1357
    %v1364 = vor.u32 %v1362, %v1363
    %v1365 = vshll.u32 2131351028, %v1356
    %v1366 = vshrl.u32 2102212464, %v1357
    %v1367 = vor.u32 %v1365, %v1366
    %v1368 = vshll.u32 2102212464, %v1356
    %v1369 = vshrl.u32 920167782, %v1357
    %v1370 = vor.u32 %v1368, %v1369
    %v1371 = vshll.u32 920167782, %v1356
    %v1372 = vshrl.u32 1326507024, %v1357
    %v1373 = vor.u32 %v1371, %v1372
    %vm1374 = vcmp.lt.s32.totalorder %v1355, 1
    %vm1375 = vcmp.lt.s32.totalorder %v1355, 2
    %vm1376 = vcmp.lt.s32.totalorder %v1355, 3
    %vm1377 = vcmp.lt.s32.totalorder %v1355, 4
    %v1378 = vsel %vm1374, %v1358, %v1361
    %v1379 = vsel %vm1377, %v1367, 2102212464
    %v1380 = vsel %vm1376, %v1364, %v1379
    %v1381 = vsel %vm1375, %v1378, %v1380
    %v1382 = vsel %vm1374, %v1361, %v1364
    %v1383 = vsel %vm1377, %v1370, 920167782
    %v1384 = vsel %vm1376, %v1367, %v1383
    %v1385 = vsel %vm1375, %v1382, %v1384
    %v1386 = vsel %vm1374, %v1364, %v1367
    %v1387 = vsel %vm1377, %v1373, 1326507024
    %v1388 = vsel %vm1376, %v1370, %v1387
    %v1389 = vsel %vm1375, %v1386, %v1388
    %v1390 = vshll.u32 %v1350, 8
    %v1391 = vmul.u32.u64.compose %v1390, %v1389
    %v1392 = vextract.low.u32 %v1391
    %v1393 = vextract.high.u32 %v1391
    %v1394 = vmul.u32.u64.compose %v1390, %v1385
    %v1395 = vextract.low.u32 %v1394
    %v1396 = vextract.high.u32 %v1394
    %v1397 = vmul.u32 %v1390, %v1381
    %v1398 = vadd.s32 %v1393, %v1395
    %vm1399 = vc.u32 %v1393, %v1395
    %v1400 = vadd.s32 %v1396, 1
    %v1401 = vsel %vm1399, %v1400, %v1396
    %v1402 = vadd.s32 %v1397, %v1401
    %v1403 = vadd.s32 %v1402, 536870912
    %v1404 = vshrl.u32 %v1403, 30
    %v1405 = vshll.u32 %v1404, 30
    %v1406 = vsub.s32 %v1402, %v1405
    %vm1407 = vcmp.lt.s32.totalorder %v1406, 0
    %v1408 = vsub.s32 0, %v1406
    %v1409 = vsel %vm1407, %v1408, %v1406
    %v1410 = vclz %v1409
    %v1411 = vsub.s32 %v1410, 2
    %vm1412 = vcmp.gt.s32.totalorder 0, %v1411
    %v1413 = vsel %vm1412, 0, %v1411
    %v1414 = vsub.s32 32, %v1413
    %v1415 = vshll.u32 %v1406, %v1413
    %v1416 = vshrl.u32 %v1398, %v1414
    %v1417 = vor.u32 %v1415, %v1416
    %v1418 = vsub.s32 4294967266, %v1413
    %v1419 = vadd.s32 %v1418, 127
    %v1420 = vshll.u32 %v1419, 23
    %v1421 = vor.u32 4788187, %v1420
    %v1422 = vand.u32 2147483647, %v1421
    %v1424 = vcvt.s32.f32 %v1417
    %v1425 = vmul.f32 %v1424, %v1422
    %v1426 = vxor.u32 %v1425, 2147483648
    %v1427 = vsel %vm1344, %v1426, %v1425
    %v1428 = vsub.s32 4, %v1404
    %v1429 = vsel %vm1344, %v1428, %v1404
    %v1430 = vsel %vm1343, %v1310, %v1427
    %v1431 = vsel %vm1343, 0, %v1429
    %v1432 = vcosq.f32.pop %v1430
    %v1433 = vsinq.f32.pop %v1430
    %vm1434 = vweird.f32 %v1310
    %v1435 = vand.u32 %v1431, 3
    %vm1436 = vcmp.lt.s32.totalorder %v1435, 2
    %vm1437 = vcmp.eq.s32.totalorder %v1435, 0
    %v1438 = vxor.u32 %v1433, 2147483648
    %v1439 = vsel %vm1437, %v1432, %v1438
    %vm1440 = vcmp.eq.s32.totalorder %v1435, 2
    %v1441 = vxor.u32 %v1432, 2147483648
    %v1442 = vsel %vm1440, %v1441, %v1433
    %v1443 = vsel %vm1436, %v1439, %v1442
    %v1444 = vsel %vm1434, nan, %v1443
    %v1445 = vand.u32 2147483647, %v1311
    %vm1446 = vcmp.le.f32.partialorder %v1445, 0.7853982
    %vm1447 = vcmp.lt.s32.totalorder %v1311, 0
    %v1448 = vand.u32 %v1311, 2139095040
    %v1449 = vshrl.u32 %v1448, 23
    %v1450 = vsub.s32 %v1449, 127
    %v1451 = vand.u32 2147483647, %v1311
    %v1452 = vand.u32 %v1451, 8388607
    %v1453 = vor.u32 %v1452, 8388608
    %v1454 = vsub.s32 0, %v1453
    %v1455 = vadd.s32 %v1450, 1
    %vm1456 = vcmp.gt.s32.totalorder %v1455, 0
    %v1457 = vsel %vm1456, %v1455, 0
    %v1458 = vshrl.u32 %v1457, 5
    %v1459 = vand.u32 %v1457, 31
    %v1460 = vsub.s32 32, %v1459
    %v1461 = vshrl.u32 683565275, %v1460
    %v1462 = vshll.u32 683565275, %v1459
    %v1463 = vshrl.u32 2475754826, %v1460
    %v1464 = vor.u32 %v1462, %v1463
    %v1465 = vshll.u32 2475754826, %v1459
    %v1466 = vshrl.u32 2131351028, %v1460
    %v1467 = vor.u32 %v1465, %v1466
    %v1468 = vshll.u32 2131351028, %v1459
    %v1469 = vshrl.u32 2102212464, %v1460
    %v1470 = vor.u32 %v1468, %v1469
    %v1471 = vshll.u32 2102212464, %v1459
    %v1472 = vshrl.u32 920167782, %v1460
    %v1473 = vor.u32 %v1471, %v1472
    %v1474 = vshll.u32 920167782, %v1459
    %v1475 = vshrl.u32 1326507024, %v1460
    %v1476 = vor.u32 %v1474, %v1475
    %vm1477 = vcmp.lt.s32.totalorder %v1458, 1
    %vm1478 = vcmp.lt.s32.totalorder %v1458, 2
    %vm1479 = vcmp.lt.s32.totalorder %v1458, 3
    %vm1480 = vcmp.lt.s32.totalorder %v1458, 4
    %v1481 = vsel %vm1477, %v1461, %v1464
    %v1482 = vsel %vm1480, %v1470, 2102212464
    %v1483 = vsel %vm1479, %v1467, %v1482
    %v1484 = vsel %vm1478, %v1481, %v1483
    %v1485 = vsel %vm1477, %v1464, %v1467
    %v1486 = vsel %vm1480, %v1473, 920167782
    %v1487 = vsel %vm1479, %v1470, %v1486
    %v1488 = vsel %vm1478, %v1485, %v1487
    %v1489 = vsel %vm1477, %v1467, %v1470
    %v1490 = vsel %vm1480, %v1476, 1326507024
    %v1491 = vsel %vm1479, %v1473, %v1490
    %v1492 = vsel %vm1478, %v1489, %v1491
    %v1493 = vshll.u32 %v1453, 8
    %v1494 = vmul.u32.u64.compose %v1493, %v1492
    %v1495 = vextract.low.u32 %v1494
    %v1496 = vextract.high.u32 %v1494
    %v1497 = vmul.u32.u64.compose %v1493, %v1488
    %v1498 = vextract.low.u32 %v1497
    %v1499 = vextract.high.u32 %v1497
    %v1500 = vmul.u32 %v1493, %v1484
    %v1501 = vadd.s32 %v1496, %v1498
    %vm1502 = vc.u32 %v1496, %v1498
    %v1503 = vadd.s32 %v1499, 1
    %v1504 = vsel %vm1502, %v1503, %v1499
    %v1505 = vadd.s32 %v1500, %v1504
    %v1506 = vadd.s32 %v1505, 536870912
    %v1507 = vshrl.u32 %v1506, 30
    %v1508 = vshll.u32 %v1507, 30
    %v1509 = vsub.s32 %v1505, %v1508
    %vm1510 = vcmp.lt.s32.totalorder %v1509, 0
    %v1511 = vsub.s32 0, %v1509
    %v1512 = vsel %vm1510, %v1511, %v1509
    %v1513 = vclz %v1512
    %v1514 = vsub.s32 %v1513, 2
    %vm1515 = vcmp.gt.s32.totalorder 0, %v1514
    %v1516 = vsel %vm1515, 0, %v1514
    %v1517 = vsub.s32 32, %v1516
    %v1518 = vshll.u32 %v1509, %v1516
    %v1519 = vshrl.u32 %v1501, %v1517
    %v1520 = vor.u32 %v1518, %v1519
    %v1521 = vsub.s32 4294967266, %v1516
    %v1522 = vadd.s32 %v1521, 127
    %v1523 = vshll.u32 %v1522, 23
    %v1524 = vor.u32 4788187, %v1523
    %v1525 = vand.u32 2147483647, %v1524
    %v1527 = vcvt.s32.f32 %v1520
    %v1528 = vmul.f32 %v1527, %v1525
    %v1529 = vxor.u32 %v1528, 2147483648
    %v1530 = vsel %vm1447, %v1529, %v1528
    %v1531 = vsub.s32 4, %v1507
    %v1532 = vsel %vm1447, %v1531, %v1507
    %v1533 = vsel %vm1446, %v1311, %v1530
    %v1534 = vsel %vm1446, 0, %v1532
    %v1535 = vcosq.f32.pop %v1533
    %v1536 = vsinq.f32.pop %v1533
    %vm1537 = vweird.f32 %v1311
    %v1538 = vand.u32 %v1534, 3
    %vm1539 = vcmp.lt.s32.totalorder %v1538, 2
    %vm1540 = vcmp.eq.s32.totalorder %v1538, 0
    %v1541 = vxor.u32 %v1536, 2147483648
    %v1542 = vsel %vm1540, %v1535, %v1541
    %vm1543 = vcmp.eq.s32.totalorder %v1538, 2
    %v1544 = vxor.u32 %v1535, 2147483648
    %v1545 = vsel %vm1543, %v1544, %v1536
    %v1546 = vsel %vm1539, %v1542, %v1545
    %v1547 = vsel %vm1537, nan, %v1546
    %v1548 = vand.u32 2147483647, %v1312
    %vm1549 = vcmp.le.f32.partialorder %v1548, 0.7853982
    %vm1550 = vcmp.lt.s32.totalorder %v1312, 0
    %v1551 = vand.u32 %v1312, 2139095040
    %v1552 = vshrl.u32 %v1551, 23
    %v1553 = vsub.s32 %v1552, 127
    %v1554 = vand.u32 2147483647, %v1312
    %v1555 = vand.u32 %v1554, 8388607
    %v1556 = vor.u32 %v1555, 8388608
    %v1557 = vsub.s32 0, %v1556
    %v1558 = vadd.s32 %v1553, 1
    %vm1559 = vcmp.gt.s32.totalorder %v1558, 0
    %v1560 = vsel %vm1559, %v1558, 0
    %v1561 = vshrl.u32 %v1560, 5
    %v1562 = vand.u32 %v1560, 31
    %v1563 = vsub.s32 32, %v1562
    %v1564 = vshrl.u32 683565275, %v1563
    %v1565 = vshll.u32 683565275, %v1562
    %v1566 = vshrl.u32 2475754826, %v1563
    %v1567 = vor.u32 %v1565, %v1566
    %v1568 = vshll.u32 2475754826, %v1562
    %v1569 = vshrl.u32 2131351028, %v1563
    %v1570 = vor.u32 %v1568, %v1569
    %v1571 = vshll.u32 2131351028, %v1562
    %v1572 = vshrl.u32 2102212464, %v1563
    %v1573 = vor.u32 %v1571, %v1572
    %v1574 = vshll.u32 2102212464, %v1562
    %v1575 = vshrl.u32 920167782, %v1563
    %v1576 = vor.u32 %v1574, %v1575
    %v1577 = vshll.u32 920167782, %v1562
    %v1578 = vshrl.u32 1326507024, %v1563
    %v1579 = vor.u32 %v1577, %v1578
    %vm1580 = vcmp.lt.s32.totalorder %v1561, 1
    %vm1581 = vcmp.lt.s32.totalorder %v1561, 2
    %vm1582 = vcmp.lt.s32.totalorder %v1561, 3
    %vm1583 = vcmp.lt.s32.totalorder %v1561, 4
    %v1584 = vsel %vm1580, %v1564, %v1567
    %v1585 = vsel %vm1583, %v1573, 2102212464
    %v1586 = vsel %vm1582, %v1570, %v1585
    %v1587 = vsel %vm1581, %v1584, %v1586
    %v1588 = vsel %vm1580, %v1567, %v1570
    %v1589 = vsel %vm1583, %v1576, 920167782
    %v1590 = vsel %vm1582, %v1573, %v1589
    %v1591 = vsel %vm1581, %v1588, %v1590
    %v1592 = vsel %vm1580, %v1570, %v1573
    %v1593 = vsel %vm1583, %v1579, 1326507024
    %v1594 = vsel %vm1582, %v1576, %v1593
    %v1595 = vsel %vm1581, %v1592, %v1594
    %v1596 = vshll.u32 %v1556, 8
    %v1597 = vmul.u32.u64.compose %v1596, %v1595
    %v1598 = vextract.low.u32 %v1597
    %v1599 = vextract.high.u32 %v1597
    %v1600 = vmul.u32.u64.compose %v1596, %v1591
    %v1601 = vextract.low.u32 %v1600
    %v1602 = vextract.high.u32 %v1600
    %v1603 = vmul.u32 %v1596, %v1587
    %v1604 = vadd.s32 %v1599, %v1601
    %vm1605 = vc.u32 %v1599, %v1601
    %v1606 = vadd.s32 %v1602, 1
    %v1607 = vsel %vm1605, %v1606, %v1602
    %v1608 = vadd.s32 %v1603, %v1607
    %v1609 = vadd.s32 %v1608, 536870912
    %v1610 = vshrl.u32 %v1609, 30
    %v1611 = vshll.u32 %v1610, 30
    %v1612 = vsub.s32 %v1608, %v1611
    %vm1613 = vcmp.lt.s32.totalorder %v1612, 0
    %v1614 = vsub.s32 0, %v1612
    %v1615 = vsel %vm1613, %v1614, %v1612
    %v1616 = vclz %v1615
    %v1617 = vsub.s32 %v1616, 2
    %vm1618 = vcmp.gt.s32.totalorder 0, %v1617
    %v1619 = vsel %vm1618, 0, %v1617
    %v1620 = vsub.s32 32, %v1619
    %v1621 = vshll.u32 %v1612, %v1619
    %v1622 = vshrl.u32 %v1604, %v1620
    %v1623 = vor.u32 %v1621, %v1622
    %v1624 = vsub.s32 4294967266, %v1619
    %v1625 = vadd.s32 %v1624, 127
    %v1626 = vshll.u32 %v1625, 23
    %v1627 = vor.u32 4788187, %v1626
    %v1628 = vand.u32 2147483647, %v1627
    %v1630 = vcvt.s32.f32 %v1623
    %v1631 = vmul.f32 %v1630, %v1628
    %v1632 = vxor.u32 %v1631, 2147483648
    %v1633 = vsel %vm1550, %v1632, %v1631
    %v1634 = vsub.s32 4, %v1610
    %v1635 = vsel %vm1550, %v1634, %v1610
    %v1636 = vsel %vm1549, %v1312, %v1633
    %v1637 = vsel %vm1549, 0, %v1635
    %v1638 = vcosq.f32.pop %v1636
    %v1639 = vsinq.f32.pop %v1636
    %vm1640 = vweird.f32 %v1312
    %v1641 = vand.u32 %v1637, 3
    %vm1642 = vcmp.lt.s32.totalorder %v1641, 2
    %vm1643 = vcmp.eq.s32.totalorder %v1641, 0
    %v1644 = vxor.u32 %v1639, 2147483648
    %v1645 = vsel %vm1643, %v1638, %v1644
    %vm1646 = vcmp.eq.s32.totalorder %v1641, 2
    %v1647 = vxor.u32 %v1638, 2147483648
    %v1648 = vsel %vm1646, %v1647, %v1639
    %v1649 = vsel %vm1642, %v1645, %v1648
    %v1650 = vsel %vm1640, nan, %v1649
    %v1651 = vand.u32 2147483647, %v1313
    %vm1652 = vcmp.le.f32.partialorder %v1651, 0.7853982
    %vm1653 = vcmp.lt.s32.totalorder %v1313, 0
    %v1654 = vand.u32 %v1313, 2139095040
    %v1655 = vshrl.u32 %v1654, 23
    %v1656 = vsub.s32 %v1655, 127
    %v1657 = vand.u32 2147483647, %v1313
    %v1658 = vand.u32 %v1657, 8388607
    %v1659 = vor.u32 %v1658, 8388608
    %v1660 = vsub.s32 0, %v1659
    %v1661 = vadd.s32 %v1656, 1
    %vm1662 = vcmp.gt.s32.totalorder %v1661, 0
    %v1663 = vsel %vm1662, %v1661, 0
    %v1664 = vshrl.u32 %v1663, 5
    %v1665 = vand.u32 %v1663, 31
    %v1666 = vsub.s32 32, %v1665
    %v1667 = vshrl.u32 683565275, %v1666
    %v1668 = vshll.u32 683565275, %v1665
    %v1669 = vshrl.u32 2475754826, %v1666
    %v1670 = vor.u32 %v1668, %v1669
    %v1671 = vshll.u32 2475754826, %v1665
    %v1672 = vshrl.u32 2131351028, %v1666
    %v1673 = vor.u32 %v1671, %v1672
    %v1674 = vshll.u32 2131351028, %v1665
    %v1675 = vshrl.u32 2102212464, %v1666
    %v1676 = vor.u32 %v1674, %v1675
    %v1677 = vshll.u32 2102212464, %v1665
    %v1678 = vshrl.u32 920167782, %v1666
    %v1679 = vor.u32 %v1677, %v1678
    %v1680 = vshll.u32 920167782, %v1665
    %v1681 = vshrl.u32 1326507024, %v1666
    %v1682 = vor.u32 %v1680, %v1681
    %vm1683 = vcmp.lt.s32.totalorder %v1664, 1
    %vm1684 = vcmp.lt.s32.totalorder %v1664, 2
    %vm1685 = vcmp.lt.s32.totalorder %v1664, 3
    %vm1686 = vcmp.lt.s32.totalorder %v1664, 4
    %v1687 = vsel %vm1683, %v1667, %v1670
    %v1688 = vsel %vm1686, %v1676, 2102212464
    %v1689 = vsel %vm1685, %v1673, %v1688
    %v1690 = vsel %vm1684, %v1687, %v1689
    %v1691 = vsel %vm1683, %v1670, %v1673
    %v1692 = vsel %vm1686, %v1679, 920167782
    %v1693 = vsel %vm1685, %v1676, %v1692
    %v1694 = vsel %vm1684, %v1691, %v1693
    %v1695 = vsel %vm1683, %v1673, %v1676
    %v1696 = vsel %vm1686, %v1682, 1326507024
    %v1697 = vsel %vm1685, %v1679, %v1696
    %v1698 = vsel %vm1684, %v1695, %v1697
    %v1699 = vshll.u32 %v1659, 8
    %v1700 = vmul.u32.u64.compose %v1699, %v1698
    %v1701 = vextract.low.u32 %v1700
    %v1702 = vextract.high.u32 %v1700
    %v1703 = vmul.u32.u64.compose %v1699, %v1694
    %v1704 = vextract.low.u32 %v1703
    %v1705 = vextract.high.u32 %v1703
    %v1706 = vmul.u32 %v1699, %v1690
    %v1707 = vadd.s32 %v1702, %v1704
    %vm1708 = vc.u32 %v1702, %v1704
    %v1709 = vadd.s32 %v1705, 1
    %v1710 = vsel %vm1708, %v1709, %v1705
    %v1711 = vadd.s32 %v1706, %v1710
    %v1712 = vadd.s32 %v1711, 536870912
    %v1713 = vshrl.u32 %v1712, 30
    %v1714 = vshll.u32 %v1713, 30
    %v1715 = vsub.s32 %v1711, %v1714
    %vm1716 = vcmp.lt.s32.totalorder %v1715, 0
    %v1717 = vsub.s32 0, %v1715
    %v1718 = vsel %vm1716, %v1717, %v1715
    %v1719 = vclz %v1718
    %v1720 = vsub.s32 %v1719, 2
    %vm1721 = vcmp.gt.s32.totalorder 0, %v1720
    %v1722 = vsel %vm1721, 0, %v1720
    %v1723 = vsub.s32 32, %v1722
    %v1724 = vshll.u32 %v1715, %v1722
    %v1725 = vshrl.u32 %v1707, %v1723
    %v1726 = vor.u32 %v1724, %v1725
    %v1727 = vsub.s32 4294967266, %v1722
    %v1728 = vadd.s32 %v1727, 127
    %v1729 = vshll.u32 %v1728, 23
    %v1730 = vor.u32 4788187, %v1729
    %v1731 = vand.u32 2147483647, %v1730
    %v1733 = vcvt.s32.f32 %v1726
    %v1734 = vmul.f32 %v1733, %v1731
    %v1735 = vxor.u32 %v1734, 2147483648
    %v1736 = vsel %vm1653, %v1735, %v1734
    %v1737 = vsub.s32 4, %v1713
    %v1738 = vsel %vm1653, %v1737, %v1713
    %v1739 = vsel %vm1652, %v1313, %v1736
    %v1740 = vsel %vm1652, 0, %v1738
    %v1741 = vcosq.f32.pop %v1739
    %v1742 = vsinq.f32.pop %v1739
    %vm1743 = vweird.f32 %v1313
    %v1744 = vand.u32 %v1740, 3
    %vm1745 = vcmp.lt.s32.totalorder %v1744, 2
    %vm1746 = vcmp.eq.s32.totalorder %v1744, 0
    %v1747 = vxor.u32 %v1742, 2147483648
    %v1748 = vsel %vm1746, %v1741, %v1747
    %vm1749 = vcmp.eq.s32.totalorder %v1744, 2
    %v1750 = vxor.u32 %v1741, 2147483648
    %v1751 = vsel %vm1749, %v1750, %v1742
    %v1752 = vsel %vm1745, %v1748, %v1751
    %v1753 = vsel %vm1743, nan, %v1752
    %v1754 = vand.u32 2147483647, %v1314
    %vm1755 = vcmp.le.f32.partialorder %v1754, 0.7853982
    %vm1756 = vcmp.lt.s32.totalorder %v1314, 0
    %v1757 = vand.u32 %v1314, 2139095040
    %v1758 = vshrl.u32 %v1757, 23
    %v1759 = vsub.s32 %v1758, 127
    %v1760 = vand.u32 2147483647, %v1314
    %v1761 = vand.u32 %v1760, 8388607
    %v1762 = vor.u32 %v1761, 8388608
    %v1763 = vsub.s32 0, %v1762
    %v1764 = vadd.s32 %v1759, 1
    %vm1765 = vcmp.gt.s32.totalorder %v1764, 0
    %v1766 = vsel %vm1765, %v1764, 0
    %v1767 = vshrl.u32 %v1766, 5
    %v1768 = vand.u32 %v1766, 31
    %v1769 = vsub.s32 32, %v1768
    %v1770 = vshrl.u32 683565275, %v1769
    %v1771 = vshll.u32 683565275, %v1768
    %v1772 = vshrl.u32 2475754826, %v1769
    %v1773 = vor.u32 %v1771, %v1772
    %v1774 = vshll.u32 2475754826, %v1768
    %v1775 = vshrl.u32 2131351028, %v1769
    %v1776 = vor.u32 %v1774, %v1775
    %v1777 = vshll.u32 2131351028, %v1768
    %v1778 = vshrl.u32 2102212464, %v1769
    %v1779 = vor.u32 %v1777, %v1778
    %v1780 = vshll.u32 2102212464, %v1768
    %v1781 = vshrl.u32 920167782, %v1769
    %v1782 = vor.u32 %v1780, %v1781
    %v1783 = vshll.u32 920167782, %v1768
    %v1784 = vshrl.u32 1326507024, %v1769
    %v1785 = vor.u32 %v1783, %v1784
    %vm1786 = vcmp.lt.s32.totalorder %v1767, 1
    %vm1787 = vcmp.lt.s32.totalorder %v1767, 2
    %vm1788 = vcmp.lt.s32.totalorder %v1767, 3
    %vm1789 = vcmp.lt.s32.totalorder %v1767, 4
    %v1790 = vsel %vm1786, %v1770, %v1773
    %v1791 = vsel %vm1789, %v1779, 2102212464
    %v1792 = vsel %vm1788, %v1776, %v1791
    %v1793 = vsel %vm1787, %v1790, %v1792
    %v1794 = vsel %vm1786, %v1773, %v1776
    %v1795 = vsel %vm1789, %v1782, 920167782
    %v1796 = vsel %vm1788, %v1779, %v1795
    %v1797 = vsel %vm1787, %v1794, %v1796
    %v1798 = vsel %vm1786, %v1776, %v1779
    %v1799 = vsel %vm1789, %v1785, 1326507024
    %v1800 = vsel %vm1788, %v1782, %v1799
    %v1801 = vsel %vm1787, %v1798, %v1800
    %v1802 = vshll.u32 %v1762, 8
    %v1803 = vmul.u32.u64.compose %v1802, %v1801
    %v1804 = vextract.low.u32 %v1803
    %v1805 = vextract.high.u32 %v1803
    %v1806 = vmul.u32.u64.compose %v1802, %v1797
    %v1807 = vextract.low.u32 %v1806
    %v1808 = vextract.high.u32 %v1806
    %v1809 = vmul.u32 %v1802, %v1793
    %v1810 = vadd.s32 %v1805, %v1807
    %vm1811 = vc.u32 %v1805, %v1807
    %v1812 = vadd.s32 %v1808, 1
    %v1813 = vsel %vm1811, %v1812, %v1808
    %v1814 = vadd.s32 %v1809, %v1813
    %v1815 = vadd.s32 %v1814, 536870912
    %v1816 = vshrl.u32 %v1815, 30
    %v1817 = vshll.u32 %v1816, 30
    %v1818 = vsub.s32 %v1814, %v1817
    %vm1819 = vcmp.lt.s32.totalorder %v1818, 0
    %v1820 = vsub.s32 0, %v1818
    %v1821 = vsel %vm1819, %v1820, %v1818
    %v1822 = vclz %v1821
    %v1823 = vsub.s32 %v1822, 2
    %vm1824 = vcmp.gt.s32.totalorder 0, %v1823
    %v1825 = vsel %vm1824, 0, %v1823
    %v1826 = vsub.s32 32, %v1825
    %v1827 = vshll.u32 %v1818, %v1825
    %v1828 = vshrl.u32 %v1810, %v1826
    %v1829 = vor.u32 %v1827, %v1828
    %v1830 = vsub.s32 4294967266, %v1825
    %v1831 = vadd.s32 %v1830, 127
    %v1832 = vshll.u32 %v1831, 23
    %v1833 = vor.u32 4788187, %v1832
    %v1834 = vand.u32 2147483647, %v1833
    %v1836 = vcvt.s32.f32 %v1829
    %v1837 = vmul.f32 %v1836, %v1834
    %v1838 = vxor.u32 %v1837, 2147483648
    %v1839 = vsel %vm1756, %v1838, %v1837
    %v1840 = vsub.s32 4, %v1816
    %v1841 = vsel %vm1756, %v1840, %v1816
    %v1842 = vsel %vm1755, %v1314, %v1839
    %v1843 = vsel %vm1755, 0, %v1841
    %v1844 = vcosq.f32.pop %v1842
    %v1845 = vsinq.f32.pop %v1842
    %vm1846 = vweird.f32 %v1314
    %v1847 = vand.u32 %v1843, 3
    %vm1848 = vcmp.lt.s32.totalorder %v1847, 2
    %vm1849 = vcmp.eq.s32.totalorder %v1847, 0
    %v1850 = vxor.u32 %v1845, 2147483648
    %v1851 = vsel %vm1849, %v1844, %v1850
    %vm1852 = vcmp.eq.s32.totalorder %v1847, 2
    %v1853 = vxor.u32 %v1844, 2147483648
    %v1854 = vsel %vm1852, %v1853, %v1845
    %v1855 = vsel %vm1848, %v1851, %v1854
    %v1856 = vsel %vm1846, nan, %v1855
    %v1857 = vand.u32 2147483647, %v1315
    %vm1858 = vcmp.le.f32.partialorder %v1857, 0.7853982
    %vm1859 = vcmp.lt.s32.totalorder %v1315, 0
    %v1860 = vand.u32 %v1315, 2139095040
    %v1861 = vshrl.u32 %v1860, 23
    %v1862 = vsub.s32 %v1861, 127
    %v1863 = vand.u32 2147483647, %v1315
    %v1864 = vand.u32 %v1863, 8388607
    %v1865 = vor.u32 %v1864, 8388608
    %v1866 = vsub.s32 0, %v1865
    %v1867 = vadd.s32 %v1862, 1
    %vm1868 = vcmp.gt.s32.totalorder %v1867, 0
    %v1869 = vsel %vm1868, %v1867, 0
    %v1870 = vshrl.u32 %v1869, 5
    %v1871 = vand.u32 %v1869, 31
    %v1872 = vsub.s32 32, %v1871
    %v1873 = vshrl.u32 683565275, %v1872
    %v1874 = vshll.u32 683565275, %v1871
    %v1875 = vshrl.u32 2475754826, %v1872
    %v1876 = vor.u32 %v1874, %v1875
    %v1877 = vshll.u32 2475754826, %v1871
    %v1878 = vshrl.u32 2131351028, %v1872
    %v1879 = vor.u32 %v1877, %v1878
    %v1880 = vshll.u32 2131351028, %v1871
    %v1881 = vshrl.u32 2102212464, %v1872
    %v1882 = vor.u32 %v1880, %v1881
    %v1883 = vshll.u32 2102212464, %v1871
    %v1884 = vshrl.u32 920167782, %v1872
    %v1885 = vor.u32 %v1883, %v1884
    %v1886 = vshll.u32 920167782, %v1871
    %v1887 = vshrl.u32 1326507024, %v1872
    %v1888 = vor.u32 %v1886, %v1887
    %vm1889 = vcmp.lt.s32.totalorder %v1870, 1
    %vm1890 = vcmp.lt.s32.totalorder %v1870, 2
    %vm1891 = vcmp.lt.s32.totalorder %v1870, 3
    %vm1892 = vcmp.lt.s32.totalorder %v1870, 4
    %v1893 = vsel %vm1889, %v1873, %v1876
    %v1894 = vsel %vm1892, %v1882, 2102212464
    %v1895 = vsel %vm1891, %v1879, %v1894
    %v1896 = vsel %vm1890, %v1893, %v1895
    %v1897 = vsel %vm1889, %v1876, %v1879
    %v1898 = vsel %vm1892, %v1885, 920167782
    %v1899 = vsel %vm1891, %v1882, %v1898
    %v1900 = vsel %vm1890, %v1897, %v1899
    %v1901 = vsel %vm1889, %v1879, %v1882
    %v1902 = vsel %vm1892, %v1888, 1326507024
    %v1903 = vsel %vm1891, %v1885, %v1902
    %v1904 = vsel %vm1890, %v1901, %v1903
    %v1905 = vshll.u32 %v1865, 8
    %v1906 = vmul.u32.u64.compose %v1905, %v1904
    %v1907 = vextract.low.u32 %v1906
    %v1908 = vextract.high.u32 %v1906
    %v1909 = vmul.u32.u64.compose %v1905, %v1900
    %v1910 = vextract.low.u32 %v1909
    %v1911 = vextract.high.u32 %v1909
    %v1912 = vmul.u32 %v1905, %v1896
    %v1913 = vadd.s32 %v1908, %v1910
    %vm1914 = vc.u32 %v1908, %v1910
    %v1915 = vadd.s32 %v1911, 1
    %v1916 = vsel %vm1914, %v1915, %v1911
    %v1917 = vadd.s32 %v1912, %v1916
    %v1918 = vadd.s32 %v1917, 536870912
    %v1919 = vshrl.u32 %v1918, 30
    %v1920 = vshll.u32 %v1919, 30
    %v1921 = vsub.s32 %v1917, %v1920
    %vm1922 = vcmp.lt.s32.totalorder %v1921, 0
    %v1923 = vsub.s32 0, %v1921
    %v1924 = vsel %vm1922, %v1923, %v1921
    %v1925 = vclz %v1924
    %v1926 = vsub.s32 %v1925, 2
    %vm1927 = vcmp.gt.s32.totalorder 0, %v1926
    %v1928 = vsel %vm1927, 0, %v1926
    %v1929 = vsub.s32 32, %v1928
    %v1930 = vshll.u32 %v1921, %v1928
    %v1931 = vshrl.u32 %v1913, %v1929
    %v1932 = vor.u32 %v1930, %v1931
    %v1933 = vsub.s32 4294967266, %v1928
    %v1934 = vadd.s32 %v1933, 127
    %v1935 = vshll.u32 %v1934, 23
    %v1936 = vor.u32 4788187, %v1935
    %v1937 = vand.u32 2147483647, %v1936
    %v1939 = vcvt.s32.f32 %v1932
    %v1940 = vmul.f32 %v1939, %v1937
    %v1941 = vxor.u32 %v1940, 2147483648
    %v1942 = vsel %vm1859, %v1941, %v1940
    %v1943 = vsub.s32 4, %v1919
    %v1944 = vsel %vm1859, %v1943, %v1919
    %v1945 = vsel %vm1858, %v1315, %v1942
    %v1946 = vsel %vm1858, 0, %v1944
    %v1947 = vcosq.f32.pop %v1945
    %v1948 = vsinq.f32.pop %v1945
    %vm1949 = vweird.f32 %v1315
    %v1950 = vand.u32 %v1946, 3
    %vm1951 = vcmp.lt.s32.totalorder %v1950, 2
    %vm1952 = vcmp.eq.s32.totalorder %v1950, 0
    %v1953 = vxor.u32 %v1948, 2147483648
    %v1954 = vsel %vm1952, %v1947, %v1953
    %vm1955 = vcmp.eq.s32.totalorder %v1950, 2
    %v1956 = vxor.u32 %v1947, 2147483648
    %v1957 = vsel %vm1955, %v1956, %v1948
    %v1958 = vsel %vm1951, %v1954, %v1957
    %v1959 = vsel %vm1949, nan, %v1958
    %v1960 = vand.u32 2147483647, %v1316
    %vm1961 = vcmp.le.f32.partialorder %v1960, 0.7853982
    %vm1962 = vcmp.lt.s32.totalorder %v1316, 0
    %v1963 = vand.u32 %v1316, 2139095040
    %v1964 = vshrl.u32 %v1963, 23
    %v1965 = vsub.s32 %v1964, 127
    %v1966 = vand.u32 2147483647, %v1316
    %v1967 = vand.u32 %v1966, 8388607
    %v1968 = vor.u32 %v1967, 8388608
    %v1969 = vsub.s32 0, %v1968
    %v1970 = vadd.s32 %v1965, 1
    %vm1971 = vcmp.gt.s32.totalorder %v1970, 0
    %v1972 = vsel %vm1971, %v1970, 0
    %v1973 = vshrl.u32 %v1972, 5
    %v1974 = vand.u32 %v1972, 31
    %v1975 = vsub.s32 32, %v1974
    %v1976 = vshrl.u32 683565275, %v1975
    %v1977 = vshll.u32 683565275, %v1974
    %v1978 = vshrl.u32 2475754826, %v1975
    %v1979 = vor.u32 %v1977, %v1978
    %v1980 = vshll.u32 2475754826, %v1974
    %v1981 = vshrl.u32 2131351028, %v1975
    %v1982 = vor.u32 %v1980, %v1981
    %v1983 = vshll.u32 2131351028, %v1974
    %v1984 = vshrl.u32 2102212464, %v1975
    %v1985 = vor.u32 %v1983, %v1984
    %v1986 = vshll.u32 2102212464, %v1974
    %v1987 = vshrl.u32 920167782, %v1975
    %v1988 = vor.u32 %v1986, %v1987
    %v1989 = vshll.u32 920167782, %v1974
    %v1990 = vshrl.u32 1326507024, %v1975
    %v1991 = vor.u32 %v1989, %v1990
    %vm1992 = vcmp.lt.s32.totalorder %v1973, 1
    %vm1993 = vcmp.lt.s32.totalorder %v1973, 2
    %vm1994 = vcmp.lt.s32.totalorder %v1973, 3
    %vm1995 = vcmp.lt.s32.totalorder %v1973, 4
    %v1996 = vsel %vm1992, %v1976, %v1979
    %v1997 = vsel %vm1995, %v1985, 2102212464
    %v1998 = vsel %vm1994, %v1982, %v1997
    %v1999 = vsel %vm1993, %v1996, %v1998
    %v2000 = vsel %vm1992, %v1979, %v1982
    %v2001 = vsel %vm1995, %v1988, 920167782
    %v2002 = vsel %vm1994, %v1985, %v2001
    %v2003 = vsel %vm1993, %v2000, %v2002
    %v2004 = vsel %vm1992, %v1982, %v1985
    %v2005 = vsel %vm1995, %v1991, 1326507024
    %v2006 = vsel %vm1994, %v1988, %v2005
    %v2007 = vsel %vm1993, %v2004, %v2006
    %v2008 = vshll.u32 %v1968, 8
    %v2009 = vmul.u32.u64.compose %v2008, %v2007
    %v2010 = vextract.low.u32 %v2009
    %v2011 = vextract.high.u32 %v2009
    %v2012 = vmul.u32.u64.compose %v2008, %v2003
    %v2013 = vextract.low.u32 %v2012
    %v2014 = vextract.high.u32 %v2012
    %v2015 = vmul.u32 %v2008, %v1999
    %v2016 = vadd.s32 %v2011, %v2013
    %vm2017 = vc.u32 %v2011, %v2013
    %v2018 = vadd.s32 %v2014, 1
    %v2019 = vsel %vm2017, %v2018, %v2014
    %v2020 = vadd.s32 %v2015, %v2019
    %v2021 = vadd.s32 %v2020, 536870912
    %v2022 = vshrl.u32 %v2021, 30
    %v2023 = vshll.u32 %v2022, 30
    %v2024 = vsub.s32 %v2020, %v2023
    %vm2025 = vcmp.lt.s32.totalorder %v2024, 0
    %v2026 = vsub.s32 0, %v2024
    %v2027 = vsel %vm2025, %v2026, %v2024
    %v2028 = vclz %v2027
    %v2029 = vsub.s32 %v2028, 2
    %vm2030 = vcmp.gt.s32.totalorder 0, %v2029
    %v2031 = vsel %vm2030, 0, %v2029
    %v2032 = vsub.s32 32, %v2031
    %v2033 = vshll.u32 %v2024, %v2031
    %v2034 = vshrl.u32 %v2016, %v2032
    %v2035 = vor.u32 %v2033, %v2034
    %v2036 = vsub.s32 4294967266, %v2031
    %v2037 = vadd.s32 %v2036, 127
    %v2038 = vshll.u32 %v2037, 23
    %v2039 = vor.u32 4788187, %v2038
    %v2040 = vand.u32 2147483647, %v2039
    %v2042 = vcvt.s32.f32 %v2035
    %v2043 = vmul.f32 %v2042, %v2040
    %v2044 = vxor.u32 %v2043, 2147483648
    %v2045 = vsel %vm1962, %v2044, %v2043
    %v2046 = vsub.s32 4, %v2022
    %v2047 = vsel %vm1962, %v2046, %v2022
    %v2048 = vsel %vm1961, %v1316, %v2045
    %v2049 = vsel %vm1961, 0, %v2047
    %v2050 = vcosq.f32.pop %v2048
    %v2051 = vsinq.f32.pop %v2048
    %vm2052 = vweird.f32 %v1316
    %v2053 = vand.u32 %v2049, 3
    %vm2054 = vcmp.lt.s32.totalorder %v2053, 2
    %vm2055 = vcmp.eq.s32.totalorder %v2053, 0
    %v2056 = vxor.u32 %v2051, 2147483648
    %v2057 = vsel %vm2055, %v2050, %v2056
    %vm2058 = vcmp.eq.s32.totalorder %v2053, 2
    %v2059 = vxor.u32 %v2050, 2147483648
    %v2060 = vsel %vm2058, %v2059, %v2051
    %v2061 = vsel %vm2054, %v2057, %v2060
    %v2062 = vsel %vm2052, nan, %v2061
    %v2063 = vand.u32 2147483647, %v1317
    %vm2064 = vcmp.le.f32.partialorder %v2063, 0.7853982
    %vm2065 = vcmp.lt.s32.totalorder %v1317, 0
    %v2066 = vand.u32 %v1317, 2139095040
    %v2067 = vshrl.u32 %v2066, 23
    %v2068 = vsub.s32 %v2067, 127
    %v2069 = vand.u32 2147483647, %v1317
    %v2070 = vand.u32 %v2069, 8388607
    %v2071 = vor.u32 %v2070, 8388608
    %v2072 = vsub.s32 0, %v2071
    %v2073 = vadd.s32 %v2068, 1
    %vm2074 = vcmp.gt.s32.totalorder %v2073, 0
    %v2075 = vsel %vm2074, %v2073, 0
    %v2076 = vshrl.u32 %v2075, 5
    %v2077 = vand.u32 %v2075, 31
    %v2078 = vsub.s32 32, %v2077
    %v2079 = vshrl.u32 683565275, %v2078
    %v2080 = vshll.u32 683565275, %v2077
    %v2081 = vshrl.u32 2475754826, %v2078
    %v2082 = vor.u32 %v2080, %v2081
    %v2083 = vshll.u32 2475754826, %v2077
    %v2084 = vshrl.u32 2131351028, %v2078
    %v2085 = vor.u32 %v2083, %v2084
    %v2086 = vshll.u32 2131351028, %v2077
    %v2087 = vshrl.u32 2102212464, %v2078
    %v2088 = vor.u32 %v2086, %v2087
    %v2089 = vshll.u32 2102212464, %v2077
    %v2090 = vshrl.u32 920167782, %v2078
    %v2091 = vor.u32 %v2089, %v2090
    %v2092 = vshll.u32 920167782, %v2077
    %v2093 = vshrl.u32 1326507024, %v2078
    %v2094 = vor.u32 %v2092, %v2093
    %vm2095 = vcmp.lt.s32.totalorder %v2076, 1
    %vm2096 = vcmp.lt.s32.totalorder %v2076, 2
    %vm2097 = vcmp.lt.s32.totalorder %v2076, 3
    %vm2098 = vcmp.lt.s32.totalorder %v2076, 4
    %v2099 = vsel %vm2095, %v2079, %v2082
    %v2100 = vsel %vm2098, %v2088, 2102212464
    %v2101 = vsel %vm2097, %v2085, %v2100
    %v2102 = vsel %vm2096, %v2099, %v2101
    %v2103 = vsel %vm2095, %v2082, %v2085
    %v2104 = vsel %vm2098, %v2091, 920167782
    %v2105 = vsel %vm2097, %v2088, %v2104
    %v2106 = vsel %vm2096, %v2103, %v2105
    %v2107 = vsel %vm2095, %v2085, %v2088
    %v2108 = vsel %vm2098, %v2094, 1326507024
    %v2109 = vsel %vm2097, %v2091, %v2108
    %v2110 = vsel %vm2096, %v2107, %v2109
    %v2111 = vshll.u32 %v2071, 8
    %v2112 = vmul.u32.u64.compose %v2111, %v2110
    %v2113 = vextract.low.u32 %v2112
    %v2114 = vextract.high.u32 %v2112
    %v2115 = vmul.u32.u64.compose %v2111, %v2106
    %v2116 = vextract.low.u32 %v2115
    %v2117 = vextract.high.u32 %v2115
    %v2118 = vmul.u32 %v2111, %v2102
    %v2119 = vadd.s32 %v2114, %v2116
    %vm2120 = vc.u32 %v2114, %v2116
    %v2121 = vadd.s32 %v2117, 1
    %v2122 = vsel %vm2120, %v2121, %v2117
    %v2123 = vadd.s32 %v2118, %v2122
    %v2124 = vadd.s32 %v2123, 536870912
    %v2125 = vshrl.u32 %v2124, 30
    %v2126 = vshll.u32 %v2125, 30
    %v2127 = vsub.s32 %v2123, %v2126
    %vm2128 = vcmp.lt.s32.totalorder %v2127, 0
    %v2129 = vsub.s32 0, %v2127
    %v2130 = vsel %vm2128, %v2129, %v2127
    %v2131 = vclz %v2130
    %v2132 = vsub.s32 %v2131, 2
    %vm2133 = vcmp.gt.s32.totalorder 0, %v2132
    %v2134 = vsel %vm2133, 0, %v2132
    %v2135 = vsub.s32 32, %v2134
    %v2136 = vshll.u32 %v2127, %v2134
    %v2137 = vshrl.u32 %v2119, %v2135
    %v2138 = vor.u32 %v2136, %v2137
    %v2139 = vsub.s32 4294967266, %v2134
    %v2140 = vadd.s32 %v2139, 127
    %v2141 = vshll.u32 %v2140, 23
    %v2142 = vor.u32 4788187, %v2141
    %v2143 = vand.u32 2147483647, %v2142
    %v2145 = vcvt.s32.f32 %v2138
    %v2146 = vmul.f32 %v2145, %v2143
    %v2147 = vxor.u32 %v2146, 2147483648
    %v2148 = vsel %vm2065, %v2147, %v2146
    %v2149 = vsub.s32 4, %v2125
    %v2150 = vsel %vm2065, %v2149, %v2125
    %v2151 = vsel %vm2064, %v1317, %v2148
    %v2152 = vsel %vm2064, 0, %v2150
    %v2153 = vcosq.f32.pop %v2151
    %v2154 = vsinq.f32.pop %v2151
    %vm2155 = vweird.f32 %v1317
    %v2156 = vand.u32 %v2152, 3
    %vm2157 = vcmp.lt.s32.totalorder %v2156, 2
    %vm2158 = vcmp.eq.s32.totalorder %v2156, 0
    %v2159 = vxor.u32 %v2154, 2147483648
    %v2160 = vsel %vm2158, %v2153, %v2159
    %vm2161 = vcmp.eq.s32.totalorder %v2156, 2
    %v2162 = vxor.u32 %v2153, 2147483648
    %v2163 = vsel %vm2161, %v2162, %v2154
    %v2164 = vsel %vm2157, %v2160, %v2163
    %v2165 = vsel %vm2155, nan, %v2164
    %v2166 = vand.u32 2147483647, %v1318
    %vm2167 = vcmp.le.f32.partialorder %v2166, 0.7853982
    %vm2168 = vcmp.lt.s32.totalorder %v1318, 0
    %v2169 = vand.u32 %v1318, 2139095040
    %v2170 = vshrl.u32 %v2169, 23
    %v2171 = vsub.s32 %v2170, 127
    %v2172 = vand.u32 2147483647, %v1318
    %v2173 = vand.u32 %v2172, 8388607
    %v2174 = vor.u32 %v2173, 8388608
    %v2175 = vsub.s32 0, %v2174
    %v2176 = vadd.s32 %v2171, 1
    %vm2177 = vcmp.gt.s32.totalorder %v2176, 0
    %v2178 = vsel %vm2177, %v2176, 0
    %v2179 = vshrl.u32 %v2178, 5
    %v2180 = vand.u32 %v2178, 31
    %v2181 = vsub.s32 32, %v2180
    %v2182 = vshrl.u32 683565275, %v2181
    %v2183 = vshll.u32 683565275, %v2180
    %v2184 = vshrl.u32 2475754826, %v2181
    %v2185 = vor.u32 %v2183, %v2184
    %v2186 = vshll.u32 2475754826, %v2180
    %v2187 = vshrl.u32 2131351028, %v2181
    %v2188 = vor.u32 %v2186, %v2187
    %v2189 = vshll.u32 2131351028, %v2180
    %v2190 = vshrl.u32 2102212464, %v2181
    %v2191 = vor.u32 %v2189, %v2190
    %v2192 = vshll.u32 2102212464, %v2180
    %v2193 = vshrl.u32 920167782, %v2181
    %v2194 = vor.u32 %v2192, %v2193
    %v2195 = vshll.u32 920167782, %v2180
    %v2196 = vshrl.u32 1326507024, %v2181
    %v2197 = vor.u32 %v2195, %v2196
    %vm2198 = vcmp.lt.s32.totalorder %v2179, 1
    %vm2199 = vcmp.lt.s32.totalorder %v2179, 2
    %vm2200 = vcmp.lt.s32.totalorder %v2179, 3
    %vm2201 = vcmp.lt.s32.totalorder %v2179, 4
    %v2202 = vsel %vm2198, %v2182, %v2185
    %v2203 = vsel %vm2201, %v2191, 2102212464
    %v2204 = vsel %vm2200, %v2188, %v2203
    %v2205 = vsel %vm2199, %v2202, %v2204
    %v2206 = vsel %vm2198, %v2185, %v2188
    %v2207 = vsel %vm2201, %v2194, 920167782
    %v2208 = vsel %vm2200, %v2191, %v2207
    %v2209 = vsel %vm2199, %v2206, %v2208
    %v2210 = vsel %vm2198, %v2188, %v2191
    %v2211 = vsel %vm2201, %v2197, 1326507024
    %v2212 = vsel %vm2200, %v2194, %v2211
    %v2213 = vsel %vm2199, %v2210, %v2212
    %v2214 = vshll.u32 %v2174, 8
    %v2215 = vmul.u32.u64.compose %v2214, %v2213
    %v2216 = vextract.low.u32 %v2215
    %v2217 = vextract.high.u32 %v2215
    %v2218 = vmul.u32.u64.compose %v2214, %v2209
    %v2219 = vextract.low.u32 %v2218
    %v2220 = vextract.high.u32 %v2218
    %v2221 = vmul.u32 %v2214, %v2205
    %v2222 = vadd.s32 %v2217, %v2219
    %vm2223 = vc.u32 %v2217, %v2219
    %v2224 = vadd.s32 %v2220, 1
    %v2225 = vsel %vm2223, %v2224, %v2220
    %v2226 = vadd.s32 %v2221, %v2225
    %v2227 = vadd.s32 %v2226, 536870912
    %v2228 = vshrl.u32 %v2227, 30
    %v2229 = vshll.u32 %v2228, 30
    %v2230 = vsub.s32 %v2226, %v2229
    %vm2231 = vcmp.lt.s32.totalorder %v2230, 0
    %v2232 = vsub.s32 0, %v2230
    %v2233 = vsel %vm2231, %v2232, %v2230
    %v2234 = vclz %v2233
    %v2235 = vsub.s32 %v2234, 2
    %vm2236 = vcmp.gt.s32.totalorder 0, %v2235
    %v2237 = vsel %vm2236, 0, %v2235
    %v2238 = vsub.s32 32, %v2237
    %v2239 = vshll.u32 %v2230, %v2237
    %v2240 = vshrl.u32 %v2222, %v2238
    %v2241 = vor.u32 %v2239, %v2240
    %v2242 = vsub.s32 4294967266, %v2237
    %v2243 = vadd.s32 %v2242, 127
    %v2244 = vshll.u32 %v2243, 23
    %v2245 = vor.u32 4788187, %v2244
    %v2246 = vand.u32 2147483647, %v2245
    %v2248 = vcvt.s32.f32 %v2241
    %v2249 = vmul.f32 %v2248, %v2246
    %v2250 = vxor.u32 %v2249, 2147483648
    %v2251 = vsel %vm2168, %v2250, %v2249
    %v2252 = vsub.s32 4, %v2228
    %v2253 = vsel %vm2168, %v2252, %v2228
    %v2254 = vsel %vm2167, %v1318, %v2251
    %v2255 = vsel %vm2167, 0, %v2253
    %v2256 = vcosq.f32.pop %v2254
    %v2257 = vsinq.f32.pop %v2254
    %vm2258 = vweird.f32 %v1318
    %v2259 = vand.u32 %v2255, 3
    %vm2260 = vcmp.lt.s32.totalorder %v2259, 2
    %vm2261 = vcmp.eq.s32.totalorder %v2259, 0
    %v2262 = vxor.u32 %v2257, 2147483648
    %v2263 = vsel %vm2261, %v2256, %v2262
    %vm2264 = vcmp.eq.s32.totalorder %v2259, 2
    %v2265 = vxor.u32 %v2256, 2147483648
    %v2266 = vsel %vm2264, %v2265, %v2257
    %v2267 = vsel %vm2260, %v2263, %v2266
    %v2268 = vsel %vm2258, nan, %v2267
    %v2269 = vand.u32 2147483647, %v1319
    %vm2270 = vcmp.le.f32.partialorder %v2269, 0.7853982
    %vm2271 = vcmp.lt.s32.totalorder %v1319, 0
    %v2272 = vand.u32 %v1319, 2139095040
    %v2273 = vshrl.u32 %v2272, 23
    %v2274 = vsub.s32 %v2273, 127
    %v2275 = vand.u32 2147483647, %v1319
    %v2276 = vand.u32 %v2275, 8388607
    %v2277 = vor.u32 %v2276, 8388608
    %v2278 = vsub.s32 0, %v2277
    %v2279 = vadd.s32 %v2274, 1
    %vm2280 = vcmp.gt.s32.totalorder %v2279, 0
    %v2281 = vsel %vm2280, %v2279, 0
    %v2282 = vshrl.u32 %v2281, 5
    %v2283 = vand.u32 %v2281, 31
    %v2284 = vsub.s32 32, %v2283
    %v2285 = vshrl.u32 683565275, %v2284
    %v2286 = vshll.u32 683565275, %v2283
    %v2287 = vshrl.u32 2475754826, %v2284
    %v2288 = vor.u32 %v2286, %v2287
    %v2289 = vshll.u32 2475754826, %v2283
    %v2290 = vshrl.u32 2131351028, %v2284
    %v2291 = vor.u32 %v2289, %v2290
    %v2292 = vshll.u32 2131351028, %v2283
    %v2293 = vshrl.u32 2102212464, %v2284
    %v2294 = vor.u32 %v2292, %v2293
    %v2295 = vshll.u32 2102212464, %v2283
    %v2296 = vshrl.u32 920167782, %v2284
    %v2297 = vor.u32 %v2295, %v2296
    %v2298 = vshll.u32 920167782, %v2283
    %v2299 = vshrl.u32 1326507024, %v2284
    %v2300 = vor.u32 %v2298, %v2299
    %vm2301 = vcmp.lt.s32.totalorder %v2282, 1
    %vm2302 = vcmp.lt.s32.totalorder %v2282, 2
    %vm2303 = vcmp.lt.s32.totalorder %v2282, 3
    %vm2304 = vcmp.lt.s32.totalorder %v2282, 4
    %v2305 = vsel %vm2301, %v2285, %v2288
    %v2306 = vsel %vm2304, %v2294, 2102212464
    %v2307 = vsel %vm2303, %v2291, %v2306
    %v2308 = vsel %vm2302, %v2305, %v2307
    %v2309 = vsel %vm2301, %v2288, %v2291
    %v2310 = vsel %vm2304, %v2297, 920167782
    %v2311 = vsel %vm2303, %v2294, %v2310
    %v2312 = vsel %vm2302, %v2309, %v2311
    %v2313 = vsel %vm2301, %v2291, %v2294
    %v2314 = vsel %vm2304, %v2300, 1326507024
    %v2315 = vsel %vm2303, %v2297, %v2314
    %v2316 = vsel %vm2302, %v2313, %v2315
    %v2317 = vshll.u32 %v2277, 8
    %v2318 = vmul.u32.u64.compose %v2317, %v2316
    %v2319 = vextract.low.u32 %v2318
    %v2320 = vextract.high.u32 %v2318
    %v2321 = vmul.u32.u64.compose %v2317, %v2312
    %v2322 = vextract.low.u32 %v2321
    %v2323 = vextract.high.u32 %v2321
    %v2324 = vmul.u32 %v2317, %v2308
    %v2325 = vadd.s32 %v2320, %v2322
    %vm2326 = vc.u32 %v2320, %v2322
    %v2327 = vadd.s32 %v2323, 1
    %v2328 = vsel %vm2326, %v2327, %v2323
    %v2329 = vadd.s32 %v2324, %v2328
    %v2330 = vadd.s32 %v2329, 536870912
    %v2331 = vshrl.u32 %v2330, 30
    %v2332 = vshll.u32 %v2331, 30
    %v2333 = vsub.s32 %v2329, %v2332
    %vm2334 = vcmp.lt.s32.totalorder %v2333, 0
    %v2335 = vsub.s32 0, %v2333
    %v2336 = vsel %vm2334, %v2335, %v2333
    %v2337 = vclz %v2336
    %v2338 = vsub.s32 %v2337, 2
    %vm2339 = vcmp.gt.s32.totalorder 0, %v2338
    %v2340 = vsel %vm2339, 0, %v2338
    %v2341 = vsub.s32 32, %v2340
    %v2342 = vshll.u32 %v2333, %v2340
    %v2343 = vshrl.u32 %v2325, %v2341
    %v2344 = vor.u32 %v2342, %v2343
    %v2345 = vsub.s32 4294967266, %v2340
    %v2346 = vadd.s32 %v2345, 127
    %v2347 = vshll.u32 %v2346, 23
    %v2348 = vor.u32 4788187, %v2347
    %v2349 = vand.u32 2147483647, %v2348
    %v2351 = vcvt.s32.f32 %v2344
    %v2352 = vmul.f32 %v2351, %v2349
    %v2353 = vxor.u32 %v2352, 2147483648
    %v2354 = vsel %vm2271, %v2353, %v2352
    %v2355 = vsub.s32 4, %v2331
    %v2356 = vsel %vm2271, %v2355, %v2331
    %v2357 = vsel %vm2270, %v1319, %v2354
    %v2358 = vsel %vm2270, 0, %v2356
    %v2359 = vcosq.f32.pop %v2357
    %v2360 = vsinq.f32.pop %v2357
    %vm2361 = vweird.f32 %v1319
    %v2362 = vand.u32 %v2358, 3
    %vm2363 = vcmp.lt.s32.totalorder %v2362, 2
    %vm2364 = vcmp.eq.s32.totalorder %v2362, 0
    %v2365 = vxor.u32 %v2360, 2147483648
    %v2366 = vsel %vm2364, %v2359, %v2365
    %vm2367 = vcmp.eq.s32.totalorder %v2362, 2
    %v2368 = vxor.u32 %v2359, 2147483648
    %v2369 = vsel %vm2367, %v2368, %v2360
    %v2370 = vsel %vm2363, %v2366, %v2369
    %v2371 = vsel %vm2361, nan, %v2370
    %v2372 = vand.u32 2147483647, %v1320
    %vm2373 = vcmp.le.f32.partialorder %v2372, 0.7853982
    %vm2374 = vcmp.lt.s32.totalorder %v1320, 0
    %v2375 = vand.u32 %v1320, 2139095040
    %v2376 = vshrl.u32 %v2375, 23
    %v2377 = vsub.s32 %v2376, 127
    %v2378 = vand.u32 2147483647, %v1320
    %v2379 = vand.u32 %v2378, 8388607
    %v2380 = vor.u32 %v2379, 8388608
    %v2381 = vsub.s32 0, %v2380
    %v2382 = vadd.s32 %v2377, 1
    %vm2383 = vcmp.gt.s32.totalorder %v2382, 0
    %v2384 = vsel %vm2383, %v2382, 0
    %v2385 = vshrl.u32 %v2384, 5
    %v2386 = vand.u32 %v2384, 31
    %v2387 = vsub.s32 32, %v2386
    %v2388 = vshrl.u32 683565275, %v2387
    %v2389 = vshll.u32 683565275, %v2386
    %v2390 = vshrl.u32 2475754826, %v2387
    %v2391 = vor.u32 %v2389, %v2390
    %v2392 = vshll.u32 2475754826, %v2386
    %v2393 = vshrl.u32 2131351028, %v2387
    %v2394 = vor.u32 %v2392, %v2393
    %v2395 = vshll.u32 2131351028, %v2386
    %v2396 = vshrl.u32 2102212464, %v2387
    %v2397 = vor.u32 %v2395, %v2396
    %v2398 = vshll.u32 2102212464, %v2386
    %v2399 = vshrl.u32 920167782, %v2387
    %v2400 = vor.u32 %v2398, %v2399
    %v2401 = vshll.u32 920167782, %v2386
    %v2402 = vshrl.u32 1326507024, %v2387
    %v2403 = vor.u32 %v2401, %v2402
    %vm2404 = vcmp.lt.s32.totalorder %v2385, 1
    %vm2405 = vcmp.lt.s32.totalorder %v2385, 2
    %vm2406 = vcmp.lt.s32.totalorder %v2385, 3
    %vm2407 = vcmp.lt.s32.totalorder %v2385, 4
    %v2408 = vsel %vm2404, %v2388, %v2391
    %v2409 = vsel %vm2407, %v2397, 2102212464
    %v2410 = vsel %vm2406, %v2394, %v2409
    %v2411 = vsel %vm2405, %v2408, %v2410
    %v2412 = vsel %vm2404, %v2391, %v2394
    %v2413 = vsel %vm2407, %v2400, 920167782
    %v2414 = vsel %vm2406, %v2397, %v2413
    %v2415 = vsel %vm2405, %v2412, %v2414
    %v2416 = vsel %vm2404, %v2394, %v2397
    %v2417 = vsel %vm2407, %v2403, 1326507024
    %v2418 = vsel %vm2406, %v2400, %v2417
    %v2419 = vsel %vm2405, %v2416, %v2418
    %v2420 = vshll.u32 %v2380, 8
    %v2421 = vmul.u32.u64.compose %v2420, %v2419
    %v2422 = vextract.low.u32 %v2421
    %v2423 = vextract.high.u32 %v2421
    %v2424 = vmul.u32.u64.compose %v2420, %v2415
    %v2425 = vextract.low.u32 %v2424
    %v2426 = vextract.high.u32 %v2424
    %v2427 = vmul.u32 %v2420, %v2411
    %v2428 = vadd.s32 %v2423, %v2425
    %vm2429 = vc.u32 %v2423, %v2425
    %v2430 = vadd.s32 %v2426, 1
    %v2431 = vsel %vm2429, %v2430, %v2426
    %v2432 = vadd.s32 %v2427, %v2431
    %v2433 = vadd.s32 %v2432, 536870912
    %v2434 = vshrl.u32 %v2433, 30
    %v2435 = vshll.u32 %v2434, 30
    %v2436 = vsub.s32 %v2432, %v2435
    %vm2437 = vcmp.lt.s32.totalorder %v2436, 0
    %v2438 = vsub.s32 0, %v2436
    %v2439 = vsel %vm2437, %v2438, %v2436
    %v2440 = vclz %v2439
    %v2441 = vsub.s32 %v2440, 2
    %vm2442 = vcmp.gt.s32.totalorder 0, %v2441
    %v2443 = vsel %vm2442, 0, %v2441
    %v2444 = vsub.s32 32, %v2443
    %v2445 = vshll.u32 %v2436, %v2443
    %v2446 = vshrl.u32 %v2428, %v2444
    %v2447 = vor.u32 %v2445, %v2446
    %v2448 = vsub.s32 4294967266, %v2443
    %v2449 = vadd.s32 %v2448, 127
    %v2450 = vshll.u32 %v2449, 23
    %v2451 = vor.u32 4788187, %v2450
    %v2452 = vand.u32 2147483647, %v2451
    %v2454 = vcvt.s32.f32 %v2447
    %v2455 = vmul.f32 %v2454, %v2452
    %v2456 = vxor.u32 %v2455, 2147483648
    %v2457 = vsel %vm2374, %v2456, %v2455
    %v2458 = vsub.s32 4, %v2434
    %v2459 = vsel %vm2374, %v2458, %v2434
    %v2460 = vsel %vm2373, %v1320, %v2457
    %v2461 = vsel %vm2373, 0, %v2459
    %v2462 = vcosq.f32.pop %v2460
    %v2463 = vsinq.f32.pop %v2460
    %vm2464 = vweird.f32 %v1320
    %v2465 = vand.u32 %v2461, 3
    %vm2466 = vcmp.lt.s32.totalorder %v2465, 2
    %vm2467 = vcmp.eq.s32.totalorder %v2465, 0
    %v2468 = vxor.u32 %v2463, 2147483648
    %v2469 = vsel %vm2467, %v2462, %v2468
    %vm2470 = vcmp.eq.s32.totalorder %v2465, 2
    %v2471 = vxor.u32 %v2462, 2147483648
    %v2472 = vsel %vm2470, %v2471, %v2463
    %v2473 = vsel %vm2466, %v2469, %v2472
    %v2474 = vsel %vm2464, nan, %v2473
    %v2475 = vand.u32 2147483647, %v1321
    %vm2476 = vcmp.le.f32.partialorder %v2475, 0.7853982
    %vm2477 = vcmp.lt.s32.totalorder %v1321, 0
    %v2478 = vand.u32 %v1321, 2139095040
    %v2479 = vshrl.u32 %v2478, 23
    %v2480 = vsub.s32 %v2479, 127
    %v2481 = vand.u32 2147483647, %v1321
    %v2482 = vand.u32 %v2481, 8388607
    %v2483 = vor.u32 %v2482, 8388608
    %v2484 = vsub.s32 0, %v2483
    %v2485 = vadd.s32 %v2480, 1
    %vm2486 = vcmp.gt.s32.totalorder %v2485, 0
    %v2487 = vsel %vm2486, %v2485, 0
    %v2488 = vshrl.u32 %v2487, 5
    %v2489 = vand.u32 %v2487, 31
    %v2490 = vsub.s32 32, %v2489
    %v2491 = vshrl.u32 683565275, %v2490
    %v2492 = vshll.u32 683565275, %v2489
    %v2493 = vshrl.u32 2475754826, %v2490
    %v2494 = vor.u32 %v2492, %v2493
    %v2495 = vshll.u32 2475754826, %v2489
    %v2496 = vshrl.u32 2131351028, %v2490
    %v2497 = vor.u32 %v2495, %v2496
    %v2498 = vshll.u32 2131351028, %v2489
    %v2499 = vshrl.u32 2102212464, %v2490
    %v2500 = vor.u32 %v2498, %v2499
    %v2501 = vshll.u32 2102212464, %v2489
    %v2502 = vshrl.u32 920167782, %v2490
    %v2503 = vor.u32 %v2501, %v2502
    %v2504 = vshll.u32 920167782, %v2489
    %v2505 = vshrl.u32 1326507024, %v2490
    %v2506 = vor.u32 %v2504, %v2505
    %vm2507 = vcmp.lt.s32.totalorder %v2488, 1
    %vm2508 = vcmp.lt.s32.totalorder %v2488, 2
    %vm2509 = vcmp.lt.s32.totalorder %v2488, 3
    %vm2510 = vcmp.lt.s32.totalorder %v2488, 4
    %v2511 = vsel %vm2507, %v2491, %v2494
    %v2512 = vsel %vm2510, %v2500, 2102212464
    %v2513 = vsel %vm2509, %v2497, %v2512
    %v2514 = vsel %vm2508, %v2511, %v2513
    %v2515 = vsel %vm2507, %v2494, %v2497
    %v2516 = vsel %vm2510, %v2503, 920167782
    %v2517 = vsel %vm2509, %v2500, %v2516
    %v2518 = vsel %vm2508, %v2515, %v2517
    %v2519 = vsel %vm2507, %v2497, %v2500
    %v2520 = vsel %vm2510, %v2506, 1326507024
    %v2521 = vsel %vm2509, %v2503, %v2520
    %v2522 = vsel %vm2508, %v2519, %v2521
    %v2523 = vshll.u32 %v2483, 8
    %v2524 = vmul.u32.u64.compose %v2523, %v2522
    %v2525 = vextract.low.u32 %v2524
    %v2526 = vextract.high.u32 %v2524
    %v2527 = vmul.u32.u64.compose %v2523, %v2518
    %v2528 = vextract.low.u32 %v2527
    %v2529 = vextract.high.u32 %v2527
    %v2530 = vmul.u32 %v2523, %v2514
    %v2531 = vadd.s32 %v2526, %v2528
    %vm2532 = vc.u32 %v2526, %v2528
    %v2533 = vadd.s32 %v2529, 1
    %v2534 = vsel %vm2532, %v2533, %v2529
    %v2535 = vadd.s32 %v2530, %v2534
    %v2536 = vadd.s32 %v2535, 536870912
    %v2537 = vshrl.u32 %v2536, 30
    %v2538 = vshll.u32 %v2537, 30
    %v2539 = vsub.s32 %v2535, %v2538
    %vm2540 = vcmp.lt.s32.totalorder %v2539, 0
    %v2541 = vsub.s32 0, %v2539
    %v2542 = vsel %vm2540, %v2541, %v2539
    %v2543 = vclz %v2542
    %v2544 = vsub.s32 %v2543, 2
    %vm2545 = vcmp.gt.s32.totalorder 0, %v2544
    %v2546 = vsel %vm2545, 0, %v2544
    %v2547 = vsub.s32 32, %v2546
    %v2548 = vshll.u32 %v2539, %v2546
    %v2549 = vshrl.u32 %v2531, %v2547
    %v2550 = vor.u32 %v2548, %v2549
    %v2551 = vsub.s32 4294967266, %v2546
    %v2552 = vadd.s32 %v2551, 127
    %v2553 = vshll.u32 %v2552, 23
    %v2554 = vor.u32 4788187, %v2553
    %v2555 = vand.u32 2147483647, %v2554
    %v2557 = vcvt.s32.f32 %v2550
    %v2558 = vmul.f32 %v2557, %v2555
    %v2559 = vxor.u32 %v2558, 2147483648
    %v2560 = vsel %vm2477, %v2559, %v2558
    %v2561 = vsub.s32 4, %v2537
    %v2562 = vsel %vm2477, %v2561, %v2537
    %v2563 = vsel %vm2476, %v1321, %v2560
    %v2564 = vsel %vm2476, 0, %v2562
    %v2565 = vcosq.f32.pop %v2563
    %v2566 = vsinq.f32.pop %v2563
    %vm2567 = vweird.f32 %v1321
    %v2568 = vand.u32 %v2564, 3
    %vm2569 = vcmp.lt.s32.totalorder %v2568, 2
    %vm2570 = vcmp.eq.s32.totalorder %v2568, 0
    %v2571 = vxor.u32 %v2566, 2147483648
    %v2572 = vsel %vm2570, %v2565, %v2571
    %vm2573 = vcmp.eq.s32.totalorder %v2568, 2
    %v2574 = vxor.u32 %v2565, 2147483648
    %v2575 = vsel %vm2573, %v2574, %v2566
    %v2576 = vsel %vm2569, %v2572, %v2575
    %v2577 = vsel %vm2567, nan, %v2576
    %v2578 = vand.u32 2147483647, %v1322
    %vm2579 = vcmp.le.f32.partialorder %v2578, 0.7853982
    %vm2580 = vcmp.lt.s32.totalorder %v1322, 0
    %v2581 = vand.u32 %v1322, 2139095040
    %v2582 = vshrl.u32 %v2581, 23
    %v2583 = vsub.s32 %v2582, 127
    %v2584 = vand.u32 2147483647, %v1322
    %v2585 = vand.u32 %v2584, 8388607
    %v2586 = vor.u32 %v2585, 8388608
    %v2587 = vsub.s32 0, %v2586
    %v2588 = vadd.s32 %v2583, 1
    %vm2589 = vcmp.gt.s32.totalorder %v2588, 0
    %v2590 = vsel %vm2589, %v2588, 0
    %v2591 = vshrl.u32 %v2590, 5
    %v2592 = vand.u32 %v2590, 31
    %v2593 = vsub.s32 32, %v2592
    %v2594 = vshrl.u32 683565275, %v2593
    %v2595 = vshll.u32 683565275, %v2592
    %v2596 = vshrl.u32 2475754826, %v2593
    %v2597 = vor.u32 %v2595, %v2596
    %v2598 = vshll.u32 2475754826, %v2592
    %v2599 = vshrl.u32 2131351028, %v2593
    %v2600 = vor.u32 %v2598, %v2599
    %v2601 = vshll.u32 2131351028, %v2592
    %v2602 = vshrl.u32 2102212464, %v2593
    %v2603 = vor.u32 %v2601, %v2602
    %v2604 = vshll.u32 2102212464, %v2592
    %v2605 = vshrl.u32 920167782, %v2593
    %v2606 = vor.u32 %v2604, %v2605
    %v2607 = vshll.u32 920167782, %v2592
    %v2608 = vshrl.u32 1326507024, %v2593
    %v2609 = vor.u32 %v2607, %v2608
    %vm2610 = vcmp.lt.s32.totalorder %v2591, 1
    %vm2611 = vcmp.lt.s32.totalorder %v2591, 2
    %vm2612 = vcmp.lt.s32.totalorder %v2591, 3
    %vm2613 = vcmp.lt.s32.totalorder %v2591, 4
    %v2614 = vsel %vm2610, %v2594, %v2597
    %v2615 = vsel %vm2613, %v2603, 2102212464
    %v2616 = vsel %vm2612, %v2600, %v2615
    %v2617 = vsel %vm2611, %v2614, %v2616
    %v2618 = vsel %vm2610, %v2597, %v2600
    %v2619 = vsel %vm2613, %v2606, 920167782
    %v2620 = vsel %vm2612, %v2603, %v2619
    %v2621 = vsel %vm2611, %v2618, %v2620
    %v2622 = vsel %vm2610, %v2600, %v2603
    %v2623 = vsel %vm2613, %v2609, 1326507024
    %v2624 = vsel %vm2612, %v2606, %v2623
    %v2625 = vsel %vm2611, %v2622, %v2624
    %v2626 = vshll.u32 %v2586, 8
    %v2627 = vmul.u32.u64.compose %v2626, %v2625
    %v2628 = vextract.low.u32 %v2627
    %v2629 = vextract.high.u32 %v2627
    %v2630 = vmul.u32.u64.compose %v2626, %v2621
    %v2631 = vextract.low.u32 %v2630
    %v2632 = vextract.high.u32 %v2630
    %v2633 = vmul.u32 %v2626, %v2617
    %v2634 = vadd.s32 %v2629, %v2631
    %vm2635 = vc.u32 %v2629, %v2631
    %v2636 = vadd.s32 %v2632, 1
    %v2637 = vsel %vm2635, %v2636, %v2632
    %v2638 = vadd.s32 %v2633, %v2637
    %v2639 = vadd.s32 %v2638, 536870912
    %v2640 = vshrl.u32 %v2639, 30
    %v2641 = vshll.u32 %v2640, 30
    %v2642 = vsub.s32 %v2638, %v2641
    %vm2643 = vcmp.lt.s32.totalorder %v2642, 0
    %v2644 = vsub.s32 0, %v2642
    %v2645 = vsel %vm2643, %v2644, %v2642
    %v2646 = vclz %v2645
    %v2647 = vsub.s32 %v2646, 2
    %vm2648 = vcmp.gt.s32.totalorder 0, %v2647
    %v2649 = vsel %vm2648, 0, %v2647
    %v2650 = vsub.s32 32, %v2649
    %v2651 = vshll.u32 %v2642, %v2649
    %v2652 = vshrl.u32 %v2634, %v2650
    %v2653 = vor.u32 %v2651, %v2652
    %v2654 = vsub.s32 4294967266, %v2649
    %v2655 = vadd.s32 %v2654, 127
    %v2656 = vshll.u32 %v2655, 23
    %v2657 = vor.u32 4788187, %v2656
    %v2658 = vand.u32 2147483647, %v2657
    %v2660 = vcvt.s32.f32 %v2653
    %v2661 = vmul.f32 %v2660, %v2658
    %v2662 = vxor.u32 %v2661, 2147483648
    %v2663 = vsel %vm2580, %v2662, %v2661
    %v2664 = vsub.s32 4, %v2640
    %v2665 = vsel %vm2580, %v2664, %v2640
    %v2666 = vsel %vm2579, %v1322, %v2663
    %v2667 = vsel %vm2579, 0, %v2665
    %v2668 = vcosq.f32.pop %v2666
    %v2669 = vsinq.f32.pop %v2666
    %vm2670 = vweird.f32 %v1322
    %v2671 = vand.u32 %v2667, 3
    %vm2672 = vcmp.lt.s32.totalorder %v2671, 2
    %vm2673 = vcmp.eq.s32.totalorder %v2671, 0
    %v2674 = vxor.u32 %v2669, 2147483648
    %v2675 = vsel %vm2673, %v2668, %v2674
    %vm2676 = vcmp.eq.s32.totalorder %v2671, 2
    %v2677 = vxor.u32 %v2668, 2147483648
    %v2678 = vsel %vm2676, %v2677, %v2669
    %v2679 = vsel %vm2672, %v2675, %v2678
    %v2680 = vsel %vm2670, nan, %v2679
    %v2681 = vand.u32 2147483647, %v1323
    %vm2682 = vcmp.le.f32.partialorder %v2681, 0.7853982
    %vm2683 = vcmp.lt.s32.totalorder %v1323, 0
    %v2684 = vand.u32 %v1323, 2139095040
    %v2685 = vshrl.u32 %v2684, 23
    %v2686 = vsub.s32 %v2685, 127
    %v2687 = vand.u32 2147483647, %v1323
    %v2688 = vand.u32 %v2687, 8388607
    %v2689 = vor.u32 %v2688, 8388608
    %v2690 = vsub.s32 0, %v2689
    %v2691 = vadd.s32 %v2686, 1
    %vm2692 = vcmp.gt.s32.totalorder %v2691, 0
    %v2693 = vsel %vm2692, %v2691, 0
    %v2694 = vshrl.u32 %v2693, 5
    %v2695 = vand.u32 %v2693, 31
    %v2696 = vsub.s32 32, %v2695
    %v2697 = vshrl.u32 683565275, %v2696
    %v2698 = vshll.u32 683565275, %v2695
    %v2699 = vshrl.u32 2475754826, %v2696
    %v2700 = vor.u32 %v2698, %v2699
    %v2701 = vshll.u32 2475754826, %v2695
    %v2702 = vshrl.u32 2131351028, %v2696
    %v2703 = vor.u32 %v2701, %v2702
    %v2704 = vshll.u32 2131351028, %v2695
    %v2705 = vshrl.u32 2102212464, %v2696
    %v2706 = vor.u32 %v2704, %v2705
    %v2707 = vshll.u32 2102212464, %v2695
    %v2708 = vshrl.u32 920167782, %v2696
    %v2709 = vor.u32 %v2707, %v2708
    %v2710 = vshll.u32 920167782, %v2695
    %v2711 = vshrl.u32 1326507024, %v2696
    %v2712 = vor.u32 %v2710, %v2711
    %vm2713 = vcmp.lt.s32.totalorder %v2694, 1
    %vm2714 = vcmp.lt.s32.totalorder %v2694, 2
    %vm2715 = vcmp.lt.s32.totalorder %v2694, 3
    %vm2716 = vcmp.lt.s32.totalorder %v2694, 4
    %v2717 = vsel %vm2713, %v2697, %v2700
    %v2718 = vsel %vm2716, %v2706, 2102212464
    %v2719 = vsel %vm2715, %v2703, %v2718
    %v2720 = vsel %vm2714, %v2717, %v2719
    %v2721 = vsel %vm2713, %v2700, %v2703
    %v2722 = vsel %vm2716, %v2709, 920167782
    %v2723 = vsel %vm2715, %v2706, %v2722
    %v2724 = vsel %vm2714, %v2721, %v2723
    %v2725 = vsel %vm2713, %v2703, %v2706
    %v2726 = vsel %vm2716, %v2712, 1326507024
    %v2727 = vsel %vm2715, %v2709, %v2726
    %v2728 = vsel %vm2714, %v2725, %v2727
    %v2729 = vshll.u32 %v2689, 8
    %v2730 = vmul.u32.u64.compose %v2729, %v2728
    %v2731 = vextract.low.u32 %v2730
    %v2732 = vextract.high.u32 %v2730
    %v2733 = vmul.u32.u64.compose %v2729, %v2724
    %v2734 = vextract.low.u32 %v2733
    %v2735 = vextract.high.u32 %v2733
    %v2736 = vmul.u32 %v2729, %v2720
    %v2737 = vadd.s32 %v2732, %v2734
    %vm2738 = vc.u32 %v2732, %v2734
    %v2739 = vadd.s32 %v2735, 1
    %v2740 = vsel %vm2738, %v2739, %v2735
    %v2741 = vadd.s32 %v2736, %v2740
    %v2742 = vadd.s32 %v2741, 536870912
    %v2743 = vshrl.u32 %v2742, 30
    %v2744 = vshll.u32 %v2743, 30
    %v2745 = vsub.s32 %v2741, %v2744
    %vm2746 = vcmp.lt.s32.totalorder %v2745, 0
    %v2747 = vsub.s32 0, %v2745
    %v2748 = vsel %vm2746, %v2747, %v2745
    %v2749 = vclz %v2748
    %v2750 = vsub.s32 %v2749, 2
    %vm2751 = vcmp.gt.s32.totalorder 0, %v2750
    %v2752 = vsel %vm2751, 0, %v2750
    %v2753 = vsub.s32 32, %v2752
    %v2754 = vshll.u32 %v2745, %v2752
    %v2755 = vshrl.u32 %v2737, %v2753
    %v2756 = vor.u32 %v2754, %v2755
    %v2757 = vsub.s32 4294967266, %v2752
    %v2758 = vadd.s32 %v2757, 127
    %v2759 = vshll.u32 %v2758, 23
    %v2760 = vor.u32 4788187, %v2759
    %v2761 = vand.u32 2147483647, %v2760
    %v2763 = vcvt.s32.f32 %v2756
    %v2764 = vmul.f32 %v2763, %v2761
    %v2765 = vxor.u32 %v2764, 2147483648
    %v2766 = vsel %vm2683, %v2765, %v2764
    %v2767 = vsub.s32 4, %v2743
    %v2768 = vsel %vm2683, %v2767, %v2743
    %v2769 = vsel %vm2682, %v1323, %v2766
    %v2770 = vsel %vm2682, 0, %v2768
    %v2771 = vcosq.f32.pop %v2769
    %v2772 = vsinq.f32.pop %v2769
    %vm2773 = vweird.f32 %v1323
    %v2774 = vand.u32 %v2770, 3
    %vm2775 = vcmp.lt.s32.totalorder %v2774, 2
    %vm2776 = vcmp.eq.s32.totalorder %v2774, 0
    %v2777 = vxor.u32 %v2772, 2147483648
    %v2778 = vsel %vm2776, %v2771, %v2777
    %vm2779 = vcmp.eq.s32.totalorder %v2774, 2
    %v2780 = vxor.u32 %v2771, 2147483648
    %v2781 = vsel %vm2779, %v2780, %v2772
    %v2782 = vsel %vm2775, %v2778, %v2781
    %v2783 = vsel %vm2773, nan, %v2782
    %v2784 = vand.u32 2147483647, %v1324
    %vm2785 = vcmp.le.f32.partialorder %v2784, 0.7853982
    %vm2786 = vcmp.lt.s32.totalorder %v1324, 0
    %v2787 = vand.u32 %v1324, 2139095040
    %v2788 = vshrl.u32 %v2787, 23
    %v2789 = vsub.s32 %v2788, 127
    %v2790 = vand.u32 2147483647, %v1324
    %v2791 = vand.u32 %v2790, 8388607
    %v2792 = vor.u32 %v2791, 8388608
    %v2793 = vsub.s32 0, %v2792
    %v2794 = vadd.s32 %v2789, 1
    %vm2795 = vcmp.gt.s32.totalorder %v2794, 0
    %v2796 = vsel %vm2795, %v2794, 0
    %v2797 = vshrl.u32 %v2796, 5
    %v2798 = vand.u32 %v2796, 31
    %v2799 = vsub.s32 32, %v2798
    %v2800 = vshrl.u32 683565275, %v2799
    %v2801 = vshll.u32 683565275, %v2798
    %v2802 = vshrl.u32 2475754826, %v2799
    %v2803 = vor.u32 %v2801, %v2802
    %v2804 = vshll.u32 2475754826, %v2798
    %v2805 = vshrl.u32 2131351028, %v2799
    %v2806 = vor.u32 %v2804, %v2805
    %v2807 = vshll.u32 2131351028, %v2798
    %v2808 = vshrl.u32 2102212464, %v2799
    %v2809 = vor.u32 %v2807, %v2808
    %v2810 = vshll.u32 2102212464, %v2798
    %v2811 = vshrl.u32 920167782, %v2799
    %v2812 = vor.u32 %v2810, %v2811
    %v2813 = vshll.u32 920167782, %v2798
    %v2814 = vshrl.u32 1326507024, %v2799
    %v2815 = vor.u32 %v2813, %v2814
    %vm2816 = vcmp.lt.s32.totalorder %v2797, 1
    %vm2817 = vcmp.lt.s32.totalorder %v2797, 2
    %vm2818 = vcmp.lt.s32.totalorder %v2797, 3
    %vm2819 = vcmp.lt.s32.totalorder %v2797, 4
    %v2820 = vsel %vm2816, %v2800, %v2803
    %v2821 = vsel %vm2819, %v2809, 2102212464
    %v2822 = vsel %vm2818, %v2806, %v2821
    %v2823 = vsel %vm2817, %v2820, %v2822
    %v2824 = vsel %vm2816, %v2803, %v2806
    %v2825 = vsel %vm2819, %v2812, 920167782
    %v2826 = vsel %vm2818, %v2809, %v2825
    %v2827 = vsel %vm2817, %v2824, %v2826
    %v2828 = vsel %vm2816, %v2806, %v2809
    %v2829 = vsel %vm2819, %v2815, 1326507024
    %v2830 = vsel %vm2818, %v2812, %v2829
    %v2831 = vsel %vm2817, %v2828, %v2830
    %v2832 = vshll.u32 %v2792, 8
    %v2833 = vmul.u32.u64.compose %v2832, %v2831
    %v2834 = vextract.low.u32 %v2833
    %v2835 = vextract.high.u32 %v2833
    %v2836 = vmul.u32.u64.compose %v2832, %v2827
    %v2837 = vextract.low.u32 %v2836
    %v2838 = vextract.high.u32 %v2836
    %v2839 = vmul.u32 %v2832, %v2823
    %v2840 = vadd.s32 %v2835, %v2837
    %vm2841 = vc.u32 %v2835, %v2837
    %v2842 = vadd.s32 %v2838, 1
    %v2843 = vsel %vm2841, %v2842, %v2838
    %v2844 = vadd.s32 %v2839, %v2843
    %v2845 = vadd.s32 %v2844, 536870912
    %v2846 = vshrl.u32 %v2845, 30
    %v2847 = vshll.u32 %v2846, 30
    %v2848 = vsub.s32 %v2844, %v2847
    %vm2849 = vcmp.lt.s32.totalorder %v2848, 0
    %v2850 = vsub.s32 0, %v2848
    %v2851 = vsel %vm2849, %v2850, %v2848
    %v2852 = vclz %v2851
    %v2853 = vsub.s32 %v2852, 2
    %vm2854 = vcmp.gt.s32.totalorder 0, %v2853
    %v2855 = vsel %vm2854, 0, %v2853
    %v2856 = vsub.s32 32, %v2855
    %v2857 = vshll.u32 %v2848, %v2855
    %v2858 = vshrl.u32 %v2840, %v2856
    %v2859 = vor.u32 %v2857, %v2858
    %v2860 = vsub.s32 4294967266, %v2855
    %v2861 = vadd.s32 %v2860, 127
    %v2862 = vshll.u32 %v2861, 23
    %v2863 = vor.u32 4788187, %v2862
    %v2864 = vand.u32 2147483647, %v2863
    %v2866 = vcvt.s32.f32 %v2859
    %v2867 = vmul.f32 %v2866, %v2864
    %v2868 = vxor.u32 %v2867, 2147483648
    %v2869 = vsel %vm2786, %v2868, %v2867
    %v2870 = vsub.s32 4, %v2846
    %v2871 = vsel %vm2786, %v2870, %v2846
    %v2872 = vsel %vm2785, %v1324, %v2869
    %v2873 = vsel %vm2785, 0, %v2871
    %v2874 = vcosq.f32.pop %v2872
    %v2875 = vsinq.f32.pop %v2872
    %vm2876 = vweird.f32 %v1324
    %v2877 = vand.u32 %v2873, 3
    %vm2878 = vcmp.lt.s32.totalorder %v2877, 2
    %vm2879 = vcmp.eq.s32.totalorder %v2877, 0
    %v2880 = vxor.u32 %v2875, 2147483648
    %v2881 = vsel %vm2879, %v2874, %v2880
    %vm2882 = vcmp.eq.s32.totalorder %v2877, 2
    %v2883 = vxor.u32 %v2874, 2147483648
    %v2884 = vsel %vm2882, %v2883, %v2875
    %v2885 = vsel %vm2878, %v2881, %v2884
    %v2886 = vsel %vm2876, nan, %v2885
    %v2887 = vand.u32 2147483647, %v1325
    %vm2888 = vcmp.le.f32.partialorder %v2887, 0.7853982
    %vm2889 = vcmp.lt.s32.totalorder %v1325, 0
    %v2890 = vand.u32 %v1325, 2139095040
    %v2891 = vshrl.u32 %v2890, 23
    %v2892 = vsub.s32 %v2891, 127
    %v2893 = vand.u32 2147483647, %v1325
    %v2894 = vand.u32 %v2893, 8388607
    %v2895 = vor.u32 %v2894, 8388608
    %v2896 = vsub.s32 0, %v2895
    %v2897 = vadd.s32 %v2892, 1
    %vm2898 = vcmp.gt.s32.totalorder %v2897, 0
    %v2899 = vsel %vm2898, %v2897, 0
    %v2900 = vshrl.u32 %v2899, 5
    %v2901 = vand.u32 %v2899, 31
    %v2902 = vsub.s32 32, %v2901
    %v2903 = vshrl.u32 683565275, %v2902
    %v2904 = vshll.u32 683565275, %v2901
    %v2905 = vshrl.u32 2475754826, %v2902
    %v2906 = vor.u32 %v2904, %v2905
    %v2907 = vshll.u32 2475754826, %v2901
    %v2908 = vshrl.u32 2131351028, %v2902
    %v2909 = vor.u32 %v2907, %v2908
    %v2910 = vshll.u32 2131351028, %v2901
    %v2911 = vshrl.u32 2102212464, %v2902
    %v2912 = vor.u32 %v2910, %v2911
    %v2913 = vshll.u32 2102212464, %v2901
    %v2914 = vshrl.u32 920167782, %v2902
    %v2915 = vor.u32 %v2913, %v2914
    %v2916 = vshll.u32 920167782, %v2901
    %v2917 = vshrl.u32 1326507024, %v2902
    %v2918 = vor.u32 %v2916, %v2917
    %vm2919 = vcmp.lt.s32.totalorder %v2900, 1
    %vm2920 = vcmp.lt.s32.totalorder %v2900, 2
    %vm2921 = vcmp.lt.s32.totalorder %v2900, 3
    %vm2922 = vcmp.lt.s32.totalorder %v2900, 4
    %v2923 = vsel %vm2919, %v2903, %v2906
    %v2924 = vsel %vm2922, %v2912, 2102212464
    %v2925 = vsel %vm2921, %v2909, %v2924
    %v2926 = vsel %vm2920, %v2923, %v2925
    %v2927 = vsel %vm2919, %v2906, %v2909
    %v2928 = vsel %vm2922, %v2915, 920167782
    %v2929 = vsel %vm2921, %v2912, %v2928
    %v2930 = vsel %vm2920, %v2927, %v2929
    %v2931 = vsel %vm2919, %v2909, %v2912
    %v2932 = vsel %vm2922, %v2918, 1326507024
    %v2933 = vsel %vm2921, %v2915, %v2932
    %v2934 = vsel %vm2920, %v2931, %v2933
    %v2935 = vshll.u32 %v2895, 8
    %v2936 = vmul.u32.u64.compose %v2935, %v2934
    %v2937 = vextract.low.u32 %v2936
    %v2938 = vextract.high.u32 %v2936
    %v2939 = vmul.u32.u64.compose %v2935, %v2930
    %v2940 = vextract.low.u32 %v2939
    %v2941 = vextract.high.u32 %v2939
    %v2942 = vmul.u32 %v2935, %v2926
    %v2943 = vadd.s32 %v2938, %v2940
    %vm2944 = vc.u32 %v2938, %v2940
    %v2945 = vadd.s32 %v2941, 1
    %v2946 = vsel %vm2944, %v2945, %v2941
    %v2947 = vadd.s32 %v2942, %v2946
    %v2948 = vadd.s32 %v2947, 536870912
    %v2949 = vshrl.u32 %v2948, 30
    %v2950 = vshll.u32 %v2949, 30
    %v2951 = vsub.s32 %v2947, %v2950
    %vm2952 = vcmp.lt.s32.totalorder %v2951, 0
    %v2953 = vsub.s32 0, %v2951
    %v2954 = vsel %vm2952, %v2953, %v2951
    %v2955 = vclz %v2954
    %v2956 = vsub.s32 %v2955, 2
    %vm2957 = vcmp.gt.s32.totalorder 0, %v2956
    %v2958 = vsel %vm2957, 0, %v2956
    %v2959 = vsub.s32 32, %v2958
    %v2960 = vshll.u32 %v2951, %v2958
    %v2961 = vshrl.u32 %v2943, %v2959
    %v2962 = vor.u32 %v2960, %v2961
    %v2963 = vsub.s32 4294967266, %v2958
    %v2964 = vadd.s32 %v2963, 127
    %v2965 = vshll.u32 %v2964, 23
    %v2966 = vor.u32 4788187, %v2965
    %v2967 = vand.u32 2147483647, %v2966
    %v2969 = vcvt.s32.f32 %v2962
    %v2970 = vmul.f32 %v2969, %v2967
    %v2971 = vxor.u32 %v2970, 2147483648
    %v2972 = vsel %vm2889, %v2971, %v2970
    %v2973 = vsub.s32 4, %v2949
    %v2974 = vsel %vm2889, %v2973, %v2949
    %v2975 = vsel %vm2888, %v1325, %v2972
    %v2976 = vsel %vm2888, 0, %v2974
    %v2977 = vcosq.f32.pop %v2975
    %v2978 = vsinq.f32.pop %v2975
    %vm2979 = vweird.f32 %v1325
    %v2980 = vand.u32 %v2976, 3
    %vm2981 = vcmp.lt.s32.totalorder %v2980, 2
    %vm2982 = vcmp.eq.s32.totalorder %v2980, 0
    %v2983 = vxor.u32 %v2978, 2147483648
    %v2984 = vsel %vm2982, %v2977, %v2983
    %vm2985 = vcmp.eq.s32.totalorder %v2980, 2
    %v2986 = vxor.u32 %v2977, 2147483648
    %v2987 = vsel %vm2985, %v2986, %v2978
    %v2988 = vsel %vm2981, %v2984, %v2987
    %v2989 = vsel %vm2979, nan, %v2988
    %v2990 = vand.u32 2147483647, %v1326
    %vm2991 = vcmp.le.f32.partialorder %v2990, 0.7853982
    %vm2992 = vcmp.lt.s32.totalorder %v1326, 0
    %v2993 = vand.u32 %v1326, 2139095040
    %v2994 = vshrl.u32 %v2993, 23
    %v2995 = vsub.s32 %v2994, 127
    %v2996 = vand.u32 2147483647, %v1326
    %v2997 = vand.u32 %v2996, 8388607
    %v2998 = vor.u32 %v2997, 8388608
    %v2999 = vsub.s32 0, %v2998
    %v3000 = vadd.s32 %v2995, 1
    %vm3001 = vcmp.gt.s32.totalorder %v3000, 0
    %v3002 = vsel %vm3001, %v3000, 0
    %v3003 = vshrl.u32 %v3002, 5
    %v3004 = vand.u32 %v3002, 31
    %v3005 = vsub.s32 32, %v3004
    %v3006 = vshrl.u32 683565275, %v3005
    %v3007 = vshll.u32 683565275, %v3004
    %v3008 = vshrl.u32 2475754826, %v3005
    %v3009 = vor.u32 %v3007, %v3008
    %v3010 = vshll.u32 2475754826, %v3004
    %v3011 = vshrl.u32 2131351028, %v3005
    %v3012 = vor.u32 %v3010, %v3011
    %v3013 = vshll.u32 2131351028, %v3004
    %v3014 = vshrl.u32 2102212464, %v3005
    %v3015 = vor.u32 %v3013, %v3014
    %v3016 = vshll.u32 2102212464, %v3004
    %v3017 = vshrl.u32 920167782, %v3005
    %v3018 = vor.u32 %v3016, %v3017
    %v3019 = vshll.u32 920167782, %v3004
    %v3020 = vshrl.u32 1326507024, %v3005
    %v3021 = vor.u32 %v3019, %v3020
    %vm3022 = vcmp.lt.s32.totalorder %v3003, 1
    %vm3023 = vcmp.lt.s32.totalorder %v3003, 2
    %vm3024 = vcmp.lt.s32.totalorder %v3003, 3
    %vm3025 = vcmp.lt.s32.totalorder %v3003, 4
    %v3026 = vsel %vm3022, %v3006, %v3009
    %v3027 = vsel %vm3025, %v3015, 2102212464
    %v3028 = vsel %vm3024, %v3012, %v3027
    %v3029 = vsel %vm3023, %v3026, %v3028
    %v3030 = vsel %vm3022, %v3009, %v3012
    %v3031 = vsel %vm3025, %v3018, 920167782
    %v3032 = vsel %vm3024, %v3015, %v3031
    %v3033 = vsel %vm3023, %v3030, %v3032
    %v3034 = vsel %vm3022, %v3012, %v3015
    %v3035 = vsel %vm3025, %v3021, 1326507024
    %v3036 = vsel %vm3024, %v3018, %v3035
    %v3037 = vsel %vm3023, %v3034, %v3036
    %v3038 = vshll.u32 %v2998, 8
    %v3039 = vmul.u32.u64.compose %v3038, %v3037
    %v3040 = vextract.low.u32 %v3039
    %v3041 = vextract.high.u32 %v3039
    %v3042 = vmul.u32.u64.compose %v3038, %v3033
    %v3043 = vextract.low.u32 %v3042
    %v3044 = vextract.high.u32 %v3042
    %v3045 = vmul.u32 %v3038, %v3029
    %v3046 = vadd.s32 %v3041, %v3043
    %vm3047 = vc.u32 %v3041, %v3043
    %v3048 = vadd.s32 %v3044, 1
    %v3049 = vsel %vm3047, %v3048, %v3044
    %v3050 = vadd.s32 %v3045, %v3049
    %v3051 = vadd.s32 %v3050, 536870912
    %v3052 = vshrl.u32 %v3051, 30
    %v3053 = vshll.u32 %v3052, 30
    %v3054 = vsub.s32 %v3050, %v3053
    %vm3055 = vcmp.lt.s32.totalorder %v3054, 0
    %v3056 = vsub.s32 0, %v3054
    %v3057 = vsel %vm3055, %v3056, %v3054
    %v3058 = vclz %v3057
    %v3059 = vsub.s32 %v3058, 2
    %vm3060 = vcmp.gt.s32.totalorder 0, %v3059
    %v3061 = vsel %vm3060, 0, %v3059
    %v3062 = vsub.s32 32, %v3061
    %v3063 = vshll.u32 %v3054, %v3061
    %v3064 = vshrl.u32 %v3046, %v3062
    %v3065 = vor.u32 %v3063, %v3064
    %v3066 = vsub.s32 4294967266, %v3061
    %v3067 = vadd.s32 %v3066, 127
    %v3068 = vshll.u32 %v3067, 23
    %v3069 = vor.u32 4788187, %v3068
    %v3070 = vand.u32 2147483647, %v3069
    %v3072 = vcvt.s32.f32 %v3065
    %v3073 = vmul.f32 %v3072, %v3070
    %v3074 = vxor.u32 %v3073, 2147483648
    %v3075 = vsel %vm2992, %v3074, %v3073
    %v3076 = vsub.s32 4, %v3052
    %v3077 = vsel %vm2992, %v3076, %v3052
    %v3078 = vsel %vm2991, %v1326, %v3075
    %v3079 = vsel %vm2991, 0, %v3077
    %v3080 = vcosq.f32.pop %v3078
    %v3081 = vsinq.f32.pop %v3078
    %vm3082 = vweird.f32 %v1326
    %v3083 = vand.u32 %v3079, 3
    %vm3084 = vcmp.lt.s32.totalorder %v3083, 2
    %vm3085 = vcmp.eq.s32.totalorder %v3083, 0
    %v3086 = vxor.u32 %v3081, 2147483648
    %v3087 = vsel %vm3085, %v3080, %v3086
    %vm3088 = vcmp.eq.s32.totalorder %v3083, 2
    %v3089 = vxor.u32 %v3080, 2147483648
    %v3090 = vsel %vm3088, %v3089, %v3081
    %v3091 = vsel %vm3084, %v3087, %v3090
    %v3092 = vsel %vm3082, nan, %v3091
    %v3093 = vand.u32 2147483647, %v1327
    %vm3094 = vcmp.le.f32.partialorder %v3093, 0.7853982
    %vm3095 = vcmp.lt.s32.totalorder %v1327, 0
    %v3096 = vand.u32 %v1327, 2139095040
    %v3097 = vshrl.u32 %v3096, 23
    %v3098 = vsub.s32 %v3097, 127
    %v3099 = vand.u32 2147483647, %v1327
    %v3100 = vand.u32 %v3099, 8388607
    %v3101 = vor.u32 %v3100, 8388608
    %v3102 = vsub.s32 0, %v3101
    %v3103 = vadd.s32 %v3098, 1
    %vm3104 = vcmp.gt.s32.totalorder %v3103, 0
    %v3105 = vsel %vm3104, %v3103, 0
    %v3106 = vshrl.u32 %v3105, 5
    %v3107 = vand.u32 %v3105, 31
    %v3108 = vsub.s32 32, %v3107
    %v3109 = vshrl.u32 683565275, %v3108
    %v3110 = vshll.u32 683565275, %v3107
    %v3111 = vshrl.u32 2475754826, %v3108
    %v3112 = vor.u32 %v3110, %v3111
    %v3113 = vshll.u32 2475754826, %v3107
    %v3114 = vshrl.u32 2131351028, %v3108
    %v3115 = vor.u32 %v3113, %v3114
    %v3116 = vshll.u32 2131351028, %v3107
    %v3117 = vshrl.u32 2102212464, %v3108
    %v3118 = vor.u32 %v3116, %v3117
    %v3119 = vshll.u32 2102212464, %v3107
    %v3120 = vshrl.u32 920167782, %v3108
    %v3121 = vor.u32 %v3119, %v3120
    %v3122 = vshll.u32 920167782, %v3107
    %v3123 = vshrl.u32 1326507024, %v3108
    %v3124 = vor.u32 %v3122, %v3123
    %vm3125 = vcmp.lt.s32.totalorder %v3106, 1
    %vm3126 = vcmp.lt.s32.totalorder %v3106, 2
    %vm3127 = vcmp.lt.s32.totalorder %v3106, 3
    %vm3128 = vcmp.lt.s32.totalorder %v3106, 4
    %v3129 = vsel %vm3125, %v3109, %v3112
    %v3130 = vsel %vm3128, %v3118, 2102212464
    %v3131 = vsel %vm3127, %v3115, %v3130
    %v3132 = vsel %vm3126, %v3129, %v3131
    %v3133 = vsel %vm3125, %v3112, %v3115
    %v3134 = vsel %vm3128, %v3121, 920167782
    %v3135 = vsel %vm3127, %v3118, %v3134
    %v3136 = vsel %vm3126, %v3133, %v3135
    %v3137 = vsel %vm3125, %v3115, %v3118
    %v3138 = vsel %vm3128, %v3124, 1326507024
    %v3139 = vsel %vm3127, %v3121, %v3138
    %v3140 = vsel %vm3126, %v3137, %v3139
    %v3141 = vshll.u32 %v3101, 8
    %v3142 = vmul.u32.u64.compose %v3141, %v3140
    %v3143 = vextract.low.u32 %v3142
    %v3144 = vextract.high.u32 %v3142
    %v3145 = vmul.u32.u64.compose %v3141, %v3136
    %v3146 = vextract.low.u32 %v3145
    %v3147 = vextract.high.u32 %v3145
    %v3148 = vmul.u32 %v3141, %v3132
    %v3149 = vadd.s32 %v3144, %v3146
    %vm3150 = vc.u32 %v3144, %v3146
    %v3151 = vadd.s32 %v3147, 1
    %v3152 = vsel %vm3150, %v3151, %v3147
    %v3153 = vadd.s32 %v3148, %v3152
    %v3154 = vadd.s32 %v3153, 536870912
    %v3155 = vshrl.u32 %v3154, 30
    %v3156 = vshll.u32 %v3155, 30
    %v3157 = vsub.s32 %v3153, %v3156
    %vm3158 = vcmp.lt.s32.totalorder %v3157, 0
    %v3159 = vsub.s32 0, %v3157
    %v3160 = vsel %vm3158, %v3159, %v3157
    %v3161 = vclz %v3160
    %v3162 = vsub.s32 %v3161, 2
    %vm3163 = vcmp.gt.s32.totalorder 0, %v3162
    %v3164 = vsel %vm3163, 0, %v3162
    %v3165 = vsub.s32 32, %v3164
    %v3166 = vshll.u32 %v3157, %v3164
    %v3167 = vshrl.u32 %v3149, %v3165
    %v3168 = vor.u32 %v3166, %v3167
    %v3169 = vsub.s32 4294967266, %v3164
    %v3170 = vadd.s32 %v3169, 127
    %v3171 = vshll.u32 %v3170, 23
    %v3172 = vor.u32 4788187, %v3171
    %v3173 = vand.u32 2147483647, %v3172
    %v3175 = vcvt.s32.f32 %v3168
    %v3176 = vmul.f32 %v3175, %v3173
    %v3177 = vxor.u32 %v3176, 2147483648
    %v3178 = vsel %vm3095, %v3177, %v3176
    %v3179 = vsub.s32 4, %v3155
    %v3180 = vsel %vm3095, %v3179, %v3155
    %v3181 = vsel %vm3094, %v1327, %v3178
    %v3182 = vsel %vm3094, 0, %v3180
    %v3183 = vcosq.f32.pop %v3181
    %v3184 = vsinq.f32.pop %v3181
    %vm3185 = vweird.f32 %v1327
    %v3186 = vand.u32 %v3182, 3
    %vm3187 = vcmp.lt.s32.totalorder %v3186, 2
    %vm3188 = vcmp.eq.s32.totalorder %v3186, 0
    %v3189 = vxor.u32 %v3184, 2147483648
    %v3190 = vsel %vm3188, %v3183, %v3189
    %vm3191 = vcmp.eq.s32.totalorder %v3186, 2
    %v3192 = vxor.u32 %v3183, 2147483648
    %v3193 = vsel %vm3191, %v3192, %v3184
    %v3194 = vsel %vm3187, %v3190, %v3193
    %v3195 = vsel %vm3185, nan, %v3194
    %v3196 = vand.u32 2147483647, %v1328
    %vm3197 = vcmp.le.f32.partialorder %v3196, 0.7853982
    %vm3198 = vcmp.lt.s32.totalorder %v1328, 0
    %v3199 = vand.u32 %v1328, 2139095040
    %v3200 = vshrl.u32 %v3199, 23
    %v3201 = vsub.s32 %v3200, 127
    %v3202 = vand.u32 2147483647, %v1328
    %v3203 = vand.u32 %v3202, 8388607
    %v3204 = vor.u32 %v3203, 8388608
    %v3205 = vsub.s32 0, %v3204
    %v3206 = vadd.s32 %v3201, 1
    %vm3207 = vcmp.gt.s32.totalorder %v3206, 0
    %v3208 = vsel %vm3207, %v3206, 0
    %v3209 = vshrl.u32 %v3208, 5
    %v3210 = vand.u32 %v3208, 31
    %v3211 = vsub.s32 32, %v3210
    %v3212 = vshrl.u32 683565275, %v3211
    %v3213 = vshll.u32 683565275, %v3210
    %v3214 = vshrl.u32 2475754826, %v3211
    %v3215 = vor.u32 %v3213, %v3214
    %v3216 = vshll.u32 2475754826, %v3210
    %v3217 = vshrl.u32 2131351028, %v3211
    %v3218 = vor.u32 %v3216, %v3217
    %v3219 = vshll.u32 2131351028, %v3210
    %v3220 = vshrl.u32 2102212464, %v3211
    %v3221 = vor.u32 %v3219, %v3220
    %v3222 = vshll.u32 2102212464, %v3210
    %v3223 = vshrl.u32 920167782, %v3211
    %v3224 = vor.u32 %v3222, %v3223
    %v3225 = vshll.u32 920167782, %v3210
    %v3226 = vshrl.u32 1326507024, %v3211
    %v3227 = vor.u32 %v3225, %v3226
    %vm3228 = vcmp.lt.s32.totalorder %v3209, 1
    %vm3229 = vcmp.lt.s32.totalorder %v3209, 2
    %vm3230 = vcmp.lt.s32.totalorder %v3209, 3
    %vm3231 = vcmp.lt.s32.totalorder %v3209, 4
    %v3232 = vsel %vm3228, %v3212, %v3215
    %v3233 = vsel %vm3231, %v3221, 2102212464
    %v3234 = vsel %vm3230, %v3218, %v3233
    %v3235 = vsel %vm3229, %v3232, %v3234
    %v3236 = vsel %vm3228, %v3215, %v3218
    %v3237 = vsel %vm3231, %v3224, 920167782
    %v3238 = vsel %vm3230, %v3221, %v3237
    %v3239 = vsel %vm3229, %v3236, %v3238
    %v3240 = vsel %vm3228, %v3218, %v3221
    %v3241 = vsel %vm3231, %v3227, 1326507024
    %v3242 = vsel %vm3230, %v3224, %v3241
    %v3243 = vsel %vm3229, %v3240, %v3242
    %v3244 = vshll.u32 %v3204, 8
    %v3245 = vmul.u32.u64.compose %v3244, %v3243
    %v3246 = vextract.low.u32 %v3245
    %v3247 = vextract.high.u32 %v3245
    %v3248 = vmul.u32.u64.compose %v3244, %v3239
    %v3249 = vextract.low.u32 %v3248
    %v3250 = vextract.high.u32 %v3248
    %v3251 = vmul.u32 %v3244, %v3235
    %v3252 = vadd.s32 %v3247, %v3249
    %vm3253 = vc.u32 %v3247, %v3249
    %v3254 = vadd.s32 %v3250, 1
    %v3255 = vsel %vm3253, %v3254, %v3250
    %v3256 = vadd.s32 %v3251, %v3255
    %v3257 = vadd.s32 %v3256, 536870912
    %v3258 = vshrl.u32 %v3257, 30
    %v3259 = vshll.u32 %v3258, 30
    %v3260 = vsub.s32 %v3256, %v3259
    %vm3261 = vcmp.lt.s32.totalorder %v3260, 0
    %v3262 = vsub.s32 0, %v3260
    %v3263 = vsel %vm3261, %v3262, %v3260
    %v3264 = vclz %v3263
    %v3265 = vsub.s32 %v3264, 2
    %vm3266 = vcmp.gt.s32.totalorder 0, %v3265
    %v3267 = vsel %vm3266, 0, %v3265
    %v3268 = vsub.s32 32, %v3267
    %v3269 = vshll.u32 %v3260, %v3267
    %v3270 = vshrl.u32 %v3252, %v3268
    %v3271 = vor.u32 %v3269, %v3270
    %v3272 = vsub.s32 4294967266, %v3267
    %v3273 = vadd.s32 %v3272, 127
    %v3274 = vshll.u32 %v3273, 23
    %v3275 = vor.u32 4788187, %v3274
    %v3276 = vand.u32 2147483647, %v3275
    %v3278 = vcvt.s32.f32 %v3271
    %v3279 = vmul.f32 %v3278, %v3276
    %v3280 = vxor.u32 %v3279, 2147483648
    %v3281 = vsel %vm3198, %v3280, %v3279
    %v3282 = vsub.s32 4, %v3258
    %v3283 = vsel %vm3198, %v3282, %v3258
    %v3284 = vsel %vm3197, %v1328, %v3281
    %v3285 = vsel %vm3197, 0, %v3283
    %v3286 = vcosq.f32.pop %v3284
    %v3287 = vsinq.f32.pop %v3284
    %vm3288 = vweird.f32 %v1328
    %v3289 = vand.u32 %v3285, 3
    %vm3290 = vcmp.lt.s32.totalorder %v3289, 2
    %vm3291 = vcmp.eq.s32.totalorder %v3289, 0
    %v3292 = vxor.u32 %v3287, 2147483648
    %v3293 = vsel %vm3291, %v3286, %v3292
    %vm3294 = vcmp.eq.s32.totalorder %v3289, 2
    %v3295 = vxor.u32 %v3286, 2147483648
    %v3296 = vsel %vm3294, %v3295, %v3287
    %v3297 = vsel %vm3290, %v3293, %v3296
    %v3298 = vsel %vm3288, nan, %v3297
    %v3299 = vand.u32 2147483647, %v1329
    %vm3300 = vcmp.le.f32.partialorder %v3299, 0.7853982
    %vm3301 = vcmp.lt.s32.totalorder %v1329, 0
    %v3302 = vand.u32 %v1329, 2139095040
    %v3303 = vshrl.u32 %v3302, 23
    %v3304 = vsub.s32 %v3303, 127
    %v3305 = vand.u32 2147483647, %v1329
    %v3306 = vand.u32 %v3305, 8388607
    %v3307 = vor.u32 %v3306, 8388608
    %v3308 = vsub.s32 0, %v3307
    %v3309 = vadd.s32 %v3304, 1
    %vm3310 = vcmp.gt.s32.totalorder %v3309, 0
    %v3311 = vsel %vm3310, %v3309, 0
    %v3312 = vshrl.u32 %v3311, 5
    %v3313 = vand.u32 %v3311, 31
    %v3314 = vsub.s32 32, %v3313
    %v3315 = vshrl.u32 683565275, %v3314
    %v3316 = vshll.u32 683565275, %v3313
    %v3317 = vshrl.u32 2475754826, %v3314
    %v3318 = vor.u32 %v3316, %v3317
    %v3319 = vshll.u32 2475754826, %v3313
    %v3320 = vshrl.u32 2131351028, %v3314
    %v3321 = vor.u32 %v3319, %v3320
    %v3322 = vshll.u32 2131351028, %v3313
    %v3323 = vshrl.u32 2102212464, %v3314
    %v3324 = vor.u32 %v3322, %v3323
    %v3325 = vshll.u32 2102212464, %v3313
    %v3326 = vshrl.u32 920167782, %v3314
    %v3327 = vor.u32 %v3325, %v3326
    %v3328 = vshll.u32 920167782, %v3313
    %v3329 = vshrl.u32 1326507024, %v3314
    %v3330 = vor.u32 %v3328, %v3329
    %vm3331 = vcmp.lt.s32.totalorder %v3312, 1
    %vm3332 = vcmp.lt.s32.totalorder %v3312, 2
    %vm3333 = vcmp.lt.s32.totalorder %v3312, 3
    %vm3334 = vcmp.lt.s32.totalorder %v3312, 4
    %v3335 = vsel %vm3331, %v3315, %v3318
    %v3336 = vsel %vm3334, %v3324, 2102212464
    %v3337 = vsel %vm3333, %v3321, %v3336
    %v3338 = vsel %vm3332, %v3335, %v3337
    %v3339 = vsel %vm3331, %v3318, %v3321
    %v3340 = vsel %vm3334, %v3327, 920167782
    %v3341 = vsel %vm3333, %v3324, %v3340
    %v3342 = vsel %vm3332, %v3339, %v3341
    %v3343 = vsel %vm3331, %v3321, %v3324
    %v3344 = vsel %vm3334, %v3330, 1326507024
    %v3345 = vsel %vm3333, %v3327, %v3344
    %v3346 = vsel %vm3332, %v3343, %v3345
    %v3347 = vshll.u32 %v3307, 8
    %v3348 = vmul.u32.u64.compose %v3347, %v3346
    %v3349 = vextract.low.u32 %v3348
    %v3350 = vextract.high.u32 %v3348
    %v3351 = vmul.u32.u64.compose %v3347, %v3342
    %v3352 = vextract.low.u32 %v3351
    %v3353 = vextract.high.u32 %v3351
    %v3354 = vmul.u32 %v3347, %v3338
    %v3355 = vadd.s32 %v3350, %v3352
    %vm3356 = vc.u32 %v3350, %v3352
    %v3357 = vadd.s32 %v3353, 1
    %v3358 = vsel %vm3356, %v3357, %v3353
    %v3359 = vadd.s32 %v3354, %v3358
    %v3360 = vadd.s32 %v3359, 536870912
    %v3361 = vshrl.u32 %v3360, 30
    %v3362 = vshll.u32 %v3361, 30
    %v3363 = vsub.s32 %v3359, %v3362
    %vm3364 = vcmp.lt.s32.totalorder %v3363, 0
    %v3365 = vsub.s32 0, %v3363
    %v3366 = vsel %vm3364, %v3365, %v3363
    %v3367 = vclz %v3366
    %v3368 = vsub.s32 %v3367, 2
    %vm3369 = vcmp.gt.s32.totalorder 0, %v3368
    %v3370 = vsel %vm3369, 0, %v3368
    %v3371 = vsub.s32 32, %v3370
    %v3372 = vshll.u32 %v3363, %v3370
    %v3373 = vshrl.u32 %v3355, %v3371
    %v3374 = vor.u32 %v3372, %v3373
    %v3375 = vsub.s32 4294967266, %v3370
    %v3376 = vadd.s32 %v3375, 127
    %v3377 = vshll.u32 %v3376, 23
    %v3378 = vor.u32 4788187, %v3377
    %v3379 = vand.u32 2147483647, %v3378
    %v3381 = vcvt.s32.f32 %v3374
    %v3382 = vmul.f32 %v3381, %v3379
    %v3383 = vxor.u32 %v3382, 2147483648
    %v3384 = vsel %vm3301, %v3383, %v3382
    %v3385 = vsub.s32 4, %v3361
    %v3386 = vsel %vm3301, %v3385, %v3361
    %v3387 = vsel %vm3300, %v1329, %v3384
    %v3388 = vsel %vm3300, 0, %v3386
    %v3389 = vcosq.f32.pop %v3387
    %v3390 = vsinq.f32.pop %v3387
    %vm3391 = vweird.f32 %v1329
    %v3392 = vand.u32 %v3388, 3
    %vm3393 = vcmp.lt.s32.totalorder %v3392, 2
    %vm3394 = vcmp.eq.s32.totalorder %v3392, 0
    %v3395 = vxor.u32 %v3390, 2147483648
    %v3396 = vsel %vm3394, %v3389, %v3395
    %vm3397 = vcmp.eq.s32.totalorder %v3392, 2
    %v3398 = vxor.u32 %v3389, 2147483648
    %v3399 = vsel %vm3397, %v3398, %v3390
    %v3400 = vsel %vm3393, %v3396, %v3399
    %v3401 = vsel %vm3391, nan, %v3400
    %v3402 = vand.u32 2147483647, %v1330
    %vm3403 = vcmp.le.f32.partialorder %v3402, 0.7853982
    %vm3404 = vcmp.lt.s32.totalorder %v1330, 0
    %v3405 = vand.u32 %v1330, 2139095040
    %v3406 = vshrl.u32 %v3405, 23
    %v3407 = vsub.s32 %v3406, 127
    %v3408 = vand.u32 2147483647, %v1330
    %v3409 = vand.u32 %v3408, 8388607
    %v3410 = vor.u32 %v3409, 8388608
    %v3411 = vsub.s32 0, %v3410
    %v3412 = vadd.s32 %v3407, 1
    %vm3413 = vcmp.gt.s32.totalorder %v3412, 0
    %v3414 = vsel %vm3413, %v3412, 0
    %v3415 = vshrl.u32 %v3414, 5
    %v3416 = vand.u32 %v3414, 31
    %v3417 = vsub.s32 32, %v3416
    %v3418 = vshrl.u32 683565275, %v3417
    %v3419 = vshll.u32 683565275, %v3416
    %v3420 = vshrl.u32 2475754826, %v3417
    %v3421 = vor.u32 %v3419, %v3420
    %v3422 = vshll.u32 2475754826, %v3416
    %v3423 = vshrl.u32 2131351028, %v3417
    %v3424 = vor.u32 %v3422, %v3423
    %v3425 = vshll.u32 2131351028, %v3416
    %v3426 = vshrl.u32 2102212464, %v3417
    %v3427 = vor.u32 %v3425, %v3426
    %v3428 = vshll.u32 2102212464, %v3416
    %v3429 = vshrl.u32 920167782, %v3417
    %v3430 = vor.u32 %v3428, %v3429
    %v3431 = vshll.u32 920167782, %v3416
    %v3432 = vshrl.u32 1326507024, %v3417
    %v3433 = vor.u32 %v3431, %v3432
    %vm3434 = vcmp.lt.s32.totalorder %v3415, 1
    %vm3435 = vcmp.lt.s32.totalorder %v3415, 2
    %vm3436 = vcmp.lt.s32.totalorder %v3415, 3
    %vm3437 = vcmp.lt.s32.totalorder %v3415, 4
    %v3438 = vsel %vm3434, %v3418, %v3421
    %v3439 = vsel %vm3437, %v3427, 2102212464
    %v3440 = vsel %vm3436, %v3424, %v3439
    %v3441 = vsel %vm3435, %v3438, %v3440
    %v3442 = vsel %vm3434, %v3421, %v3424
    %v3443 = vsel %vm3437, %v3430, 920167782
    %v3444 = vsel %vm3436, %v3427, %v3443
    %v3445 = vsel %vm3435, %v3442, %v3444
    %v3446 = vsel %vm3434, %v3424, %v3427
    %v3447 = vsel %vm3437, %v3433, 1326507024
    %v3448 = vsel %vm3436, %v3430, %v3447
    %v3449 = vsel %vm3435, %v3446, %v3448
    %v3450 = vshll.u32 %v3410, 8
    %v3451 = vmul.u32.u64.compose %v3450, %v3449
    %v3452 = vextract.low.u32 %v3451
    %v3453 = vextract.high.u32 %v3451
    %v3454 = vmul.u32.u64.compose %v3450, %v3445
    %v3455 = vextract.low.u32 %v3454
    %v3456 = vextract.high.u32 %v3454
    %v3457 = vmul.u32 %v3450, %v3441
    %v3458 = vadd.s32 %v3453, %v3455
    %vm3459 = vc.u32 %v3453, %v3455
    %v3460 = vadd.s32 %v3456, 1
    %v3461 = vsel %vm3459, %v3460, %v3456
    %v3462 = vadd.s32 %v3457, %v3461
    %v3463 = vadd.s32 %v3462, 536870912
    %v3464 = vshrl.u32 %v3463, 30
    %v3465 = vshll.u32 %v3464, 30
    %v3466 = vsub.s32 %v3462, %v3465
    %vm3467 = vcmp.lt.s32.totalorder %v3466, 0
    %v3468 = vsub.s32 0, %v3466
    %v3469 = vsel %vm3467, %v3468, %v3466
    %v3470 = vclz %v3469
    %v3471 = vsub.s32 %v3470, 2
    %vm3472 = vcmp.gt.s32.totalorder 0, %v3471
    %v3473 = vsel %vm3472, 0, %v3471
    %v3474 = vsub.s32 32, %v3473
    %v3475 = vshll.u32 %v3466, %v3473
    %v3476 = vshrl.u32 %v3458, %v3474
    %v3477 = vor.u32 %v3475, %v3476
    %v3478 = vsub.s32 4294967266, %v3473
    %v3479 = vadd.s32 %v3478, 127
    %v3480 = vshll.u32 %v3479, 23
    %v3481 = vor.u32 4788187, %v3480
    %v3482 = vand.u32 2147483647, %v3481
    %v3484 = vcvt.s32.f32 %v3477
    %v3485 = vmul.f32 %v3484, %v3482
    %v3486 = vxor.u32 %v3485, 2147483648
    %v3487 = vsel %vm3404, %v3486, %v3485
    %v3488 = vsub.s32 4, %v3464
    %v3489 = vsel %vm3404, %v3488, %v3464
    %v3490 = vsel %vm3403, %v1330, %v3487
    %v3491 = vsel %vm3403, 0, %v3489
    %v3492 = vcosq.f32.pop %v3490
    %v3493 = vsinq.f32.pop %v3490
    %vm3494 = vweird.f32 %v1330
    %v3495 = vand.u32 %v3491, 3
    %vm3496 = vcmp.lt.s32.totalorder %v3495, 2
    %vm3497 = vcmp.eq.s32.totalorder %v3495, 0
    %v3498 = vxor.u32 %v3493, 2147483648
    %v3499 = vsel %vm3497, %v3492, %v3498
    %vm3500 = vcmp.eq.s32.totalorder %v3495, 2
    %v3501 = vxor.u32 %v3492, 2147483648
    %v3502 = vsel %vm3500, %v3501, %v3493
    %v3503 = vsel %vm3496, %v3499, %v3502
    %v3504 = vsel %vm3494, nan, %v3503
    %v3505 = vand.u32 2147483647, %v1331
    %vm3506 = vcmp.le.f32.partialorder %v3505, 0.7853982
    %vm3507 = vcmp.lt.s32.totalorder %v1331, 0
    %v3508 = vand.u32 %v1331, 2139095040
    %v3509 = vshrl.u32 %v3508, 23
    %v3510 = vsub.s32 %v3509, 127
    %v3511 = vand.u32 2147483647, %v1331
    %v3512 = vand.u32 %v3511, 8388607
    %v3513 = vor.u32 %v3512, 8388608
    %v3514 = vsub.s32 0, %v3513
    %v3515 = vadd.s32 %v3510, 1
    %vm3516 = vcmp.gt.s32.totalorder %v3515, 0
    %v3517 = vsel %vm3516, %v3515, 0
    %v3518 = vshrl.u32 %v3517, 5
    %v3519 = vand.u32 %v3517, 31
    %v3520 = vsub.s32 32, %v3519
    %v3521 = vshrl.u32 683565275, %v3520
    %v3522 = vshll.u32 683565275, %v3519
    %v3523 = vshrl.u32 2475754826, %v3520
    %v3524 = vor.u32 %v3522, %v3523
    %v3525 = vshll.u32 2475754826, %v3519
    %v3526 = vshrl.u32 2131351028, %v3520
    %v3527 = vor.u32 %v3525, %v3526
    %v3528 = vshll.u32 2131351028, %v3519
    %v3529 = vshrl.u32 2102212464, %v3520
    %v3530 = vor.u32 %v3528, %v3529
    %v3531 = vshll.u32 2102212464, %v3519
    %v3532 = vshrl.u32 920167782, %v3520
    %v3533 = vor.u32 %v3531, %v3532
    %v3534 = vshll.u32 920167782, %v3519
    %v3535 = vshrl.u32 1326507024, %v3520
    %v3536 = vor.u32 %v3534, %v3535
    %vm3537 = vcmp.lt.s32.totalorder %v3518, 1
    %vm3538 = vcmp.lt.s32.totalorder %v3518, 2
    %vm3539 = vcmp.lt.s32.totalorder %v3518, 3
    %vm3540 = vcmp.lt.s32.totalorder %v3518, 4
    %v3541 = vsel %vm3537, %v3521, %v3524
    %v3542 = vsel %vm3540, %v3530, 2102212464
    %v3543 = vsel %vm3539, %v3527, %v3542
    %v3544 = vsel %vm3538, %v3541, %v3543
    %v3545 = vsel %vm3537, %v3524, %v3527
    %v3546 = vsel %vm3540, %v3533, 920167782
    %v3547 = vsel %vm3539, %v3530, %v3546
    %v3548 = vsel %vm3538, %v3545, %v3547
    %v3549 = vsel %vm3537, %v3527, %v3530
    %v3550 = vsel %vm3540, %v3536, 1326507024
    %v3551 = vsel %vm3539, %v3533, %v3550
    %v3552 = vsel %vm3538, %v3549, %v3551
    %v3553 = vshll.u32 %v3513, 8
    %v3554 = vmul.u32.u64.compose %v3553, %v3552
    %v3555 = vextract.low.u32 %v3554
    %v3556 = vextract.high.u32 %v3554
    %v3557 = vmul.u32.u64.compose %v3553, %v3548
    %v3558 = vextract.low.u32 %v3557
    %v3559 = vextract.high.u32 %v3557
    %v3560 = vmul.u32 %v3553, %v3544
    %v3561 = vadd.s32 %v3556, %v3558
    %vm3562 = vc.u32 %v3556, %v3558
    %v3563 = vadd.s32 %v3559, 1
    %v3564 = vsel %vm3562, %v3563, %v3559
    %v3565 = vadd.s32 %v3560, %v3564
    %v3566 = vadd.s32 %v3565, 536870912
    %v3567 = vshrl.u32 %v3566, 30
    %v3568 = vshll.u32 %v3567, 30
    %v3569 = vsub.s32 %v3565, %v3568
    %vm3570 = vcmp.lt.s32.totalorder %v3569, 0
    %v3571 = vsub.s32 0, %v3569
    %v3572 = vsel %vm3570, %v3571, %v3569
    %v3573 = vclz %v3572
    %v3574 = vsub.s32 %v3573, 2
    %vm3575 = vcmp.gt.s32.totalorder 0, %v3574
    %v3576 = vsel %vm3575, 0, %v3574
    %v3577 = vsub.s32 32, %v3576
    %v3578 = vshll.u32 %v3569, %v3576
    %v3579 = vshrl.u32 %v3561, %v3577
    %v3580 = vor.u32 %v3578, %v3579
    %v3581 = vsub.s32 4294967266, %v3576
    %v3582 = vadd.s32 %v3581, 127
    %v3583 = vshll.u32 %v3582, 23
    %v3584 = vor.u32 4788187, %v3583
    %v3585 = vand.u32 2147483647, %v3584
    %v3587 = vcvt.s32.f32 %v3580
    %v3588 = vmul.f32 %v3587, %v3585
    %v3589 = vxor.u32 %v3588, 2147483648
    %v3590 = vsel %vm3507, %v3589, %v3588
    %v3591 = vsub.s32 4, %v3567
    %v3592 = vsel %vm3507, %v3591, %v3567
    %v3593 = vsel %vm3506, %v1331, %v3590
    %v3594 = vsel %vm3506, 0, %v3592
    %v3595 = vcosq.f32.pop %v3593
    %v3596 = vsinq.f32.pop %v3593
    %vm3597 = vweird.f32 %v1331
    %v3598 = vand.u32 %v3594, 3
    %vm3599 = vcmp.lt.s32.totalorder %v3598, 2
    %vm3600 = vcmp.eq.s32.totalorder %v3598, 0
    %v3601 = vxor.u32 %v3596, 2147483648
    %v3602 = vsel %vm3600, %v3595, %v3601
    %vm3603 = vcmp.eq.s32.totalorder %v3598, 2
    %v3604 = vxor.u32 %v3595, 2147483648
    %v3605 = vsel %vm3603, %v3604, %v3596
    %v3606 = vsel %vm3599, %v3602, %v3605
    %v3607 = vsel %vm3597, nan, %v3606
    %v3608 = vand.u32 2147483647, %v1332
    %vm3609 = vcmp.le.f32.partialorder %v3608, 0.7853982
    %vm3610 = vcmp.lt.s32.totalorder %v1332, 0
    %v3611 = vand.u32 %v1332, 2139095040
    %v3612 = vshrl.u32 %v3611, 23
    %v3613 = vsub.s32 %v3612, 127
    %v3614 = vand.u32 2147483647, %v1332
    %v3615 = vand.u32 %v3614, 8388607
    %v3616 = vor.u32 %v3615, 8388608
    %v3617 = vsub.s32 0, %v3616
    %v3618 = vadd.s32 %v3613, 1
    %vm3619 = vcmp.gt.s32.totalorder %v3618, 0
    %v3620 = vsel %vm3619, %v3618, 0
    %v3621 = vshrl.u32 %v3620, 5
    %v3622 = vand.u32 %v3620, 31
    %v3623 = vsub.s32 32, %v3622
    %v3624 = vshrl.u32 683565275, %v3623
    %v3625 = vshll.u32 683565275, %v3622
    %v3626 = vshrl.u32 2475754826, %v3623
    %v3627 = vor.u32 %v3625, %v3626
    %v3628 = vshll.u32 2475754826, %v3622
    %v3629 = vshrl.u32 2131351028, %v3623
    %v3630 = vor.u32 %v3628, %v3629
    %v3631 = vshll.u32 2131351028, %v3622
    %v3632 = vshrl.u32 2102212464, %v3623
    %v3633 = vor.u32 %v3631, %v3632
    %v3634 = vshll.u32 2102212464, %v3622
    %v3635 = vshrl.u32 920167782, %v3623
    %v3636 = vor.u32 %v3634, %v3635
    %v3637 = vshll.u32 920167782, %v3622
    %v3638 = vshrl.u32 1326507024, %v3623
    %v3639 = vor.u32 %v3637, %v3638
    %vm3640 = vcmp.lt.s32.totalorder %v3621, 1
    %vm3641 = vcmp.lt.s32.totalorder %v3621, 2
    %vm3642 = vcmp.lt.s32.totalorder %v3621, 3
    %vm3643 = vcmp.lt.s32.totalorder %v3621, 4
    %v3644 = vsel %vm3640, %v3624, %v3627
    %v3645 = vsel %vm3643, %v3633, 2102212464
    %v3646 = vsel %vm3642, %v3630, %v3645
    %v3647 = vsel %vm3641, %v3644, %v3646
    %v3648 = vsel %vm3640, %v3627, %v3630
    %v3649 = vsel %vm3643, %v3636, 920167782
    %v3650 = vsel %vm3642, %v3633, %v3649
    %v3651 = vsel %vm3641, %v3648, %v3650
    %v3652 = vsel %vm3640, %v3630, %v3633
    %v3653 = vsel %vm3643, %v3639, 1326507024
    %v3654 = vsel %vm3642, %v3636, %v3653
    %v3655 = vsel %vm3641, %v3652, %v3654
    %v3656 = vshll.u32 %v3616, 8
    %v3657 = vmul.u32.u64.compose %v3656, %v3655
    %v3658 = vextract.low.u32 %v3657
    %v3659 = vextract.high.u32 %v3657
    %v3660 = vmul.u32.u64.compose %v3656, %v3651
    %v3661 = vextract.low.u32 %v3660
    %v3662 = vextract.high.u32 %v3660
    %v3663 = vmul.u32 %v3656, %v3647
    %v3664 = vadd.s32 %v3659, %v3661
    %vm3665 = vc.u32 %v3659, %v3661
    %v3666 = vadd.s32 %v3662, 1
    %v3667 = vsel %vm3665, %v3666, %v3662
    %v3668 = vadd.s32 %v3663, %v3667
    %v3669 = vadd.s32 %v3668, 536870912
    %v3670 = vshrl.u32 %v3669, 30
    %v3671 = vshll.u32 %v3670, 30
    %v3672 = vsub.s32 %v3668, %v3671
    %vm3673 = vcmp.lt.s32.totalorder %v3672, 0
    %v3674 = vsub.s32 0, %v3672
    %v3675 = vsel %vm3673, %v3674, %v3672
    %v3676 = vclz %v3675
    %v3677 = vsub.s32 %v3676, 2
    %vm3678 = vcmp.gt.s32.totalorder 0, %v3677
    %v3679 = vsel %vm3678, 0, %v3677
    %v3680 = vsub.s32 32, %v3679
    %v3681 = vshll.u32 %v3672, %v3679
    %v3682 = vshrl.u32 %v3664, %v3680
    %v3683 = vor.u32 %v3681, %v3682
    %v3684 = vsub.s32 4294967266, %v3679
    %v3685 = vadd.s32 %v3684, 127
    %v3686 = vshll.u32 %v3685, 23
    %v3687 = vor.u32 4788187, %v3686
    %v3688 = vand.u32 2147483647, %v3687
    %v3690 = vcvt.s32.f32 %v3683
    %v3691 = vmul.f32 %v3690, %v3688
    %v3692 = vxor.u32 %v3691, 2147483648
    %v3693 = vsel %vm3610, %v3692, %v3691
    %v3694 = vsub.s32 4, %v3670
    %v3695 = vsel %vm3610, %v3694, %v3670
    %v3696 = vsel %vm3609, %v1332, %v3693
    %v3697 = vsel %vm3609, 0, %v3695
    %v3698 = vcosq.f32.pop %v3696
    %v3699 = vsinq.f32.pop %v3696
    %vm3700 = vweird.f32 %v1332
    %v3701 = vand.u32 %v3697, 3
    %vm3702 = vcmp.lt.s32.totalorder %v3701, 2
    %vm3703 = vcmp.eq.s32.totalorder %v3701, 0
    %v3704 = vxor.u32 %v3699, 2147483648
    %v3705 = vsel %vm3703, %v3698, %v3704
    %vm3706 = vcmp.eq.s32.totalorder %v3701, 2
    %v3707 = vxor.u32 %v3698, 2147483648
    %v3708 = vsel %vm3706, %v3707, %v3699
    %v3709 = vsel %vm3702, %v3705, %v3708
    %v3710 = vsel %vm3700, nan, %v3709
    %v3711 = vand.u32 2147483647, %v1333
    %vm3712 = vcmp.le.f32.partialorder %v3711, 0.7853982
    %vm3713 = vcmp.lt.s32.totalorder %v1333, 0
    %v3714 = vand.u32 %v1333, 2139095040
    %v3715 = vshrl.u32 %v3714, 23
    %v3716 = vsub.s32 %v3715, 127
    %v3717 = vand.u32 2147483647, %v1333
    %v3718 = vand.u32 %v3717, 8388607
    %v3719 = vor.u32 %v3718, 8388608
    %v3720 = vsub.s32 0, %v3719
    %v3721 = vadd.s32 %v3716, 1
    %vm3722 = vcmp.gt.s32.totalorder %v3721, 0
    %v3723 = vsel %vm3722, %v3721, 0
    %v3724 = vshrl.u32 %v3723, 5
    %v3725 = vand.u32 %v3723, 31
    %v3726 = vsub.s32 32, %v3725
    %v3727 = vshrl.u32 683565275, %v3726
    %v3728 = vshll.u32 683565275, %v3725
    %v3729 = vshrl.u32 2475754826, %v3726
    %v3730 = vor.u32 %v3728, %v3729
    %v3731 = vshll.u32 2475754826, %v3725
    %v3732 = vshrl.u32 2131351028, %v3726
    %v3733 = vor.u32 %v3731, %v3732
    %v3734 = vshll.u32 2131351028, %v3725
    %v3735 = vshrl.u32 2102212464, %v3726
    %v3736 = vor.u32 %v3734, %v3735
    %v3737 = vshll.u32 2102212464, %v3725
    %v3738 = vshrl.u32 920167782, %v3726
    %v3739 = vor.u32 %v3737, %v3738
    %v3740 = vshll.u32 920167782, %v3725
    %v3741 = vshrl.u32 1326507024, %v3726
    %v3742 = vor.u32 %v3740, %v3741
    %vm3743 = vcmp.lt.s32.totalorder %v3724, 1
    %vm3744 = vcmp.lt.s32.totalorder %v3724, 2
    %vm3745 = vcmp.lt.s32.totalorder %v3724, 3
    %vm3746 = vcmp.lt.s32.totalorder %v3724, 4
    %v3747 = vsel %vm3743, %v3727, %v3730
    %v3748 = vsel %vm3746, %v3736, 2102212464
    %v3749 = vsel %vm3745, %v3733, %v3748
    %v3750 = vsel %vm3744, %v3747, %v3749
    %v3751 = vsel %vm3743, %v3730, %v3733
    %v3752 = vsel %vm3746, %v3739, 920167782
    %v3753 = vsel %vm3745, %v3736, %v3752
    %v3754 = vsel %vm3744, %v3751, %v3753
    %v3755 = vsel %vm3743, %v3733, %v3736
    %v3756 = vsel %vm3746, %v3742, 1326507024
    %v3757 = vsel %vm3745, %v3739, %v3756
    %v3758 = vsel %vm3744, %v3755, %v3757
    %v3759 = vshll.u32 %v3719, 8
    %v3760 = vmul.u32.u64.compose %v3759, %v3758
    %v3761 = vextract.low.u32 %v3760
    %v3762 = vextract.high.u32 %v3760
    %v3763 = vmul.u32.u64.compose %v3759, %v3754
    %v3764 = vextract.low.u32 %v3763
    %v3765 = vextract.high.u32 %v3763
    %v3766 = vmul.u32 %v3759, %v3750
    %v3767 = vadd.s32 %v3762, %v3764
    %vm3768 = vc.u32 %v3762, %v3764
    %v3769 = vadd.s32 %v3765, 1
    %v3770 = vsel %vm3768, %v3769, %v3765
    %v3771 = vadd.s32 %v3766, %v3770
    %v3772 = vadd.s32 %v3771, 536870912
    %v3773 = vshrl.u32 %v3772, 30
    %v3774 = vshll.u32 %v3773, 30
    %v3775 = vsub.s32 %v3771, %v3774
    %vm3776 = vcmp.lt.s32.totalorder %v3775, 0
    %v3777 = vsub.s32 0, %v3775
    %v3778 = vsel %vm3776, %v3777, %v3775
    %v3779 = vclz %v3778
    %v3780 = vsub.s32 %v3779, 2
    %vm3781 = vcmp.gt.s32.totalorder 0, %v3780
    %v3782 = vsel %vm3781, 0, %v3780
    %v3783 = vsub.s32 32, %v3782
    %v3784 = vshll.u32 %v3775, %v3782
    %v3785 = vshrl.u32 %v3767, %v3783
    %v3786 = vor.u32 %v3784, %v3785
    %v3787 = vsub.s32 4294967266, %v3782
    %v3788 = vadd.s32 %v3787, 127
    %v3789 = vshll.u32 %v3788, 23
    %v3790 = vor.u32 4788187, %v3789
    %v3791 = vand.u32 2147483647, %v3790
    %v3793 = vcvt.s32.f32 %v3786
    %v3794 = vmul.f32 %v3793, %v3791
    %v3795 = vxor.u32 %v3794, 2147483648
    %v3796 = vsel %vm3713, %v3795, %v3794
    %v3797 = vsub.s32 4, %v3773
    %v3798 = vsel %vm3713, %v3797, %v3773
    %v3799 = vsel %vm3712, %v1333, %v3796
    %v3800 = vsel %vm3712, 0, %v3798
    %v3801 = vcosq.f32.pop %v3799
    %v3802 = vsinq.f32.pop %v3799
    %vm3803 = vweird.f32 %v1333
    %v3804 = vand.u32 %v3800, 3
    %vm3805 = vcmp.lt.s32.totalorder %v3804, 2
    %vm3806 = vcmp.eq.s32.totalorder %v3804, 0
    %v3807 = vxor.u32 %v3802, 2147483648
    %v3808 = vsel %vm3806, %v3801, %v3807
    %vm3809 = vcmp.eq.s32.totalorder %v3804, 2
    %v3810 = vxor.u32 %v3801, 2147483648
    %v3811 = vsel %vm3809, %v3810, %v3802
    %v3812 = vsel %vm3805, %v3808, %v3811
    %v3813 = vsel %vm3803, nan, %v3812
    %v3814 = vand.u32 2147483647, %v1334
    %vm3815 = vcmp.le.f32.partialorder %v3814, 0.7853982
    %vm3816 = vcmp.lt.s32.totalorder %v1334, 0
    %v3817 = vand.u32 %v1334, 2139095040
    %v3818 = vshrl.u32 %v3817, 23
    %v3819 = vsub.s32 %v3818, 127
    %v3820 = vand.u32 2147483647, %v1334
    %v3821 = vand.u32 %v3820, 8388607
    %v3822 = vor.u32 %v3821, 8388608
    %v3823 = vsub.s32 0, %v3822
    %v3824 = vadd.s32 %v3819, 1
    %vm3825 = vcmp.gt.s32.totalorder %v3824, 0
    %v3826 = vsel %vm3825, %v3824, 0
    %v3827 = vshrl.u32 %v3826, 5
    %v3828 = vand.u32 %v3826, 31
    %v3829 = vsub.s32 32, %v3828
    %v3830 = vshrl.u32 683565275, %v3829
    %v3831 = vshll.u32 683565275, %v3828
    %v3832 = vshrl.u32 2475754826, %v3829
    %v3833 = vor.u32 %v3831, %v3832
    %v3834 = vshll.u32 2475754826, %v3828
    %v3835 = vshrl.u32 2131351028, %v3829
    %v3836 = vor.u32 %v3834, %v3835
    %v3837 = vshll.u32 2131351028, %v3828
    %v3838 = vshrl.u32 2102212464, %v3829
    %v3839 = vor.u32 %v3837, %v3838
    %v3840 = vshll.u32 2102212464, %v3828
    %v3841 = vshrl.u32 920167782, %v3829
    %v3842 = vor.u32 %v3840, %v3841
    %v3843 = vshll.u32 920167782, %v3828
    %v3844 = vshrl.u32 1326507024, %v3829
    %v3845 = vor.u32 %v3843, %v3844
    %vm3846 = vcmp.lt.s32.totalorder %v3827, 1
    %vm3847 = vcmp.lt.s32.totalorder %v3827, 2
    %vm3848 = vcmp.lt.s32.totalorder %v3827, 3
    %vm3849 = vcmp.lt.s32.totalorder %v3827, 4
    %v3850 = vsel %vm3846, %v3830, %v3833
    %v3851 = vsel %vm3849, %v3839, 2102212464
    %v3852 = vsel %vm3848, %v3836, %v3851
    %v3853 = vsel %vm3847, %v3850, %v3852
    %v3854 = vsel %vm3846, %v3833, %v3836
    %v3855 = vsel %vm3849, %v3842, 920167782
    %v3856 = vsel %vm3848, %v3839, %v3855
    %v3857 = vsel %vm3847, %v3854, %v3856
    %v3858 = vsel %vm3846, %v3836, %v3839
    %v3859 = vsel %vm3849, %v3845, 1326507024
    %v3860 = vsel %vm3848, %v3842, %v3859
    %v3861 = vsel %vm3847, %v3858, %v3860
    %v3862 = vshll.u32 %v3822, 8
    %v3863 = vmul.u32.u64.compose %v3862, %v3861
    %v3864 = vextract.low.u32 %v3863
    %v3865 = vextract.high.u32 %v3863
    %v3866 = vmul.u32.u64.compose %v3862, %v3857
    %v3867 = vextract.low.u32 %v3866
    %v3868 = vextract.high.u32 %v3866
    %v3869 = vmul.u32 %v3862, %v3853
    %v3870 = vadd.s32 %v3865, %v3867
    %vm3871 = vc.u32 %v3865, %v3867
    %v3872 = vadd.s32 %v3868, 1
    %v3873 = vsel %vm3871, %v3872, %v3868
    %v3874 = vadd.s32 %v3869, %v3873
    %v3875 = vadd.s32 %v3874, 536870912
    %v3876 = vshrl.u32 %v3875, 30
    %v3877 = vshll.u32 %v3876, 30
    %v3878 = vsub.s32 %v3874, %v3877
    %vm3879 = vcmp.lt.s32.totalorder %v3878, 0
    %v3880 = vsub.s32 0, %v3878
    %v3881 = vsel %vm3879, %v3880, %v3878
    %v3882 = vclz %v3881
    %v3883 = vsub.s32 %v3882, 2
    %vm3884 = vcmp.gt.s32.totalorder 0, %v3883
    %v3885 = vsel %vm3884, 0, %v3883
    %v3886 = vsub.s32 32, %v3885
    %v3887 = vshll.u32 %v3878, %v3885
    %v3888 = vshrl.u32 %v3870, %v3886
    %v3889 = vor.u32 %v3887, %v3888
    %v3890 = vsub.s32 4294967266, %v3885
    %v3891 = vadd.s32 %v3890, 127
    %v3892 = vshll.u32 %v3891, 23
    %v3893 = vor.u32 4788187, %v3892
    %v3894 = vand.u32 2147483647, %v3893
    %v3896 = vcvt.s32.f32 %v3889
    %v3897 = vmul.f32 %v3896, %v3894
    %v3898 = vxor.u32 %v3897, 2147483648
    %v3899 = vsel %vm3816, %v3898, %v3897
    %v3900 = vsub.s32 4, %v3876
    %v3901 = vsel %vm3816, %v3900, %v3876
    %v3902 = vsel %vm3815, %v1334, %v3899
    %v3903 = vsel %vm3815, 0, %v3901
    %v3904 = vcosq.f32.pop %v3902
    %v3905 = vsinq.f32.pop %v3902
    %vm3906 = vweird.f32 %v1334
    %v3907 = vand.u32 %v3903, 3
    %vm3908 = vcmp.lt.s32.totalorder %v3907, 2
    %vm3909 = vcmp.eq.s32.totalorder %v3907, 0
    %v3910 = vxor.u32 %v3905, 2147483648
    %v3911 = vsel %vm3909, %v3904, %v3910
    %vm3912 = vcmp.eq.s32.totalorder %v3907, 2
    %v3913 = vxor.u32 %v3904, 2147483648
    %v3914 = vsel %vm3912, %v3913, %v3905
    %v3915 = vsel %vm3908, %v3911, %v3914
    %v3916 = vsel %vm3906, nan, %v3915
    %v3917 = vand.u32 2147483647, %v1335
    %vm3918 = vcmp.le.f32.partialorder %v3917, 0.7853982
    %vm3919 = vcmp.lt.s32.totalorder %v1335, 0
    %v3920 = vand.u32 %v1335, 2139095040
    %v3921 = vshrl.u32 %v3920, 23
    %v3922 = vsub.s32 %v3921, 127
    %v3923 = vand.u32 2147483647, %v1335
    %v3924 = vand.u32 %v3923, 8388607
    %v3925 = vor.u32 %v3924, 8388608
    %v3926 = vsub.s32 0, %v3925
    %v3927 = vadd.s32 %v3922, 1
    %vm3928 = vcmp.gt.s32.totalorder %v3927, 0
    %v3929 = vsel %vm3928, %v3927, 0
    %v3930 = vshrl.u32 %v3929, 5
    %v3931 = vand.u32 %v3929, 31
    %v3932 = vsub.s32 32, %v3931
    %v3933 = vshrl.u32 683565275, %v3932
    %v3934 = vshll.u32 683565275, %v3931
    %v3935 = vshrl.u32 2475754826, %v3932
    %v3936 = vor.u32 %v3934, %v3935
    %v3937 = vshll.u32 2475754826, %v3931
    %v3938 = vshrl.u32 2131351028, %v3932
    %v3939 = vor.u32 %v3937, %v3938
    %v3940 = vshll.u32 2131351028, %v3931
    %v3941 = vshrl.u32 2102212464, %v3932
    %v3942 = vor.u32 %v3940, %v3941
    %v3943 = vshll.u32 2102212464, %v3931
    %v3944 = vshrl.u32 920167782, %v3932
    %v3945 = vor.u32 %v3943, %v3944
    %v3946 = vshll.u32 920167782, %v3931
    %v3947 = vshrl.u32 1326507024, %v3932
    %v3948 = vor.u32 %v3946, %v3947
    %vm3949 = vcmp.lt.s32.totalorder %v3930, 1
    %vm3950 = vcmp.lt.s32.totalorder %v3930, 2
    %vm3951 = vcmp.lt.s32.totalorder %v3930, 3
    %vm3952 = vcmp.lt.s32.totalorder %v3930, 4
    %v3953 = vsel %vm3949, %v3933, %v3936
    %v3954 = vsel %vm3952, %v3942, 2102212464
    %v3955 = vsel %vm3951, %v3939, %v3954
    %v3956 = vsel %vm3950, %v3953, %v3955
    %v3957 = vsel %vm3949, %v3936, %v3939
    %v3958 = vsel %vm3952, %v3945, 920167782
    %v3959 = vsel %vm3951, %v3942, %v3958
    %v3960 = vsel %vm3950, %v3957, %v3959
    %v3961 = vsel %vm3949, %v3939, %v3942
    %v3962 = vsel %vm3952, %v3948, 1326507024
    %v3963 = vsel %vm3951, %v3945, %v3962
    %v3964 = vsel %vm3950, %v3961, %v3963
    %v3965 = vshll.u32 %v3925, 8
    %v3966 = vmul.u32.u64.compose %v3965, %v3964
    %v3967 = vextract.low.u32 %v3966
    %v3968 = vextract.high.u32 %v3966
    %v3969 = vmul.u32.u64.compose %v3965, %v3960
    %v3970 = vextract.low.u32 %v3969
    %v3971 = vextract.high.u32 %v3969
    %v3972 = vmul.u32 %v3965, %v3956
    %v3973 = vadd.s32 %v3968, %v3970
    %vm3974 = vc.u32 %v3968, %v3970
    %v3975 = vadd.s32 %v3971, 1
    %v3976 = vsel %vm3974, %v3975, %v3971
    %v3977 = vadd.s32 %v3972, %v3976
    %v3978 = vadd.s32 %v3977, 536870912
    %v3979 = vshrl.u32 %v3978, 30
    %v3980 = vshll.u32 %v3979, 30
    %v3981 = vsub.s32 %v3977, %v3980
    %vm3982 = vcmp.lt.s32.totalorder %v3981, 0
    %v3983 = vsub.s32 0, %v3981
    %v3984 = vsel %vm3982, %v3983, %v3981
    %v3985 = vclz %v3984
    %v3986 = vsub.s32 %v3985, 2
    %vm3987 = vcmp.gt.s32.totalorder 0, %v3986
    %v3988 = vsel %vm3987, 0, %v3986
    %v3989 = vsub.s32 32, %v3988
    %v3990 = vshll.u32 %v3981, %v3988
    %v3991 = vshrl.u32 %v3973, %v3989
    %v3992 = vor.u32 %v3990, %v3991
    %v3993 = vsub.s32 4294967266, %v3988
    %v3994 = vadd.s32 %v3993, 127
    %v3995 = vshll.u32 %v3994, 23
    %v3996 = vor.u32 4788187, %v3995
    %v3997 = vand.u32 2147483647, %v3996
    %v3999 = vcvt.s32.f32 %v3992
    %v4000 = vmul.f32 %v3999, %v3997
    %v4001 = vxor.u32 %v4000, 2147483648
    %v4002 = vsel %vm3919, %v4001, %v4000
    %v4003 = vsub.s32 4, %v3979
    %v4004 = vsel %vm3919, %v4003, %v3979
    %v4005 = vsel %vm3918, %v1335, %v4002
    %v4006 = vsel %vm3918, 0, %v4004
    %v4007 = vcosq.f32.pop %v4005
    %v4008 = vsinq.f32.pop %v4005
    %vm4009 = vweird.f32 %v1335
    %v4010 = vand.u32 %v4006, 3
    %vm4011 = vcmp.lt.s32.totalorder %v4010, 2
    %vm4012 = vcmp.eq.s32.totalorder %v4010, 0
    %v4013 = vxor.u32 %v4008, 2147483648
    %v4014 = vsel %vm4012, %v4007, %v4013
    %vm4015 = vcmp.eq.s32.totalorder %v4010, 2
    %v4016 = vxor.u32 %v4007, 2147483648
    %v4017 = vsel %vm4015, %v4016, %v4008
    %v4018 = vsel %vm4011, %v4014, %v4017
    %v4019 = vsel %vm4009, nan, %v4018
    %v4020 = vand.u32 2147483647, %v1336
    %vm4021 = vcmp.le.f32.partialorder %v4020, 0.7853982
    %vm4022 = vcmp.lt.s32.totalorder %v1336, 0
    %v4023 = vand.u32 %v1336, 2139095040
    %v4024 = vshrl.u32 %v4023, 23
    %v4025 = vsub.s32 %v4024, 127
    %v4026 = vand.u32 2147483647, %v1336
    %v4027 = vand.u32 %v4026, 8388607
    %v4028 = vor.u32 %v4027, 8388608
    %v4029 = vsub.s32 0, %v4028
    %v4030 = vadd.s32 %v4025, 1
    %vm4031 = vcmp.gt.s32.totalorder %v4030, 0
    %v4032 = vsel %vm4031, %v4030, 0
    %v4033 = vshrl.u32 %v4032, 5
    %v4034 = vand.u32 %v4032, 31
    %v4035 = vsub.s32 32, %v4034
    %v4036 = vshrl.u32 683565275, %v4035
    %v4037 = vshll.u32 683565275, %v4034
    %v4038 = vshrl.u32 2475754826, %v4035
    %v4039 = vor.u32 %v4037, %v4038
    %v4040 = vshll.u32 2475754826, %v4034
    %v4041 = vshrl.u32 2131351028, %v4035
    %v4042 = vor.u32 %v4040, %v4041
    %v4043 = vshll.u32 2131351028, %v4034
    %v4044 = vshrl.u32 2102212464, %v4035
    %v4045 = vor.u32 %v4043, %v4044
    %v4046 = vshll.u32 2102212464, %v4034
    %v4047 = vshrl.u32 920167782, %v4035
    %v4048 = vor.u32 %v4046, %v4047
    %v4049 = vshll.u32 920167782, %v4034
    %v4050 = vshrl.u32 1326507024, %v4035
    %v4051 = vor.u32 %v4049, %v4050
    %vm4052 = vcmp.lt.s32.totalorder %v4033, 1
    %vm4053 = vcmp.lt.s32.totalorder %v4033, 2
    %vm4054 = vcmp.lt.s32.totalorder %v4033, 3
    %vm4055 = vcmp.lt.s32.totalorder %v4033, 4
    %v4056 = vsel %vm4052, %v4036, %v4039
    %v4057 = vsel %vm4055, %v4045, 2102212464
    %v4058 = vsel %vm4054, %v4042, %v4057
    %v4059 = vsel %vm4053, %v4056, %v4058
    %v4060 = vsel %vm4052, %v4039, %v4042
    %v4061 = vsel %vm4055, %v4048, 920167782
    %v4062 = vsel %vm4054, %v4045, %v4061
    %v4063 = vsel %vm4053, %v4060, %v4062
    %v4064 = vsel %vm4052, %v4042, %v4045
    %v4065 = vsel %vm4055, %v4051, 1326507024
    %v4066 = vsel %vm4054, %v4048, %v4065
    %v4067 = vsel %vm4053, %v4064, %v4066
    %v4068 = vshll.u32 %v4028, 8
    %v4069 = vmul.u32.u64.compose %v4068, %v4067
    %v4070 = vextract.low.u32 %v4069
    %v4071 = vextract.high.u32 %v4069
    %v4072 = vmul.u32.u64.compose %v4068, %v4063
    %v4073 = vextract.low.u32 %v4072
    %v4074 = vextract.high.u32 %v4072
    %v4075 = vmul.u32 %v4068, %v4059
    %v4076 = vadd.s32 %v4071, %v4073
    %vm4077 = vc.u32 %v4071, %v4073
    %v4078 = vadd.s32 %v4074, 1
    %v4079 = vsel %vm4077, %v4078, %v4074
    %v4080 = vadd.s32 %v4075, %v4079
    %v4081 = vadd.s32 %v4080, 536870912
    %v4082 = vshrl.u32 %v4081, 30
    %v4083 = vshll.u32 %v4082, 30
    %v4084 = vsub.s32 %v4080, %v4083
    %vm4085 = vcmp.lt.s32.totalorder %v4084, 0
    %v4086 = vsub.s32 0, %v4084
    %v4087 = vsel %vm4085, %v4086, %v4084
    %v4088 = vclz %v4087
    %v4089 = vsub.s32 %v4088, 2
    %vm4090 = vcmp.gt.s32.totalorder 0, %v4089
    %v4091 = vsel %vm4090, 0, %v4089
    %v4092 = vsub.s32 32, %v4091
    %v4093 = vshll.u32 %v4084, %v4091
    %v4094 = vshrl.u32 %v4076, %v4092
    %v4095 = vor.u32 %v4093, %v4094
    %v4096 = vsub.s32 4294967266, %v4091
    %v4097 = vadd.s32 %v4096, 127
    %v4098 = vshll.u32 %v4097, 23
    %v4099 = vor.u32 4788187, %v4098
    %v4100 = vand.u32 2147483647, %v4099
    %v4102 = vcvt.s32.f32 %v4095
    %v4103 = vmul.f32 %v4102, %v4100
    %v4104 = vxor.u32 %v4103, 2147483648
    %v4105 = vsel %vm4022, %v4104, %v4103
    %v4106 = vsub.s32 4, %v4082
    %v4107 = vsel %vm4022, %v4106, %v4082
    %v4108 = vsel %vm4021, %v1336, %v4105
    %v4109 = vsel %vm4021, 0, %v4107
    %v4110 = vcosq.f32.pop %v4108
    %v4111 = vsinq.f32.pop %v4108
    %vm4112 = vweird.f32 %v1336
    %v4113 = vand.u32 %v4109, 3
    %vm4114 = vcmp.lt.s32.totalorder %v4113, 2
    %vm4115 = vcmp.eq.s32.totalorder %v4113, 0
    %v4116 = vxor.u32 %v4111, 2147483648
    %v4117 = vsel %vm4115, %v4110, %v4116
    %vm4118 = vcmp.eq.s32.totalorder %v4113, 2
    %v4119 = vxor.u32 %v4110, 2147483648
    %v4120 = vsel %vm4118, %v4119, %v4111
    %v4121 = vsel %vm4114, %v4117, %v4120
    %v4122 = vsel %vm4112, nan, %v4121
    %v4123 = vand.u32 2147483647, %v1337
    %vm4124 = vcmp.le.f32.partialorder %v4123, 0.7853982
    %vm4125 = vcmp.lt.s32.totalorder %v1337, 0
    %v4126 = vand.u32 %v1337, 2139095040
    %v4127 = vshrl.u32 %v4126, 23
    %v4128 = vsub.s32 %v4127, 127
    %v4129 = vand.u32 2147483647, %v1337
    %v4130 = vand.u32 %v4129, 8388607
    %v4131 = vor.u32 %v4130, 8388608
    %v4132 = vsub.s32 0, %v4131
    %v4133 = vadd.s32 %v4128, 1
    %vm4134 = vcmp.gt.s32.totalorder %v4133, 0
    %v4135 = vsel %vm4134, %v4133, 0
    %v4136 = vshrl.u32 %v4135, 5
    %v4137 = vand.u32 %v4135, 31
    %v4138 = vsub.s32 32, %v4137
    %v4139 = vshrl.u32 683565275, %v4138
    %v4140 = vshll.u32 683565275, %v4137
    %v4141 = vshrl.u32 2475754826, %v4138
    %v4142 = vor.u32 %v4140, %v4141
    %v4143 = vshll.u32 2475754826, %v4137
    %v4144 = vshrl.u32 2131351028, %v4138
    %v4145 = vor.u32 %v4143, %v4144
    %v4146 = vshll.u32 2131351028, %v4137
    %v4147 = vshrl.u32 2102212464, %v4138
    %v4148 = vor.u32 %v4146, %v4147
    %v4149 = vshll.u32 2102212464, %v4137
    %v4150 = vshrl.u32 920167782, %v4138
    %v4151 = vor.u32 %v4149, %v4150
    %v4152 = vshll.u32 920167782, %v4137
    %v4153 = vshrl.u32 1326507024, %v4138
    %v4154 = vor.u32 %v4152, %v4153
    %vm4155 = vcmp.lt.s32.totalorder %v4136, 1
    %vm4156 = vcmp.lt.s32.totalorder %v4136, 2
    %vm4157 = vcmp.lt.s32.totalorder %v4136, 3
    %vm4158 = vcmp.lt.s32.totalorder %v4136, 4
    %v4159 = vsel %vm4155, %v4139, %v4142
    %v4160 = vsel %vm4158, %v4148, 2102212464
    %v4161 = vsel %vm4157, %v4145, %v4160
    %v4162 = vsel %vm4156, %v4159, %v4161
    %v4163 = vsel %vm4155, %v4142, %v4145
    %v4164 = vsel %vm4158, %v4151, 920167782
    %v4165 = vsel %vm4157, %v4148, %v4164
    %v4166 = vsel %vm4156, %v4163, %v4165
    %v4167 = vsel %vm4155, %v4145, %v4148
    %v4168 = vsel %vm4158, %v4154, 1326507024
    %v4169 = vsel %vm4157, %v4151, %v4168
    %v4170 = vsel %vm4156, %v4167, %v4169
    %v4171 = vshll.u32 %v4131, 8
    %v4172 = vmul.u32.u64.compose %v4171, %v4170
    %v4173 = vextract.low.u32 %v4172
    %v4174 = vextract.high.u32 %v4172
    %v4175 = vmul.u32.u64.compose %v4171, %v4166
    %v4176 = vextract.low.u32 %v4175
    %v4177 = vextract.high.u32 %v4175
    %v4178 = vmul.u32 %v4171, %v4162
    %v4179 = vadd.s32 %v4174, %v4176
    %vm4180 = vc.u32 %v4174, %v4176
    %v4181 = vadd.s32 %v4177, 1
    %v4182 = vsel %vm4180, %v4181, %v4177
    %v4183 = vadd.s32 %v4178, %v4182
    %v4184 = vadd.s32 %v4183, 536870912
    %v4185 = vshrl.u32 %v4184, 30
    %v4186 = vshll.u32 %v4185, 30
    %v4187 = vsub.s32 %v4183, %v4186
    %vm4188 = vcmp.lt.s32.totalorder %v4187, 0
    %v4189 = vsub.s32 0, %v4187
    %v4190 = vsel %vm4188, %v4189, %v4187
    %v4191 = vclz %v4190
    %v4192 = vsub.s32 %v4191, 2
    %vm4193 = vcmp.gt.s32.totalorder 0, %v4192
    %v4194 = vsel %vm4193, 0, %v4192
    %v4195 = vsub.s32 32, %v4194
    %v4196 = vshll.u32 %v4187, %v4194
    %v4197 = vshrl.u32 %v4179, %v4195
    %v4198 = vor.u32 %v4196, %v4197
    %v4199 = vsub.s32 4294967266, %v4194
    %v4200 = vadd.s32 %v4199, 127
    %v4201 = vshll.u32 %v4200, 23
    %v4202 = vor.u32 4788187, %v4201
    %v4203 = vand.u32 2147483647, %v4202
    %v4205 = vcvt.s32.f32 %v4198
    %v4206 = vmul.f32 %v4205, %v4203
    %v4207 = vxor.u32 %v4206, 2147483648
    %v4208 = vsel %vm4125, %v4207, %v4206
    %v4209 = vsub.s32 4, %v4185
    %v4210 = vsel %vm4125, %v4209, %v4185
    %v4211 = vsel %vm4124, %v1337, %v4208
    %v4212 = vsel %vm4124, 0, %v4210
    %v4213 = vcosq.f32.pop %v4211
    %v4214 = vsinq.f32.pop %v4211
    %vm4215 = vweird.f32 %v1337
    %v4216 = vand.u32 %v4212, 3
    %vm4217 = vcmp.lt.s32.totalorder %v4216, 2
    %vm4218 = vcmp.eq.s32.totalorder %v4216, 0
    %v4219 = vxor.u32 %v4214, 2147483648
    %v4220 = vsel %vm4218, %v4213, %v4219
    %vm4221 = vcmp.eq.s32.totalorder %v4216, 2
    %v4222 = vxor.u32 %v4213, 2147483648
    %v4223 = vsel %vm4221, %v4222, %v4214
    %v4224 = vsel %vm4217, %v4220, %v4223
    %v4225 = vsel %vm4215, nan, %v4224
    %v4226 = vand.u32 2147483647, %v1338
    %vm4227 = vcmp.le.f32.partialorder %v4226, 0.7853982
    %vm4228 = vcmp.lt.s32.totalorder %v1338, 0
    %v4229 = vand.u32 %v1338, 2139095040
    %v4230 = vshrl.u32 %v4229, 23
    %v4231 = vsub.s32 %v4230, 127
    %v4232 = vand.u32 2147483647, %v1338
    %v4233 = vand.u32 %v4232, 8388607
    %v4234 = vor.u32 %v4233, 8388608
    %v4235 = vsub.s32 0, %v4234
    %v4236 = vadd.s32 %v4231, 1
    %vm4237 = vcmp.gt.s32.totalorder %v4236, 0
    %v4238 = vsel %vm4237, %v4236, 0
    %v4239 = vshrl.u32 %v4238, 5
    %v4240 = vand.u32 %v4238, 31
    %v4241 = vsub.s32 32, %v4240
    %v4242 = vshrl.u32 683565275, %v4241
    %v4243 = vshll.u32 683565275, %v4240
    %v4244 = vshrl.u32 2475754826, %v4241
    %v4245 = vor.u32 %v4243, %v4244
    %v4246 = vshll.u32 2475754826, %v4240
    %v4247 = vshrl.u32 2131351028, %v4241
    %v4248 = vor.u32 %v4246, %v4247
    %v4249 = vshll.u32 2131351028, %v4240
    %v4250 = vshrl.u32 2102212464, %v4241
    %v4251 = vor.u32 %v4249, %v4250
    %v4252 = vshll.u32 2102212464, %v4240
    %v4253 = vshrl.u32 920167782, %v4241
    %v4254 = vor.u32 %v4252, %v4253
    %v4255 = vshll.u32 920167782, %v4240
    %v4256 = vshrl.u32 1326507024, %v4241
    %v4257 = vor.u32 %v4255, %v4256
    %vm4258 = vcmp.lt.s32.totalorder %v4239, 1
    %vm4259 = vcmp.lt.s32.totalorder %v4239, 2
    %vm4260 = vcmp.lt.s32.totalorder %v4239, 3
    %vm4261 = vcmp.lt.s32.totalorder %v4239, 4
    %v4262 = vsel %vm4258, %v4242, %v4245
    %v4263 = vsel %vm4261, %v4251, 2102212464
    %v4264 = vsel %vm4260, %v4248, %v4263
    %v4265 = vsel %vm4259, %v4262, %v4264
    %v4266 = vsel %vm4258, %v4245, %v4248
    %v4267 = vsel %vm4261, %v4254, 920167782
    %v4268 = vsel %vm4260, %v4251, %v4267
    %v4269 = vsel %vm4259, %v4266, %v4268
    %v4270 = vsel %vm4258, %v4248, %v4251
    %v4271 = vsel %vm4261, %v4257, 1326507024
    %v4272 = vsel %vm4260, %v4254, %v4271
    %v4273 = vsel %vm4259, %v4270, %v4272
    %v4274 = vshll.u32 %v4234, 8
    %v4275 = vmul.u32.u64.compose %v4274, %v4273
    %v4276 = vextract.low.u32 %v4275
    %v4277 = vextract.high.u32 %v4275
    %v4278 = vmul.u32.u64.compose %v4274, %v4269
    %v4279 = vextract.low.u32 %v4278
    %v4280 = vextract.high.u32 %v4278
    %v4281 = vmul.u32 %v4274, %v4265
    %v4282 = vadd.s32 %v4277, %v4279
    %vm4283 = vc.u32 %v4277, %v4279
    %v4284 = vadd.s32 %v4280, 1
    %v4285 = vsel %vm4283, %v4284, %v4280
    %v4286 = vadd.s32 %v4281, %v4285
    %v4287 = vadd.s32 %v4286, 536870912
    %v4288 = vshrl.u32 %v4287, 30
    %v4289 = vshll.u32 %v4288, 30
    %v4290 = vsub.s32 %v4286, %v4289
    %vm4291 = vcmp.lt.s32.totalorder %v4290, 0
    %v4292 = vsub.s32 0, %v4290
    %v4293 = vsel %vm4291, %v4292, %v4290
    %v4294 = vclz %v4293
    %v4295 = vsub.s32 %v4294, 2
    %vm4296 = vcmp.gt.s32.totalorder 0, %v4295
    %v4297 = vsel %vm4296, 0, %v4295
    %v4298 = vsub.s32 32, %v4297
    %v4299 = vshll.u32 %v4290, %v4297
    %v4300 = vshrl.u32 %v4282, %v4298
    %v4301 = vor.u32 %v4299, %v4300
    %v4302 = vsub.s32 4294967266, %v4297
    %v4303 = vadd.s32 %v4302, 127
    %v4304 = vshll.u32 %v4303, 23
    %v4305 = vor.u32 4788187, %v4304
    %v4306 = vand.u32 2147483647, %v4305
    %v4308 = vcvt.s32.f32 %v4301
    %v4309 = vmul.f32 %v4308, %v4306
    %v4310 = vxor.u32 %v4309, 2147483648
    %v4311 = vsel %vm4228, %v4310, %v4309
    %v4312 = vsub.s32 4, %v4288
    %v4313 = vsel %vm4228, %v4312, %v4288
    %v4314 = vsel %vm4227, %v1338, %v4311
    %v4315 = vsel %vm4227, 0, %v4313
    %v4316 = vcosq.f32.pop %v4314
    %v4317 = vsinq.f32.pop %v4314
    %vm4318 = vweird.f32 %v1338
    %v4319 = vand.u32 %v4315, 3
    %vm4320 = vcmp.lt.s32.totalorder %v4319, 2
    %vm4321 = vcmp.eq.s32.totalorder %v4319, 0
    %v4322 = vxor.u32 %v4317, 2147483648
    %v4323 = vsel %vm4321, %v4316, %v4322
    %vm4324 = vcmp.eq.s32.totalorder %v4319, 2
    %v4325 = vxor.u32 %v4316, 2147483648
    %v4326 = vsel %vm4324, %v4325, %v4317
    %v4327 = vsel %vm4320, %v4323, %v4326
    %v4328 = vsel %vm4318, nan, %v4327
    %v4329 = vand.u32 2147483647, %v1339
    %vm4330 = vcmp.le.f32.partialorder %v4329, 0.7853982
    %vm4331 = vcmp.lt.s32.totalorder %v1339, 0
    %v4332 = vand.u32 %v1339, 2139095040
    %v4333 = vshrl.u32 %v4332, 23
    %v4334 = vsub.s32 %v4333, 127
    %v4335 = vand.u32 2147483647, %v1339
    %v4336 = vand.u32 %v4335, 8388607
    %v4337 = vor.u32 %v4336, 8388608
    %v4338 = vsub.s32 0, %v4337
    %v4339 = vadd.s32 %v4334, 1
    %vm4340 = vcmp.gt.s32.totalorder %v4339, 0
    %v4341 = vsel %vm4340, %v4339, 0
    %v4342 = vshrl.u32 %v4341, 5
    %v4343 = vand.u32 %v4341, 31
    %v4344 = vsub.s32 32, %v4343
    %v4345 = vshrl.u32 683565275, %v4344
    %v4346 = vshll.u32 683565275, %v4343
    %v4347 = vshrl.u32 2475754826, %v4344
    %v4348 = vor.u32 %v4346, %v4347
    %v4349 = vshll.u32 2475754826, %v4343
    %v4350 = vshrl.u32 2131351028, %v4344
    %v4351 = vor.u32 %v4349, %v4350
    %v4352 = vshll.u32 2131351028, %v4343
    %v4353 = vshrl.u32 2102212464, %v4344
    %v4354 = vor.u32 %v4352, %v4353
    %v4355 = vshll.u32 2102212464, %v4343
    %v4356 = vshrl.u32 920167782, %v4344
    %v4357 = vor.u32 %v4355, %v4356
    %v4358 = vshll.u32 920167782, %v4343
    %v4359 = vshrl.u32 1326507024, %v4344
    %v4360 = vor.u32 %v4358, %v4359
    %vm4361 = vcmp.lt.s32.totalorder %v4342, 1
    %vm4362 = vcmp.lt.s32.totalorder %v4342, 2
    %vm4363 = vcmp.lt.s32.totalorder %v4342, 3
    %vm4364 = vcmp.lt.s32.totalorder %v4342, 4
    %v4365 = vsel %vm4361, %v4345, %v4348
    %v4366 = vsel %vm4364, %v4354, 2102212464
    %v4367 = vsel %vm4363, %v4351, %v4366
    %v4368 = vsel %vm4362, %v4365, %v4367
    %v4369 = vsel %vm4361, %v4348, %v4351
    %v4370 = vsel %vm4364, %v4357, 920167782
    %v4371 = vsel %vm4363, %v4354, %v4370
    %v4372 = vsel %vm4362, %v4369, %v4371
    %v4373 = vsel %vm4361, %v4351, %v4354
    %v4374 = vsel %vm4364, %v4360, 1326507024
    %v4375 = vsel %vm4363, %v4357, %v4374
    %v4376 = vsel %vm4362, %v4373, %v4375
    %v4377 = vshll.u32 %v4337, 8
    %v4378 = vmul.u32.u64.compose %v4377, %v4376
    %v4379 = vextract.low.u32 %v4378
    %v4380 = vextract.high.u32 %v4378
    %v4381 = vmul.u32.u64.compose %v4377, %v4372
    %v4382 = vextract.low.u32 %v4381
    %v4383 = vextract.high.u32 %v4381
    %v4384 = vmul.u32 %v4377, %v4368
    %v4385 = vadd.s32 %v4380, %v4382
    %vm4386 = vc.u32 %v4380, %v4382
    %v4387 = vadd.s32 %v4383, 1
    %v4388 = vsel %vm4386, %v4387, %v4383
    %v4389 = vadd.s32 %v4384, %v4388
    %v4390 = vadd.s32 %v4389, 536870912
    %v4391 = vshrl.u32 %v4390, 30
    %v4392 = vshll.u32 %v4391, 30
    %v4393 = vsub.s32 %v4389, %v4392
    %vm4394 = vcmp.lt.s32.totalorder %v4393, 0
    %v4395 = vsub.s32 0, %v4393
    %v4396 = vsel %vm4394, %v4395, %v4393
    %v4397 = vclz %v4396
    %v4398 = vsub.s32 %v4397, 2
    %vm4399 = vcmp.gt.s32.totalorder 0, %v4398
    %v4400 = vsel %vm4399, 0, %v4398
    %v4401 = vsub.s32 32, %v4400
    %v4402 = vshll.u32 %v4393, %v4400
    %v4403 = vshrl.u32 %v4385, %v4401
    %v4404 = vor.u32 %v4402, %v4403
    %v4405 = vsub.s32 4294967266, %v4400
    %v4406 = vadd.s32 %v4405, 127
    %v4407 = vshll.u32 %v4406, 23
    %v4408 = vor.u32 4788187, %v4407
    %v4409 = vand.u32 2147483647, %v4408
    %v4411 = vcvt.s32.f32 %v4404
    %v4412 = vmul.f32 %v4411, %v4409
    %v4413 = vxor.u32 %v4412, 2147483648
    %v4414 = vsel %vm4331, %v4413, %v4412
    %v4415 = vsub.s32 4, %v4391
    %v4416 = vsel %vm4331, %v4415, %v4391
    %v4417 = vsel %vm4330, %v1339, %v4414
    %v4418 = vsel %vm4330, 0, %v4416
    %v4419 = vcosq.f32.pop %v4417
    %v4420 = vsinq.f32.pop %v4417
    %vm4421 = vweird.f32 %v1339
    %v4422 = vand.u32 %v4418, 3
    %vm4423 = vcmp.lt.s32.totalorder %v4422, 2
    %vm4424 = vcmp.eq.s32.totalorder %v4422, 0
    %v4425 = vxor.u32 %v4420, 2147483648
    %v4426 = vsel %vm4424, %v4419, %v4425
    %vm4427 = vcmp.eq.s32.totalorder %v4422, 2
    %v4428 = vxor.u32 %v4419, 2147483648
    %v4429 = vsel %vm4427, %v4428, %v4420
    %v4430 = vsel %vm4423, %v4426, %v4429
    %v4431 = vsel %vm4421, nan, %v4430
    %v4432 = vand.u32 2147483647, %v1340
    %vm4433 = vcmp.le.f32.partialorder %v4432, 0.7853982
    %vm4434 = vcmp.lt.s32.totalorder %v1340, 0
    %v4435 = vand.u32 %v1340, 2139095040
    %v4436 = vshrl.u32 %v4435, 23
    %v4437 = vsub.s32 %v4436, 127
    %v4438 = vand.u32 2147483647, %v1340
    %v4439 = vand.u32 %v4438, 8388607
    %v4440 = vor.u32 %v4439, 8388608
    %v4441 = vsub.s32 0, %v4440
    %v4442 = vadd.s32 %v4437, 1
    %vm4443 = vcmp.gt.s32.totalorder %v4442, 0
    %v4444 = vsel %vm4443, %v4442, 0
    %v4445 = vshrl.u32 %v4444, 5
    %v4446 = vand.u32 %v4444, 31
    %v4447 = vsub.s32 32, %v4446
    %v4448 = vshrl.u32 683565275, %v4447
    %v4449 = vshll.u32 683565275, %v4446
    %v4450 = vshrl.u32 2475754826, %v4447
    %v4451 = vor.u32 %v4449, %v4450
    %v4452 = vshll.u32 2475754826, %v4446
    %v4453 = vshrl.u32 2131351028, %v4447
    %v4454 = vor.u32 %v4452, %v4453
    %v4455 = vshll.u32 2131351028, %v4446
    %v4456 = vshrl.u32 2102212464, %v4447
    %v4457 = vor.u32 %v4455, %v4456
    %v4458 = vshll.u32 2102212464, %v4446
    %v4459 = vshrl.u32 920167782, %v4447
    %v4460 = vor.u32 %v4458, %v4459
    %v4461 = vshll.u32 920167782, %v4446
    %v4462 = vshrl.u32 1326507024, %v4447
    %v4463 = vor.u32 %v4461, %v4462
    %vm4464 = vcmp.lt.s32.totalorder %v4445, 1
    %vm4465 = vcmp.lt.s32.totalorder %v4445, 2
    %vm4466 = vcmp.lt.s32.totalorder %v4445, 3
    %vm4467 = vcmp.lt.s32.totalorder %v4445, 4
    %v4468 = vsel %vm4464, %v4448, %v4451
    %v4469 = vsel %vm4467, %v4457, 2102212464
    %v4470 = vsel %vm4466, %v4454, %v4469
    %v4471 = vsel %vm4465, %v4468, %v4470
    %v4472 = vsel %vm4464, %v4451, %v4454
    %v4473 = vsel %vm4467, %v4460, 920167782
    %v4474 = vsel %vm4466, %v4457, %v4473
    %v4475 = vsel %vm4465, %v4472, %v4474
    %v4476 = vsel %vm4464, %v4454, %v4457
    %v4477 = vsel %vm4467, %v4463, 1326507024
    %v4478 = vsel %vm4466, %v4460, %v4477
    %v4479 = vsel %vm4465, %v4476, %v4478
    %v4480 = vshll.u32 %v4440, 8
    %v4481 = vmul.u32.u64.compose %v4480, %v4479
    %v4482 = vextract.low.u32 %v4481
    %v4483 = vextract.high.u32 %v4481
    %v4484 = vmul.u32.u64.compose %v4480, %v4475
    %v4485 = vextract.low.u32 %v4484
    %v4486 = vextract.high.u32 %v4484
    %v4487 = vmul.u32 %v4480, %v4471
    %v4488 = vadd.s32 %v4483, %v4485
    %vm4489 = vc.u32 %v4483, %v4485
    %v4490 = vadd.s32 %v4486, 1
    %v4491 = vsel %vm4489, %v4490, %v4486
    %v4492 = vadd.s32 %v4487, %v4491
    %v4493 = vadd.s32 %v4492, 536870912
    %v4494 = vshrl.u32 %v4493, 30
    %v4495 = vshll.u32 %v4494, 30
    %v4496 = vsub.s32 %v4492, %v4495
    %vm4497 = vcmp.lt.s32.totalorder %v4496, 0
    %v4498 = vsub.s32 0, %v4496
    %v4499 = vsel %vm4497, %v4498, %v4496
    %v4500 = vclz %v4499
    %v4501 = vsub.s32 %v4500, 2
    %vm4502 = vcmp.gt.s32.totalorder 0, %v4501
    %v4503 = vsel %vm4502, 0, %v4501
    %v4504 = vsub.s32 32, %v4503
    %v4505 = vshll.u32 %v4496, %v4503
    %v4506 = vshrl.u32 %v4488, %v4504
    %v4507 = vor.u32 %v4505, %v4506
    %v4508 = vsub.s32 4294967266, %v4503
    %v4509 = vadd.s32 %v4508, 127
    %v4510 = vshll.u32 %v4509, 23
    %v4511 = vor.u32 4788187, %v4510
    %v4512 = vand.u32 2147483647, %v4511
    %v4514 = vcvt.s32.f32 %v4507
    %v4515 = vmul.f32 %v4514, %v4512
    %v4516 = vxor.u32 %v4515, 2147483648
    %v4517 = vsel %vm4434, %v4516, %v4515
    %v4518 = vsub.s32 4, %v4494
    %v4519 = vsel %vm4434, %v4518, %v4494
    %v4520 = vsel %vm4433, %v1340, %v4517
    %v4521 = vsel %vm4433, 0, %v4519
    %v4522 = vcosq.f32.pop %v4520
    %v4523 = vsinq.f32.pop %v4520
    %vm4524 = vweird.f32 %v1340
    %v4525 = vand.u32 %v4521, 3
    %vm4526 = vcmp.lt.s32.totalorder %v4525, 2
    %vm4527 = vcmp.eq.s32.totalorder %v4525, 0
    %v4528 = vxor.u32 %v4523, 2147483648
    %v4529 = vsel %vm4527, %v4522, %v4528
    %vm4530 = vcmp.eq.s32.totalorder %v4525, 2
    %v4531 = vxor.u32 %v4522, 2147483648
    %v4532 = vsel %vm4530, %v4531, %v4523
    %v4533 = vsel %vm4526, %v4529, %v4532
    %v4534 = vsel %vm4524, nan, %v4533
    %v4535 = vand.u32 2147483647, %v1341
    %vm4536 = vcmp.le.f32.partialorder %v4535, 0.7853982
    %vm4537 = vcmp.lt.s32.totalorder %v1341, 0
    %v4538 = vand.u32 %v1341, 2139095040
    %v4539 = vshrl.u32 %v4538, 23
    %v4540 = vsub.s32 %v4539, 127
    %v4541 = vand.u32 2147483647, %v1341
    %v4542 = vand.u32 %v4541, 8388607
    %v4543 = vor.u32 %v4542, 8388608
    %v4544 = vsub.s32 0, %v4543
    %v4545 = vadd.s32 %v4540, 1
    %vm4546 = vcmp.gt.s32.totalorder %v4545, 0
    %v4547 = vsel %vm4546, %v4545, 0
    %v4548 = vshrl.u32 %v4547, 5
    %v4549 = vand.u32 %v4547, 31
    %v4550 = vsub.s32 32, %v4549
    %v4551 = vshrl.u32 683565275, %v4550
    %v4552 = vshll.u32 683565275, %v4549
    %v4553 = vshrl.u32 2475754826, %v4550
    %v4554 = vor.u32 %v4552, %v4553
    %v4555 = vshll.u32 2475754826, %v4549
    %v4556 = vshrl.u32 2131351028, %v4550
    %v4557 = vor.u32 %v4555, %v4556
    %v4558 = vshll.u32 2131351028, %v4549
    %v4559 = vshrl.u32 2102212464, %v4550
    %v4560 = vor.u32 %v4558, %v4559
    %v4561 = vshll.u32 2102212464, %v4549
    %v4562 = vshrl.u32 920167782, %v4550
    %v4563 = vor.u32 %v4561, %v4562
    %v4564 = vshll.u32 920167782, %v4549
    %v4565 = vshrl.u32 1326507024, %v4550
    %v4566 = vor.u32 %v4564, %v4565
    %vm4567 = vcmp.lt.s32.totalorder %v4548, 1
    %vm4568 = vcmp.lt.s32.totalorder %v4548, 2
    %vm4569 = vcmp.lt.s32.totalorder %v4548, 3
    %vm4570 = vcmp.lt.s32.totalorder %v4548, 4
    %v4571 = vsel %vm4567, %v4551, %v4554
    %v4572 = vsel %vm4570, %v4560, 2102212464
    %v4573 = vsel %vm4569, %v4557, %v4572
    %v4574 = vsel %vm4568, %v4571, %v4573
    %v4575 = vsel %vm4567, %v4554, %v4557
    %v4576 = vsel %vm4570, %v4563, 920167782
    %v4577 = vsel %vm4569, %v4560, %v4576
    %v4578 = vsel %vm4568, %v4575, %v4577
    %v4579 = vsel %vm4567, %v4557, %v4560
    %v4580 = vsel %vm4570, %v4566, 1326507024
    %v4581 = vsel %vm4569, %v4563, %v4580
    %v4582 = vsel %vm4568, %v4579, %v4581
    %v4583 = vshll.u32 %v4543, 8
    %v4584 = vmul.u32.u64.compose %v4583, %v4582
    %v4585 = vextract.low.u32 %v4584
    %v4586 = vextract.high.u32 %v4584
    %v4587 = vmul.u32.u64.compose %v4583, %v4578
    %v4588 = vextract.low.u32 %v4587
    %v4589 = vextract.high.u32 %v4587
    %v4590 = vmul.u32 %v4583, %v4574
    %v4591 = vadd.s32 %v4586, %v4588
    %vm4592 = vc.u32 %v4586, %v4588
    %v4593 = vadd.s32 %v4589, 1
    %v4594 = vsel %vm4592, %v4593, %v4589
    %v4595 = vadd.s32 %v4590, %v4594
    %v4596 = vadd.s32 %v4595, 536870912
    %v4597 = vshrl.u32 %v4596, 30
    %v4598 = vshll.u32 %v4597, 30
    %v4599 = vsub.s32 %v4595, %v4598
    %vm4600 = vcmp.lt.s32.totalorder %v4599, 0
    %v4601 = vsub.s32 0, %v4599
    %v4602 = vsel %vm4600, %v4601, %v4599
    %v4603 = vclz %v4602
    %v4604 = vsub.s32 %v4603, 2
    %vm4605 = vcmp.gt.s32.totalorder 0, %v4604
    %v4606 = vsel %vm4605, 0, %v4604
    %v4607 = vsub.s32 32, %v4606
    %v4608 = vshll.u32 %v4599, %v4606
    %v4609 = vshrl.u32 %v4591, %v4607
    %v4610 = vor.u32 %v4608, %v4609
    %v4611 = vsub.s32 4294967266, %v4606
    %v4612 = vadd.s32 %v4611, 127
    %v4613 = vshll.u32 %v4612, 23
    %v4614 = vor.u32 4788187, %v4613
    %v4615 = vand.u32 2147483647, %v4614
    %v4617 = vcvt.s32.f32 %v4610
    %v4618 = vmul.f32 %v4617, %v4615
    %v4619 = vxor.u32 %v4618, 2147483648
    %v4620 = vsel %vm4537, %v4619, %v4618
    %v4621 = vsub.s32 4, %v4597
    %v4622 = vsel %vm4537, %v4621, %v4597
    %v4623 = vsel %vm4536, %v1341, %v4620
    %v4624 = vsel %vm4536, 0, %v4622
    %v4625 = vcosq.f32.pop %v4623
    %v4626 = vsinq.f32.pop %v4623
    %vm4627 = vweird.f32 %v1341
    %v4628 = vand.u32 %v4624, 3
    %vm4629 = vcmp.lt.s32.totalorder %v4628, 2
    %vm4630 = vcmp.eq.s32.totalorder %v4628, 0
    %v4631 = vxor.u32 %v4626, 2147483648
    %v4632 = vsel %vm4630, %v4625, %v4631
    %vm4633 = vcmp.eq.s32.totalorder %v4628, 2
    %v4634 = vxor.u32 %v4625, 2147483648
    %v4635 = vsel %vm4633, %v4634, %v4626
    %v4636 = vsel %vm4629, %v4632, %v4635
    %v4637 = vsel %vm4627, nan, %v4636
    %v4638 = vadd.f32 %v1444, 1.0
    %v4639 = vadd.f32 %v1547, 1.0
    %v4640 = vadd.f32 %v1650, 1.0
    %v4641 = vadd.f32 %v1753, 1.0
    %v4642 = vadd.f32 %v1856, 1.0
    %v4643 = vadd.f32 %v1959, 1.0
    %v4644 = vadd.f32 %v2062, 1.0
    %v4645 = vadd.f32 %v2165, 1.0
    %v4646 = vadd.f32 %v2268, 1.0
    %v4647 = vadd.f32 %v2371, 1.0
    %v4648 = vadd.f32 %v2474, 1.0
    %v4649 = vadd.f32 %v2577, 1.0
    %v4650 = vadd.f32 %v2680, 1.0
    %v4651 = vadd.f32 %v2783, 1.0
    %v4652 = vadd.f32 %v2886, 1.0
    %v4653 = vadd.f32 %v2989, 1.0
    %v4654 = vadd.f32 %v3092, 1.0
    %v4655 = vadd.f32 %v3195, 1.0
    %v4656 = vadd.f32 %v3298, 1.0
    %v4657 = vadd.f32 %v3401, 1.0
    %v4658 = vadd.f32 %v3504, 1.0
    %v4659 = vadd.f32 %v3607, 1.0
    %v4660 = vadd.f32 %v3710, 1.0
    %v4661 = vadd.f32 %v3813, 1.0
    %v4662 = vadd.f32 %v3916, 1.0
    %v4663 = vadd.f32 %v4019, 1.0
    %v4664 = vadd.f32 %v4122, 1.0
    %v4665 = vadd.f32 %v4225, 1.0
    %v4666 = vadd.f32 %v4328, 1.0
    %v4667 = vadd.f32 %v4431, 1.0
    %v4668 = vadd.f32 %v4534, 1.0
    %v4669 = vadd.f32 %v4637, 1.0
    %v4670 = vmul.f32 %v4638, 0.5
    %v4671 = vmul.f32 %v4639, 0.5
    %v4672 = vmul.f32 %v4640, 0.5
    %v4673 = vmul.f32 %v4641, 0.5
    %v4674 = vmul.f32 %v4642, 0.5
    %v4675 = vmul.f32 %v4643, 0.5
    %v4676 = vmul.f32 %v4644, 0.5
    %v4677 = vmul.f32 %v4645, 0.5
    %v4678 = vmul.f32 %v4646, 0.5
    %v4679 = vmul.f32 %v4647, 0.5
    %v4680 = vmul.f32 %v4648, 0.5
    %v4681 = vmul.f32 %v4649, 0.5
    %v4682 = vmul.f32 %v4650, 0.5
    %v4683 = vmul.f32 %v4651, 0.5
    %v4684 = vmul.f32 %v4652, 0.5
    %v4685 = vmul.f32 %v4653, 0.5
    %v4686 = vmul.f32 %v4654, 0.5
    %v4687 = vmul.f32 %v4655, 0.5
    %v4688 = vmul.f32 %v4656, 0.5
    %v4689 = vmul.f32 %v4657, 0.5
    %v4690 = vmul.f32 %v4658, 0.5
    %v4691 = vmul.f32 %v4659, 0.5
    %v4692 = vmul.f32 %v4660, 0.5
    %v4693 = vmul.f32 %v4661, 0.5
    %v4694 = vmul.f32 %v4662, 0.5
    %v4695 = vmul.f32 %v4663, 0.5
    %v4696 = vmul.f32 %v4664, 0.5
    %v4697 = vmul.f32 %v4665, 0.5
    %v4698 = vmul.f32 %v4666, 0.5
    %v4699 = vmul.f32 %v4667, 0.5
    %v4700 = vmul.f32 %v4668, 0.5
    %v4701 = vmul.f32 %v4669, 0.5
    %4703 = vset.pattern.permute.xlu0 0
    %4704 = vperm.xlu0 %4703, %v4670
    %v4705 = vpop.permute.xlu0 %4704
    %4708 = vset.pattern.permute.xlu0 0
    %4709 = vperm.xlu0 %4708, %v4671
    %v4710 = vpop.permute.xlu0 %4709
    %4713 = vset.pattern.permute.xlu0 0
    %4714 = vperm.xlu0 %4713, %v4672
    %v4715 = vpop.permute.xlu0 %4714
    %4718 = vset.pattern.permute.xlu0 0
    %4719 = vperm.xlu0 %4718, %v4673
    %v4720 = vpop.permute.xlu0 %4719
    %4723 = vset.pattern.permute.xlu0 0
    %4724 = vperm.xlu0 %4723, %v4674
    %v4725 = vpop.permute.xlu0 %4724
    %4728 = vset.pattern.permute.xlu0 0
    %4729 = vperm.xlu0 %4728, %v4675
    %v4730 = vpop.permute.xlu0 %4729
    %4733 = vset.pattern.permute.xlu0 0
    %4734 = vperm.xlu0 %4733, %v4676
    %v4735 = vpop.permute.xlu0 %4734
    %4738 = vset.pattern.permute.xlu0 0
    %4739 = vperm.xlu0 %4738, %v4677
    %v4740 = vpop.permute.xlu0 %4739
    %4743 = vset.pattern.permute.xlu0 0
    %4744 = vperm.xlu0 %4743, %v4678
    %v4745 = vpop.permute.xlu0 %4744
    %4748 = vset.pattern.permute.xlu0 0
    %4749 = vperm.xlu0 %4748, %v4679
    %v4750 = vpop.permute.xlu0 %4749
    %4753 = vset.pattern.permute.xlu0 0
    %4754 = vperm.xlu0 %4753, %v4680
    %v4755 = vpop.permute.xlu0 %4754
    %4758 = vset.pattern.permute.xlu0 0
    %4759 = vperm.xlu0 %4758, %v4681
    %v4760 = vpop.permute.xlu0 %4759
    %4763 = vset.pattern.permute.xlu0 0
    %4764 = vperm.xlu0 %4763, %v4682
    %v4765 = vpop.permute.xlu0 %4764
    %4768 = vset.pattern.permute.xlu0 0
    %4769 = vperm.xlu0 %4768, %v4683
    %v4770 = vpop.permute.xlu0 %4769
    %4773 = vset.pattern.permute.xlu0 0
    %4774 = vperm.xlu0 %4773, %v4684
    %v4775 = vpop.permute.xlu0 %4774
    %4778 = vset.pattern.permute.xlu0 0
    %4779 = vperm.xlu0 %4778, %v4685
    %v4780 = vpop.permute.xlu0 %4779
    %4783 = vset.pattern.permute.xlu0 0
    %4784 = vperm.xlu0 %4783, %v4686
    %v4785 = vpop.permute.xlu0 %4784
    %4788 = vset.pattern.permute.xlu0 0
    %4789 = vperm.xlu0 %4788, %v4687
    %v4790 = vpop.permute.xlu0 %4789
    %4793 = vset.pattern.permute.xlu0 0
    %4794 = vperm.xlu0 %4793, %v4688
    %v4795 = vpop.permute.xlu0 %4794
    %4798 = vset.pattern.permute.xlu0 0
    %4799 = vperm.xlu0 %4798, %v4689
    %v4800 = vpop.permute.xlu0 %4799
    %4803 = vset.pattern.permute.xlu0 0
    %4804 = vperm.xlu0 %4803, %v4690
    %v4805 = vpop.permute.xlu0 %4804
    %4808 = vset.pattern.permute.xlu0 0
    %4809 = vperm.xlu0 %4808, %v4691
    %v4810 = vpop.permute.xlu0 %4809
    %4813 = vset.pattern.permute.xlu0 0
    %4814 = vperm.xlu0 %4813, %v4692
    %v4815 = vpop.permute.xlu0 %4814
    %4818 = vset.pattern.permute.xlu0 0
    %4819 = vperm.xlu0 %4818, %v4693
    %v4820 = vpop.permute.xlu0 %4819
    %4823 = vset.pattern.permute.xlu0 0
    %4824 = vperm.xlu0 %4823, %v4694
    %v4825 = vpop.permute.xlu0 %4824
    %4828 = vset.pattern.permute.xlu0 0
    %4829 = vperm.xlu0 %4828, %v4695
    %v4830 = vpop.permute.xlu0 %4829
    %4833 = vset.pattern.permute.xlu0 0
    %4834 = vperm.xlu0 %4833, %v4696
    %v4835 = vpop.permute.xlu0 %4834
    %4838 = vset.pattern.permute.xlu0 0
    %4839 = vperm.xlu0 %4838, %v4697
    %v4840 = vpop.permute.xlu0 %4839
    %4843 = vset.pattern.permute.xlu0 0
    %4844 = vperm.xlu0 %4843, %v4698
    %v4845 = vpop.permute.xlu0 %4844
    %4848 = vset.pattern.permute.xlu0 0
    %4849 = vperm.xlu0 %4848, %v4699
    %v4850 = vpop.permute.xlu0 %4849
    %4853 = vset.pattern.permute.xlu0 0
    %4854 = vperm.xlu0 %4853, %v4700
    %v4855 = vpop.permute.xlu0 %4854
    %4858 = vset.pattern.permute.xlu0 0
    %4859 = vperm.xlu0 %4858, %v4701
    %v4860 = vpop.permute.xlu0 %4859
    %v4862 = vmul.f32 %v1120, %v4705
    %v4863 = vmul.f32 %v1125, %v4710
    %v4864 = vmul.f32 %v1130, %v4715
    %v4865 = vmul.f32 %v1135, %v4720
    %v4866 = vmul.f32 %v1140, %v4725
    %v4867 = vmul.f32 %v1145, %v4730
    %v4868 = vmul.f32 %v1150, %v4735
    %v4869 = vmul.f32 %v1155, %v4740
    %v4870 = vmul.f32 %v1160, %v4745
    %v4871 = vmul.f32 %v1165, %v4750
    %v4872 = vmul.f32 %v1170, %v4755
    %v4873 = vmul.f32 %v1175, %v4760
    %v4874 = vmul.f32 %v1180, %v4765
    %v4875 = vmul.f32 %v1185, %v4770
    %v4876 = vmul.f32 %v1190, %v4775
    %v4877 = vmul.f32 %v1195, %v4780
    %v4878 = vmul.f32 %v1200, %v4785
    %v4879 = vmul.f32 %v1205, %v4790
    %v4880 = vmul.f32 %v1210, %v4795
    %v4881 = vmul.f32 %v1215, %v4800
    %v4882 = vmul.f32 %v1220, %v4805
    %v4883 = vmul.f32 %v1225, %v4810
    %v4884 = vmul.f32 %v1230, %v4815
    %v4885 = vmul.f32 %v1235, %v4820
    %v4886 = vmul.f32 %v1240, %v4825
    %v4887 = vmul.f32 %v1245, %v4830
    %v4888 = vmul.f32 %v1250, %v4835
    %v4889 = vmul.f32 %v1255, %v4840
    %v4890 = vmul.f32 %v1260, %v4845
    %v4891 = vmul.f32 %v1265, %v4850
    %v4892 = vmul.f32 %v1270, %v4855
    %v4893 = vmul.f32 %v1275, %v4860
    %v4894 = vlaneseq
    %v4895 = vand.u32 %v4894, 127
    %v4896 = vld [vmem:[%s1] sm:$0xff]
    %v4897 = vld [vmem:[%s1 + $0x8] sm:$0xff]
    %v4898 = vld [vmem:[%s1 + $0x10] sm:$0xff]
    %v4899 = vld [vmem:[%s1 + $0x18] sm:$0xff]
    %v4900 = vld [vmem:[%s1 + $0x20] sm:$0xff]
    %v4901 = vld [vmem:[%s1 + $0x28] sm:$0xff]
    %v4902 = vld [vmem:[%s1 + $0x30] sm:$0xff]
    %v4903 = vld [vmem:[%s1 + $0x38] sm:$0xff]
    %v4904 = vld [vmem:[%s1 + $0x40] sm:$0xff]
    %v4905 = vld [vmem:[%s1 + $0x48] sm:$0xff]
    %v4906 = vld [vmem:[%s1 + $0x50] sm:$0xff]
    %v4907 = vld [vmem:[%s1 + $0x58] sm:$0xff]
    %v4908 = vld [vmem:[%s1 + $0x60] sm:$0xff]
    %v4909 = vld [vmem:[%s1 + $0x68] sm:$0xff]
    %v4910 = vld [vmem:[%s1 + $0x70] sm:$0xff]
    %v4911 = vld [vmem:[%s1 + $0x78] sm:$0xff]
    %v4912 = vld [vmem:[%s1 + $0x80] sm:$0xff]
    %v4913 = vld [vmem:[%s1 + $0x88] sm:$0xff]
    %v4914 = vld [vmem:[%s1 + $0x90] sm:$0xff]
    %v4915 = vld [vmem:[%s1 + $0x98] sm:$0xff]
    %v4916 = vld [vmem:[%s1 + $0xa0] sm:$0xff]
    %v4917 = vld [vmem:[%s1 + $0xa8] sm:$0xff]
    %v4918 = vld [vmem:[%s1 + $0xb0] sm:$0xff]
    %v4919 = vld [vmem:[%s1 + $0xb8] sm:$0xff]
    %v4920 = vld [vmem:[%s1 + $0xc0] sm:$0xff]
    %v4921 = vld [vmem:[%s1 + $0xc8] sm:$0xff]
    %v4922 = vld [vmem:[%s1 + $0xd0] sm:$0xff]
    %v4923 = vld [vmem:[%s1 + $0xd8] sm:$0xff]
    %v4924 = vld [vmem:[%s1 + $0xe0] sm:$0xff]
    %v4925 = vld [vmem:[%s1 + $0xe8] sm:$0xff]
    %v4926 = vld [vmem:[%s1 + $0xf0] sm:$0xff]
    %v4927 = vld [vmem:[%s1 + $0xf8] sm:$0xff]
    %4928 = vset.pattern.permute.xlu0 0
    %4929 = vperm.xlu0 %4928, %v4896
    %v4930 = vpop.permute.xlu0 %4929
    %4931 = vset.pattern.permute.xlu0 0
    %4932 = vperm.xlu0 %4931, %v4897
    %v4933 = vpop.permute.xlu0 %4932
    %4934 = vset.pattern.permute.xlu0 0
    %4935 = vperm.xlu0 %4934, %v4898
    %v4936 = vpop.permute.xlu0 %4935
    %4937 = vset.pattern.permute.xlu0 0
    %4938 = vperm.xlu0 %4937, %v4899
    %v4939 = vpop.permute.xlu0 %4938
    %4940 = vset.pattern.permute.xlu0 0
    %4941 = vperm.xlu0 %4940, %v4900
    %v4942 = vpop.permute.xlu0 %4941
    %4943 = vset.pattern.permute.xlu0 0
    %4944 = vperm.xlu0 %4943, %v4901
    %v4945 = vpop.permute.xlu0 %4944
    %4946 = vset.pattern.permute.xlu0 0
    %4947 = vperm.xlu0 %4946, %v4902
    %v4948 = vpop.permute.xlu0 %4947
    %4949 = vset.pattern.permute.xlu0 0
    %4950 = vperm.xlu0 %4949, %v4903
    %v4951 = vpop.permute.xlu0 %4950
    %4952 = vset.pattern.permute.xlu0 0
    %4953 = vperm.xlu0 %4952, %v4904
    %v4954 = vpop.permute.xlu0 %4953
    %4955 = vset.pattern.permute.xlu0 0
    %4956 = vperm.xlu0 %4955, %v4905
    %v4957 = vpop.permute.xlu0 %4956
    %4958 = vset.pattern.permute.xlu0 0
    %4959 = vperm.xlu0 %4958, %v4906
    %v4960 = vpop.permute.xlu0 %4959
    %4961 = vset.pattern.permute.xlu0 0
    %4962 = vperm.xlu0 %4961, %v4907
    %v4963 = vpop.permute.xlu0 %4962
    %4964 = vset.pattern.permute.xlu0 0
    %4965 = vperm.xlu0 %4964, %v4908
    %v4966 = vpop.permute.xlu0 %4965
    %4967 = vset.pattern.permute.xlu0 0
    %4968 = vperm.xlu0 %4967, %v4909
    %v4969 = vpop.permute.xlu0 %4968
    %4970 = vset.pattern.permute.xlu0 0
    %4971 = vperm.xlu0 %4970, %v4910
    %v4972 = vpop.permute.xlu0 %4971
    %4973 = vset.pattern.permute.xlu0 0
    %4974 = vperm.xlu0 %4973, %v4911
    %v4975 = vpop.permute.xlu0 %4974
    %4976 = vset.pattern.permute.xlu0 0
    %4977 = vperm.xlu0 %4976, %v4912
    %v4978 = vpop.permute.xlu0 %4977
    %4979 = vset.pattern.permute.xlu0 0
    %4980 = vperm.xlu0 %4979, %v4913
    %v4981 = vpop.permute.xlu0 %4980
    %4982 = vset.pattern.permute.xlu0 0
    %4983 = vperm.xlu0 %4982, %v4914
    %v4984 = vpop.permute.xlu0 %4983
    %4985 = vset.pattern.permute.xlu0 0
    %4986 = vperm.xlu0 %4985, %v4915
    %v4987 = vpop.permute.xlu0 %4986
    %4988 = vset.pattern.permute.xlu0 0
    %4989 = vperm.xlu0 %4988, %v4916
    %v4990 = vpop.permute.xlu0 %4989
    %4991 = vset.pattern.permute.xlu0 0
    %4992 = vperm.xlu0 %4991, %v4917
    %v4993 = vpop.permute.xlu0 %4992
    %4994 = vset.pattern.permute.xlu0 0
    %4995 = vperm.xlu0 %4994, %v4918
    %v4996 = vpop.permute.xlu0 %4995
    %4997 = vset.pattern.permute.xlu0 0
    %4998 = vperm.xlu0 %4997, %v4919
    %v4999 = vpop.permute.xlu0 %4998
    %5000 = vset.pattern.permute.xlu0 0
    %5001 = vperm.xlu0 %5000, %v4920
    %v5002 = vpop.permute.xlu0 %5001
    %5003 = vset.pattern.permute.xlu0 0
    %5004 = vperm.xlu0 %5003, %v4921
    %v5005 = vpop.permute.xlu0 %5004
    %5006 = vset.pattern.permute.xlu0 0
    %5007 = vperm.xlu0 %5006, %v4922
    %v5008 = vpop.permute.xlu0 %5007
    %5009 = vset.pattern.permute.xlu0 0
    %5010 = vperm.xlu0 %5009, %v4923
    %v5011 = vpop.permute.xlu0 %5010
    %5012 = vset.pattern.permute.xlu0 0
    %5013 = vperm.xlu0 %5012, %v4924
    %v5014 = vpop.permute.xlu0 %5013
    %5015 = vset.pattern.permute.xlu0 0
    %5016 = vperm.xlu0 %5015, %v4925
    %v5017 = vpop.permute.xlu0 %5016
    %5018 = vset.pattern.permute.xlu0 0
    %5019 = vperm.xlu0 %5018, %v4926
    %v5020 = vpop.permute.xlu0 %5019
    %5021 = vset.pattern.permute.xlu0 0
    %5022 = vperm.xlu0 %5021, %v4927
    %v5023 = vpop.permute.xlu0 %5022
    %vm5024 = vcmp.eq.s32.totalorder %v4895, %v4930
    %vm5025 = vcmp.eq.s32.totalorder %v4895, %v4933
    %vm5026 = vcmp.eq.s32.totalorder %v4895, %v4936
    %vm5027 = vcmp.eq.s32.totalorder %v4895, %v4939
    %vm5028 = vcmp.eq.s32.totalorder %v4895, %v4942
    %vm5029 = vcmp.eq.s32.totalorder %v4895, %v4945
    %vm5030 = vcmp.eq.s32.totalorder %v4895, %v4948
    %vm5031 = vcmp.eq.s32.totalorder %v4895, %v4951
    %vm5032 = vcmp.eq.s32.totalorder %v4895, %v4954
    %vm5033 = vcmp.eq.s32.totalorder %v4895, %v4957
    %vm5034 = vcmp.eq.s32.totalorder %v4895, %v4960
    %vm5035 = vcmp.eq.s32.totalorder %v4895, %v4963
    %vm5036 = vcmp.eq.s32.totalorder %v4895, %v4966
    %vm5037 = vcmp.eq.s32.totalorder %v4895, %v4969
    %vm5038 = vcmp.eq.s32.totalorder %v4895, %v4972
    %vm5039 = vcmp.eq.s32.totalorder %v4895, %v4975
    %vm5040 = vcmp.eq.s32.totalorder %v4895, %v4978
    %vm5041 = vcmp.eq.s32.totalorder %v4895, %v4981
    %vm5042 = vcmp.eq.s32.totalorder %v4895, %v4984
    %vm5043 = vcmp.eq.s32.totalorder %v4895, %v4987
    %vm5044 = vcmp.eq.s32.totalorder %v4895, %v4990
    %vm5045 = vcmp.eq.s32.totalorder %v4895, %v4993
    %vm5046 = vcmp.eq.s32.totalorder %v4895, %v4996
    %vm5047 = vcmp.eq.s32.totalorder %v4895, %v4999
    %vm5048 = vcmp.eq.s32.totalorder %v4895, %v5002
    %vm5049 = vcmp.eq.s32.totalorder %v4895, %v5005
    %vm5050 = vcmp.eq.s32.totalorder %v4895, %v5008
    %vm5051 = vcmp.eq.s32.totalorder %v4895, %v5011
    %vm5052 = vcmp.eq.s32.totalorder %v4895, %v5014
    %vm5053 = vcmp.eq.s32.totalorder %v4895, %v5017
    %vm5054 = vcmp.eq.s32.totalorder %v4895, %v5020
    %vm5055 = vcmp.eq.s32.totalorder %v4895, %v5023
    %v5056 = vsel %vm5024, 1, 0
    %v5057 = vsel %vm5025, 1, 0
    %v5058 = vsel %vm5026, 1, 0
    %v5059 = vsel %vm5027, 1, 0
    %v5060 = vsel %vm5028, 1, 0
    %v5061 = vsel %vm5029, 1, 0
    %v5062 = vsel %vm5030, 1, 0
    %v5063 = vsel %vm5031, 1, 0
    %v5064 = vsel %vm5032, 1, 0
    %v5065 = vsel %vm5033, 1, 0
    %v5066 = vsel %vm5034, 1, 0
    %v5067 = vsel %vm5035, 1, 0
    %v5068 = vsel %vm5036, 1, 0
    %v5069 = vsel %vm5037, 1, 0
    %v5070 = vsel %vm5038, 1, 0
    %v5071 = vsel %vm5039, 1, 0
    %v5072 = vsel %vm5040, 1, 0
    %v5073 = vsel %vm5041, 1, 0
    %v5074 = vsel %vm5042, 1, 0
    %v5075 = vsel %vm5043, 1, 0
    %v5076 = vsel %vm5044, 1, 0
    %v5077 = vsel %vm5045, 1, 0
    %v5078 = vsel %vm5046, 1, 0
    %v5079 = vsel %vm5047, 1, 0
    %v5080 = vsel %vm5048, 1, 0
    %v5081 = vsel %vm5049, 1, 0
    %v5082 = vsel %vm5050, 1, 0
    %v5083 = vsel %vm5051, 1, 0
    %v5084 = vsel %vm5052, 1, 0
    %v5085 = vsel %vm5053, 1, 0
    %v5086 = vsel %vm5054, 1, 0
    %v5087 = vsel %vm5055, 1, 0
    %v5088 = vcvt.s32.f32 %v5056
    %v5089 = vcvt.s32.f32 %v5057
    %v5090 = vcvt.s32.f32 %v5058
    %v5091 = vcvt.s32.f32 %v5059
    %v5092 = vcvt.s32.f32 %v5060
    %v5093 = vcvt.s32.f32 %v5061
    %v5094 = vcvt.s32.f32 %v5062
    %v5095 = vcvt.s32.f32 %v5063
    %v5096 = vcvt.s32.f32 %v5064
    %v5097 = vcvt.s32.f32 %v5065
    %v5098 = vcvt.s32.f32 %v5066
    %v5099 = vcvt.s32.f32 %v5067
    %v5100 = vcvt.s32.f32 %v5068
    %v5101 = vcvt.s32.f32 %v5069
    %v5102 = vcvt.s32.f32 %v5070
    %v5103 = vcvt.s32.f32 %v5071
    %v5104 = vcvt.s32.f32 %v5072
    %v5105 = vcvt.s32.f32 %v5073
    %v5106 = vcvt.s32.f32 %v5074
    %v5107 = vcvt.s32.f32 %v5075
    %v5108 = vcvt.s32.f32 %v5076
    %v5109 = vcvt.s32.f32 %v5077
    %v5110 = vcvt.s32.f32 %v5078
    %v5111 = vcvt.s32.f32 %v5079
    %v5112 = vcvt.s32.f32 %v5080
    %v5113 = vcvt.s32.f32 %v5081
    %v5114 = vcvt.s32.f32 %v5082
    %v5115 = vcvt.s32.f32 %v5083
    %v5116 = vcvt.s32.f32 %v5084
    %v5117 = vcvt.s32.f32 %v5085
    %v5118 = vcvt.s32.f32 %v5086
    %v5119 = vcvt.s32.f32 %v5087
    %v5120 = vld [vmem:[%s0] sm:$0xff]
    %v5121 = vld [vmem:[%s0 + $0x8] sm:$0xff]
    %v5122 = vld [vmem:[%s0 + $0x10] sm:$0xff]
    %v5123 = vld [vmem:[%s0 + $0x18] sm:$0xff]
    %v5124 = vld [vmem:[%s0 + $0x20] sm:$0xff]
    %v5125 = vld [vmem:[%s0 + $0x28] sm:$0xff]
    %v5126 = vld [vmem:[%s0 + $0x30] sm:$0xff]
    %v5127 = vld [vmem:[%s0 + $0x38] sm:$0xff]
    %v5128 = vld [vmem:[%s0 + $0x40] sm:$0xff]
    %v5129 = vld [vmem:[%s0 + $0x48] sm:$0xff]
    %v5130 = vld [vmem:[%s0 + $0x50] sm:$0xff]
    %v5131 = vld [vmem:[%s0 + $0x58] sm:$0xff]
    %v5132 = vld [vmem:[%s0 + $0x60] sm:$0xff]
    %v5133 = vld [vmem:[%s0 + $0x68] sm:$0xff]
    %v5134 = vld [vmem:[%s0 + $0x70] sm:$0xff]
    %v5135 = vld [vmem:[%s0 + $0x78] sm:$0xff]
    %5136 = vmatprep.subr.mxu0 0.0
    %5137 = vmatpush1.msra.mxu0 %v5120
    %5138 = vmatprep.subr.mxu0 0.0
    %5139 = vmatpush1.msra.mxu0 %v5121
    %5140 = vmatprep.subr.mxu0 0.0
    %5141 = vmatpush1.msra.mxu0 %v5122
    %5142 = vmatprep.subr.mxu0 0.0
    %5143 = vmatpush1.msra.mxu0 %v5123
    %5144 = vmatprep.subr.mxu0 0.0
    %5145 = vmatpush1.msra.mxu0 %v5124
    %5146 = vmatprep.subr.mxu0 0.0
    %5147 = vmatpush1.msra.mxu0 %v5125
    %5148 = vmatprep.subr.mxu0 0.0
    %5149 = vmatpush1.msra.mxu0 %v5126
    %5150 = vmatprep.subr.mxu0 0.0
    %5151 = vmatpush1.msra.mxu0 %v5127
    %5152 = vmatprep.subr.mxu0 0.0
    %5153 = vmatpush1.msra.mxu0 %v5128
    %5154 = vmatprep.subr.mxu0 0.0
    %5155 = vmatpush1.msra.mxu0 %v5129
    %5156 = vmatprep.subr.mxu0 0.0
    %5157 = vmatpush1.msra.mxu0 %v5130
    %5158 = vmatprep.subr.mxu0 0.0
    %5159 = vmatpush1.msra.mxu0 %v5131
    %5160 = vmatprep.subr.mxu0 0.0
    %5161 = vmatpush1.msra.mxu0 %v5132
    %5162 = vmatprep.subr.mxu0 0.0
    %5163 = vmatpush1.msra.mxu0 %v5133
    %5164 = vmatprep.subr.mxu0 0.0
    %5165 = vmatpush1.msra.mxu0 %v5134
    %5166 = vmatprep.subr.mxu0 0.0
    %5167 = vmatpush1.msra.mxu0 %v5135
    %5168 = vmatprep.subr.mxu0 0.0
    %5169 = vmatpush1.msra.mxu0 0.0
    %5170 = vmatprep.subr.mxu0 0.0
    %5171 = vmatpush1.msra.mxu0 0.0
    %5172 = vmatprep.subr.mxu0 0.0
    %5173 = vmatpush1.msra.mxu0 0.0
    %5174 = vmatprep.subr.mxu0 0.0
    %5175 = vmatpush1.msra.mxu0 0.0
    %5176 = vmatprep.subr.mxu0 0.0
    %5177 = vmatpush1.msra.mxu0 0.0
    %5178 = vmatprep.subr.mxu0 0.0
    %5179 = vmatpush1.msra.mxu0 0.0
    %5180 = vmatprep.subr.mxu0 0.0
    %5181 = vmatpush1.msra.mxu0 0.0
    %5182 = vmatprep.subr.mxu0 0.0
    %5183 = vmatpush1.msra.mxu0 0.0
    %5184 = vmatprep.subr.mxu0 0.0
    %5185 = vmatpush1.msra.mxu0 0.0
    %5186 = vmatprep.subr.mxu0 0.0
    %5187 = vmatpush1.msra.mxu0 0.0
    %5188 = vmatprep.subr.mxu0 0.0
    %5189 = vmatpush1.msra.mxu0 0.0
    %5190 = vmatprep.subr.mxu0 0.0
    %5191 = vmatpush1.msra.mxu0 0.0
    %5192 = vmatprep.subr.mxu0 0.0
    %5193 = vmatpush1.msra.mxu0 0.0
    %5194 = vmatprep.subr.mxu0 0.0
    %5195 = vmatpush1.msra.mxu0 0.0
    %5196 = vmatprep.subr.mxu0 0.0
    %5197 = vmatpush1.msra.mxu0 0.0
    %5198 = vmatprep.subr.mxu0 0.0
    %5199 = vmatpush1.msra.mxu0 0.0
    %5200 = vmatprep.mubr.f32.mxu0 0.0
    %5201 = vmatmul.mubr.f32.gmra.mrb[0].mxu0 %v5088
    %v5202 = vpop.f32.mrb[0].mxu0
    %v5203 = vadd.f32 0.0, %v5202
    %v5204 = vpop.f32.mrb[0].mxu0
    %5205 = vmatprep.mubr.f32.mxu0 0.0
    %5206 = vmatmul.mubr.f32.gmra.mrb[0].mxu0 %v5089
    %v5207 = vpop.f32.mrb[0].mxu0
    %v5208 = vadd.f32 0.0, %v5207
    %v5209 = vpop.f32.mrb[0].mxu0
    %5210 = vmatprep.mubr.f32.mxu0 0.0
    %5211 = vmatmul.mubr.f32.gmra.mrb[0].mxu0 %v5090
    %v5212 = vpop.f32.mrb[0].mxu0
    %v5213 = vadd.f32 0.0, %v5212
    %v5214 = vpop.f32.mrb[0].mxu0
    %5215 = vmatprep.mubr.f32.mxu0 0.0
    %5216 = vmatmul.mubr.f32.gmra.mrb[0].mxu0 %v5091
    %v5217 = vpop.f32.mrb[0].mxu0
    %v5218 = vadd.f32 0.0, %v5217
    %v5219 = vpop.f32.mrb[0].mxu0
    %5220 = vmatprep.mubr.f32.mxu0 0.0
    %5221 = vmatmul.mubr.f32.gmra.mrb[0].mxu0 %v5092
    %v5222 = vpop.f32.mrb[0].mxu0
    %v5223 = vadd.f32 0.0, %v5222
    %v5224 = vpop.f32.mrb[0].mxu0
    %5225 = vmatprep.mubr.f32.mxu0 0.0
    %5226 = vmatmul.mubr.f32.gmra.mrb[0].mxu0 %v5093
    %v5227 = vpop.f32.mrb[0].mxu0
    %v5228 = vadd.f32 0.0, %v5227
    %v5229 = vpop.f32.mrb[0].mxu0
    %5230 = vmatprep.mubr.f32.mxu0 0.0
    %5231 = vmatmul.mubr.f32.gmra.mrb[0].mxu0 %v5094
    %v5232 = vpop.f32.mrb[0].mxu0
    %v5233 = vadd.f32 0.0, %v5232
    %v5234 = vpop.f32.mrb[0].mxu0
    %5235 = vmatprep.mubr.f32.mxu0 0.0
    %5236 = vmatmul.mubr.f32.gmra.mrb[0].mxu0 %v5095
    %v5237 = vpop.f32.mrb[0].mxu0
    %v5238 = vadd.f32 0.0, %v5237
    %v5239 = vpop.f32.mrb[0].mxu0
    %5240 = vmatprep.mubr.f32.mxu0 0.0
    %5241 = vmatmul.mubr.f32.gmra.mrb[0].mxu0 %v5096
    %v5242 = vpop.f32.mrb[0].mxu0
    %v5243 = vadd.f32 0.0, %v5242
    %v5244 = vpop.f32.mrb[0].mxu0
    %5245 = vmatprep.mubr.f32.mxu0 0.0
    %5246 = vmatmul.mubr.f32.gmra.mrb[0].mxu0 %v5097
    %v5247 = vpop.f32.mrb[0].mxu0
    %v5248 = vadd.f32 0.0, %v5247
    %v5249 = vpop.f32.mrb[0].mxu0
    %5250 = vmatprep.mubr.f32.mxu0 0.0
    %5251 = vmatmul.mubr.f32.gmra.mrb[0].mxu0 %v5098
    %v5252 = vpop.f32.mrb[0].mxu0
    %v5253 = vadd.f32 0.0, %v5252
    %v5254 = vpop.f32.mrb[0].mxu0
    %5255 = vmatprep.mubr.f32.mxu0 0.0
    %5256 = vmatmul.mubr.f32.gmra.mrb[0].mxu0 %v5099
    %v5257 = vpop.f32.mrb[0].mxu0
    %v5258 = vadd.f32 0.0, %v5257
    %v5259 = vpop.f32.mrb[0].mxu0
    %5260 = vmatprep.mubr.f32.mxu0 0.0
    %5261 = vmatmul.mubr.f32.gmra.mrb[0].mxu0 %v5100
    %v5262 = vpop.f32.mrb[0].mxu0
    %v5263 = vadd.f32 0.0, %v5262
    %v5264 = vpop.f32.mrb[0].mxu0
    %5265 = vmatprep.mubr.f32.mxu0 0.0
    %5266 = vmatmul.mubr.f32.gmra.mrb[0].mxu0 %v5101
    %v5267 = vpop.f32.mrb[0].mxu0
    %v5268 = vadd.f32 0.0, %v5267
    %v5269 = vpop.f32.mrb[0].mxu0
    %5270 = vmatprep.mubr.f32.mxu0 0.0
    %5271 = vmatmul.mubr.f32.gmra.mrb[0].mxu0 %v5102
    %v5272 = vpop.f32.mrb[0].mxu0
    %v5273 = vadd.f32 0.0, %v5272
    %v5274 = vpop.f32.mrb[0].mxu0
    %5275 = vmatprep.mubr.f32.mxu0 0.0
    %5276 = vmatmul.mubr.f32.gmra.mrb[0].mxu0 %v5103
    %v5277 = vpop.f32.mrb[0].mxu0
    %v5278 = vadd.f32 0.0, %v5277
    %v5279 = vpop.f32.mrb[0].mxu0
    %5280 = vmatprep.mubr.f32.mxu0 0.0
    %5281 = vmatmul.mubr.f32.gmra.mrb[0].mxu0 %v5104
    %v5282 = vpop.f32.mrb[0].mxu0
    %v5283 = vadd.f32 0.0, %v5282
    %v5284 = vpop.f32.mrb[0].mxu0
    %5285 = vmatprep.mubr.f32.mxu0 0.0
    %5286 = vmatmul.mubr.f32.gmra.mrb[0].mxu0 %v5105
    %v5287 = vpop.f32.mrb[0].mxu0
    %v5288 = vadd.f32 0.0, %v5287
    %v5289 = vpop.f32.mrb[0].mxu0
    %5290 = vmatprep.mubr.f32.mxu0 0.0
    %5291 = vmatmul.mubr.f32.gmra.mrb[0].mxu0 %v5106
    %v5292 = vpop.f32.mrb[0].mxu0
    %v5293 = vadd.f32 0.0, %v5292
    %v5294 = vpop.f32.mrb[0].mxu0
    %5295 = vmatprep.mubr.f32.mxu0 0.0
    %5296 = vmatmul.mubr.f32.gmra.mrb[0].mxu0 %v5107
    %v5297 = vpop.f32.mrb[0].mxu0
    %v5298 = vadd.f32 0.0, %v5297
    %v5299 = vpop.f32.mrb[0].mxu0
    %5300 = vmatprep.mubr.f32.mxu0 0.0
    %5301 = vmatmul.mubr.f32.gmra.mrb[0].mxu0 %v5108
    %v5302 = vpop.f32.mrb[0].mxu0
    %v5303 = vadd.f32 0.0, %v5302
    %v5304 = vpop.f32.mrb[0].mxu0
    %5305 = vmatprep.mubr.f32.mxu0 0.0
    %5306 = vmatmul.mubr.f32.gmra.mrb[0].mxu0 %v5109
    %v5307 = vpop.f32.mrb[0].mxu0
    %v5308 = vadd.f32 0.0, %v5307
    %v5309 = vpop.f32.mrb[0].mxu0
    %5310 = vmatprep.mubr.f32.mxu0 0.0
    %5311 = vmatmul.mubr.f32.gmra.mrb[0].mxu0 %v5110
    %v5312 = vpop.f32.mrb[0].mxu0
    %v5313 = vadd.f32 0.0, %v5312
    %v5314 = vpop.f32.mrb[0].mxu0
    %5315 = vmatprep.mubr.f32.mxu0 0.0
    %5316 = vmatmul.mubr.f32.gmra.mrb[0].mxu0 %v5111
    %v5317 = vpop.f32.mrb[0].mxu0
    %v5318 = vadd.f32 0.0, %v5317
    %v5319 = vpop.f32.mrb[0].mxu0
    %5320 = vmatprep.mubr.f32.mxu0 0.0
    %5321 = vmatmul.mubr.f32.gmra.mrb[0].mxu0 %v5112
    %v5322 = vpop.f32.mrb[0].mxu0
    %v5323 = vadd.f32 0.0, %v5322
    %v5324 = vpop.f32.mrb[0].mxu0
    %5325 = vmatprep.mubr.f32.mxu0 0.0
    %5326 = vmatmul.mubr.f32.gmra.mrb[0].mxu0 %v5113
    %v5327 = vpop.f32.mrb[0].mxu0
    %v5328 = vadd.f32 0.0, %v5327
    %v5329 = vpop.f32.mrb[0].mxu0
    %5330 = vmatprep.mubr.f32.mxu0 0.0
    %5331 = vmatmul.mubr.f32.gmra.mrb[0].mxu0 %v5114
    %v5332 = vpop.f32.mrb[0].mxu0
    %v5333 = vadd.f32 0.0, %v5332
    %v5334 = vpop.f32.mrb[0].mxu0
    %5335 = vmatprep.mubr.f32.mxu0 0.0
    %5336 = vmatmul.mubr.f32.gmra.mrb[0].mxu0 %v5115
    %v5337 = vpop.f32.mrb[0].mxu0
    %v5338 = vadd.f32 0.0, %v5337
    %v5339 = vpop.f32.mrb[0].mxu0
    %5340 = vmatprep.mubr.f32.mxu0 0.0
    %5341 = vmatmul.mubr.f32.gmra.mrb[0].mxu0 %v5116
    %v5342 = vpop.f32.mrb[0].mxu0
    %v5343 = vadd.f32 0.0, %v5342
    %v5344 = vpop.f32.mrb[0].mxu0
    %5345 = vmatprep.mubr.f32.mxu0 0.0
    %5346 = vmatmul.mubr.f32.gmra.mrb[0].mxu0 %v5117
    %v5347 = vpop.f32.mrb[0].mxu0
    %v5348 = vadd.f32 0.0, %v5347
    %v5349 = vpop.f32.mrb[0].mxu0
    %5350 = vmatprep.mubr.f32.mxu0 0.0
    %5351 = vmatmul.mubr.f32.gmra.mrb[0].mxu0 %v5118
    %v5352 = vpop.f32.mrb[0].mxu0
    %v5353 = vadd.f32 0.0, %v5352
    %v5354 = vpop.f32.mrb[0].mxu0
    %5355 = vmatprep.mubr.f32.mxu0 0.0
    %5356 = vmatmul.mubr.f32.gmra.mrb[0].mxu0 %v5119
    %v5357 = vpop.f32.mrb[0].mxu0
    %v5358 = vadd.f32 0.0, %v5357
    %v5359 = vpop.f32.mrb[0].mxu0
    %5360 = vdwg.mxu0
    %v5361 = vmul.f32 %v5203, %v4862
    %v5362 = vmul.f32 %v5208, %v4863
    %v5363 = vmul.f32 %v5213, %v4864
    %v5364 = vmul.f32 %v5218, %v4865
    %v5365 = vmul.f32 %v5223, %v4866
    %v5366 = vmul.f32 %v5228, %v4867
    %v5367 = vmul.f32 %v5233, %v4868
    %v5368 = vmul.f32 %v5238, %v4869
    %v5369 = vmul.f32 %v5243, %v4870
    %v5370 = vmul.f32 %v5248, %v4871
    %v5371 = vmul.f32 %v5253, %v4872
    %v5372 = vmul.f32 %v5258, %v4873
    %v5373 = vmul.f32 %v5263, %v4874
    %v5374 = vmul.f32 %v5268, %v4875
    %v5375 = vmul.f32 %v5273, %v4876
    %v5376 = vmul.f32 %v5278, %v4877
    %v5377 = vmul.f32 %v5283, %v4878
    %v5378 = vmul.f32 %v5288, %v4879
    %v5379 = vmul.f32 %v5293, %v4880
    %v5380 = vmul.f32 %v5298, %v4881
    %v5381 = vmul.f32 %v5303, %v4882
    %v5382 = vmul.f32 %v5308, %v4883
    %v5383 = vmul.f32 %v5313, %v4884
    %v5384 = vmul.f32 %v5318, %v4885
    %v5385 = vmul.f32 %v5323, %v4886
    %v5386 = vmul.f32 %v5328, %v4887
    %v5387 = vmul.f32 %v5333, %v4888
    %v5388 = vmul.f32 %v5338, %v4889
    %v5389 = vmul.f32 %v5343, %v4890
    %v5390 = vmul.f32 %v5348, %v4891
    %v5391 = vmul.f32 %v5353, %v4892
    %v5392 = vmul.f32 %v5358, %v4893
    %v5393 = vlaneseq
    %v5394 = vshrl.u32 %v5393, 7
    %v5395 = vadd.s32 %v5394, 8
    %v5396 = vadd.s32 %v5394, 16
    %v5397 = vadd.s32 %v5394, 24
    %v5398 = vadd.s32 %v5394, 32
    %v5399 = vadd.s32 %v5394, 40
    %v5400 = vadd.s32 %v5394, 48
    %v5401 = vadd.s32 %v5394, 56
    %v5402 = vadd.s32 %v5394, 64
    %v5403 = vadd.s32 %v5394, 72
    %v5404 = vadd.s32 %v5394, 80
    %v5405 = vadd.s32 %v5394, 88
    %v5406 = vadd.s32 %v5394, 96
    %v5407 = vadd.s32 %v5394, 104
    %v5408 = vadd.s32 %v5394, 112
    %v5409 = vadd.s32 %v5394, 120
    %v5410 = vld [vmem:[%s2] sm:$0x3]
    %v5411 = vlaneseq
    %v5412 = vshrl.u32 %v5411, 7
    %v5413 = vsub.s32 0, %v5412
    %v5414 = vrot.slane %v5410, %v5413
    %v5415 = vlaneseq
    %v5416 = vshrl.u32 %v5415, 7
    %v5417 = vsub.s32 1, %v5416
    %v5418 = vrot.slane %v5410, %v5417
    %vm5419 = vcmp.eq.s32.totalorder %v5394, %v5414
    %vm5420 = vcmp.eq.s32.totalorder %v5394, %v5418
    %vm5421 = vcmp.eq.s32.totalorder %v5395, %v5414
    %vm5422 = vcmp.eq.s32.totalorder %v5395, %v5418
    %vm5423 = vcmp.eq.s32.totalorder %v5396, %v5414
    %vm5424 = vcmp.eq.s32.totalorder %v5396, %v5418
    %vm5425 = vcmp.eq.s32.totalorder %v5397, %v5414
    %vm5426 = vcmp.eq.s32.totalorder %v5397, %v5418
    %vm5427 = vcmp.eq.s32.totalorder %v5398, %v5414
    %vm5428 = vcmp.eq.s32.totalorder %v5398, %v5418
    %vm5429 = vcmp.eq.s32.totalorder %v5399, %v5414
    %vm5430 = vcmp.eq.s32.totalorder %v5399, %v5418
    %vm5431 = vcmp.eq.s32.totalorder %v5400, %v5414
    %vm5432 = vcmp.eq.s32.totalorder %v5400, %v5418
    %vm5433 = vcmp.eq.s32.totalorder %v5401, %v5414
    %vm5434 = vcmp.eq.s32.totalorder %v5401, %v5418
    %vm5435 = vcmp.eq.s32.totalorder %v5402, %v5414
    %vm5436 = vcmp.eq.s32.totalorder %v5402, %v5418
    %vm5437 = vcmp.eq.s32.totalorder %v5403, %v5414
    %vm5438 = vcmp.eq.s32.totalorder %v5403, %v5418
    %vm5439 = vcmp.eq.s32.totalorder %v5404, %v5414
    %vm5440 = vcmp.eq.s32.totalorder %v5404, %v5418
    %vm5441 = vcmp.eq.s32.totalorder %v5405, %v5414
    %vm5442 = vcmp.eq.s32.totalorder %v5405, %v5418
    %vm5443 = vcmp.eq.s32.totalorder %v5406, %v5414
    %vm5444 = vcmp.eq.s32.totalorder %v5406, %v5418
    %vm5445 = vcmp.eq.s32.totalorder %v5407, %v5414
    %vm5446 = vcmp.eq.s32.totalorder %v5407, %v5418
    %vm5447 = vcmp.eq.s32.totalorder %v5408, %v5414
    %vm5448 = vcmp.eq.s32.totalorder %v5408, %v5418
    %vm5449 = vcmp.eq.s32.totalorder %v5409, %v5414
    %vm5450 = vcmp.eq.s32.totalorder %v5409, %v5418
    %v5451 = vsel %vm5419, 1, 0
    %v5452 = vsel %vm5420, 1, 0
    %v5453 = vsel %vm5421, 1, 0
    %v5454 = vsel %vm5422, 1, 0
    %v5455 = vsel %vm5423, 1, 0
    %v5456 = vsel %vm5424, 1, 0
    %v5457 = vsel %vm5425, 1, 0
    %v5458 = vsel %vm5426, 1, 0
    %v5459 = vsel %vm5427, 1, 0
    %v5460 = vsel %vm5428, 1, 0
    %v5461 = vsel %vm5429, 1, 0
    %v5462 = vsel %vm5430, 1, 0
    %v5463 = vsel %vm5431, 1, 0
    %v5464 = vsel %vm5432, 1, 0
    %v5465 = vsel %vm5433, 1, 0
    %v5466 = vsel %vm5434, 1, 0
    %v5467 = vsel %vm5435, 1, 0
    %v5468 = vsel %vm5436, 1, 0
    %v5469 = vsel %vm5437, 1, 0
    %v5470 = vsel %vm5438, 1, 0
    %v5471 = vsel %vm5439, 1, 0
    %v5472 = vsel %vm5440, 1, 0
    %v5473 = vsel %vm5441, 1, 0
    %v5474 = vsel %vm5442, 1, 0
    %v5475 = vsel %vm5443, 1, 0
    %v5476 = vsel %vm5444, 1, 0
    %v5477 = vsel %vm5445, 1, 0
    %v5478 = vsel %vm5446, 1, 0
    %v5479 = vsel %vm5447, 1, 0
    %v5480 = vsel %vm5448, 1, 0
    %v5481 = vsel %vm5449, 1, 0
    %v5482 = vsel %vm5450, 1, 0
    %v5483 = vcvt.s32.f32 %v5451
    %v5484 = vcvt.s32.f32 %v5452
    %v5485 = vcvt.s32.f32 %v5453
    %v5486 = vcvt.s32.f32 %v5454
    %v5487 = vcvt.s32.f32 %v5455
    %v5488 = vcvt.s32.f32 %v5456
    %v5489 = vcvt.s32.f32 %v5457
    %v5490 = vcvt.s32.f32 %v5458
    %v5491 = vcvt.s32.f32 %v5459
    %v5492 = vcvt.s32.f32 %v5460
    %v5493 = vcvt.s32.f32 %v5461
    %v5494 = vcvt.s32.f32 %v5462
    %v5495 = vcvt.s32.f32 %v5463
    %v5496 = vcvt.s32.f32 %v5464
    %v5497 = vcvt.s32.f32 %v5465
    %v5498 = vcvt.s32.f32 %v5466
    %v5499 = vcvt.s32.f32 %v5467
    %v5500 = vcvt.s32.f32 %v5468
    %v5501 = vcvt.s32.f32 %v5469
    %v5502 = vcvt.s32.f32 %v5470
    %v5503 = vcvt.s32.f32 %v5471
    %v5504 = vcvt.s32.f32 %v5472
    %v5505 = vcvt.s32.f32 %v5473
    %v5506 = vcvt.s32.f32 %v5474
    %v5507 = vcvt.s32.f32 %v5475
    %v5508 = vcvt.s32.f32 %v5476
    %v5509 = vcvt.s32.f32 %v5477
    %v5510 = vcvt.s32.f32 %v5478
    %v5511 = vcvt.s32.f32 %v5479
    %v5512 = vcvt.s32.f32 %v5480
    %v5513 = vcvt.s32.f32 %v5481
    %v5514 = vcvt.s32.f32 %v5482
    %v5515 = vld [vmem:[#allocation2] sm:$0xff]
    %v5516 = vld [vmem:[#allocation2 + $0x8] sm:$0xff]
    %v5517 = vld [vmem:[#allocation2 + $0x10] sm:$0xff]
    %v5518 = vld [vmem:[#allocation2 + $0x18] sm:$0xff]
    %v5519 = vld [vmem:[#allocation2 + $0x20] sm:$0xff]
    %v5520 = vld [vmem:[#allocation2 + $0x28] sm:$0xff]
    %v5521 = vld [vmem:[#allocation2 + $0x30] sm:$0xff]
    %v5522 = vld [vmem:[#allocation2 + $0x38] sm:$0xff]
    %v5523 = vld [vmem:[#allocation2 + $0x40] sm:$0xff]
    %v5524 = vld [vmem:[#allocation2 + $0x48] sm:$0xff]
    %v5525 = vld [vmem:[#allocation2 + $0x50] sm:$0xff]
    %v5526 = vld [vmem:[#allocation2 + $0x58] sm:$0xff]
    %v5527 = vld [vmem:[#allocation2 + $0x60] sm:$0xff]
    %v5528 = vld [vmem:[#allocation2 + $0x68] sm:$0xff]
    %v5529 = vld [vmem:[#allocation2 + $0x70] sm:$0xff]
    %v5530 = vld [vmem:[#allocation2 + $0x78] sm:$0xff]
    %5531 = vmatprep.subr.mxu0 0.0
    %5532 = vmatpush1.msra.mxu0 %v5361
    %5533 = vmatprep.subr.mxu0 0.0
    %5534 = vmatpush1.msra.mxu0 %v5362
    %5535 = vmatprep.subr.mxu0 0.0
    %5536 = vmatpush1.msra.mxu0 %v5363
    %5537 = vmatprep.subr.mxu0 0.0
    %5538 = vmatpush1.msra.mxu0 %v5364
    %5539 = vmatprep.subr.mxu0 0.0
    %5540 = vmatpush1.msra.mxu0 %v5365
    %5541 = vmatprep.subr.mxu0 0.0
    %5542 = vmatpush1.msra.mxu0 %v5366
    %5543 = vmatprep.subr.mxu0 0.0
    %5544 = vmatpush1.msra.mxu0 %v5367
    %5545 = vmatprep.subr.mxu0 0.0
    %5546 = vmatpush1.msra.mxu0 %v5368
    %5547 = vmatprep.subr.mxu0 0.0
    %5548 = vmatpush1.msra.mxu0 %v5369
    %5549 = vmatprep.subr.mxu0 0.0
    %5550 = vmatpush1.msra.mxu0 %v5370
    %5551 = vmatprep.subr.mxu0 0.0
    %5552 = vmatpush1.msra.mxu0 %v5371
    %5553 = vmatprep.subr.mxu0 0.0
    %5554 = vmatpush1.msra.mxu0 %v5372
    %5555 = vmatprep.subr.mxu0 0.0
    %5556 = vmatpush1.msra.mxu0 %v5373
    %5557 = vmatprep.subr.mxu0 0.0
    %5558 = vmatpush1.msra.mxu0 %v5374
    %5559 = vmatprep.subr.mxu0 0.0
    %5560 = vmatpush1.msra.mxu0 %v5375
    %5561 = vmatprep.subr.mxu0 0.0
    %5562 = vmatpush1.msra.mxu0 %v5376
    %5563 = vmatprep.subr.mxu0 0.0
    %5564 = vmatpush1.msra.mxu0 %v5377
    %5565 = vmatprep.subr.mxu0 0.0
    %5566 = vmatpush1.msra.mxu0 %v5378
    %5567 = vmatprep.subr.mxu0 0.0
    %5568 = vmatpush1.msra.mxu0 %v5379
    %5569 = vmatprep.subr.mxu0 0.0
    %5570 = vmatpush1.msra.mxu0 %v5380
    %5571 = vmatprep.subr.mxu0 0.0
    %5572 = vmatpush1.msra.mxu0 %v5381
    %5573 = vmatprep.subr.mxu0 0.0
    %5574 = vmatpush1.msra.mxu0 %v5382
    %5575 = vmatprep.subr.mxu0 0.0
    %5576 = vmatpush1.msra.mxu0 %v5383
    %5577 = vmatprep.subr.mxu0 0.0
    %5578 = vmatpush1.msra.mxu0 %v5384
    %5579 = vmatprep.subr.mxu0 0.0
    %5580 = vmatpush1.msra.mxu0 %v5385
    %5581 = vmatprep.subr.mxu0 0.0
    %5582 = vmatpush1.msra.mxu0 %v5386
    %5583 = vmatprep.subr.mxu0 0.0
    %5584 = vmatpush1.msra.mxu0 %v5387
    %5585 = vmatprep.subr.mxu0 0.0
    %5586 = vmatpush1.msra.mxu0 %v5388
    %5587 = vmatprep.subr.mxu0 0.0
    %5588 = vmatpush1.msra.mxu0 %v5389
    %5589 = vmatprep.subr.mxu0 0.0
    %5590 = vmatpush1.msra.mxu0 %v5390
    %5591 = vmatprep.subr.mxu0 0.0
    %5592 = vmatpush1.msra.mxu0 %v5391
    %5593 = vmatprep.subr.mxu0 0.0
    %5594 = vmatpush1.msra.mxu0 %v5392
    %5595 = vmatprep.mubr.f32.mxu0 %v5484
    %5596 = vmatmul.mubr.f32.gmra.mrb[0].mxu0 %v5483
    %v5597 = vpop.f32.mrb[0].mxu0
    %v5598 = vadd.f32 0.0, %v5597
    %v5599 = vpop.f32.mrb[0].mxu0
    %5600 = vmatprep.mubr.f32.mxu0 %v5486
    %5601 = vmatmul.mubr.f32.gmra.mrb[0].mxu0 %v5485
    %v5602 = vpop.f32.mrb[0].mxu0
    %v5603 = vadd.f32 0.0, %v5602
    %v5604 = vpop.f32.mrb[0].mxu0
    %5605 = vmatprep.mubr.f32.mxu0 %v5488
    %5606 = vmatmul.mubr.f32.gmra.mrb[0].mxu0 %v5487
    %v5607 = vpop.f32.mrb[0].mxu0
    %v5608 = vadd.f32 0.0, %v5607
    %v5609 = vpop.f32.mrb[0].mxu0
    %5610 = vmatprep.mubr.f32.mxu0 %v5490
    %5611 = vmatmul.mubr.f32.gmra.mrb[0].mxu0 %v5489
    %v5612 = vpop.f32.mrb[0].mxu0
    %v5613 = vadd.f32 0.0, %v5612
    %v5614 = vpop.f32.mrb[0].mxu0
    %5615 = vmatprep.mubr.f32.mxu0 %v5492
    %5616 = vmatmul.mubr.f32.gmra.mrb[0].mxu0 %v5491
    %v5617 = vpop.f32.mrb[0].mxu0
    %v5618 = vadd.f32 0.0, %v5617
    %v5619 = vpop.f32.mrb[0].mxu0
    %5620 = vmatprep.mubr.f32.mxu0 %v5494
    %5621 = vmatmul.mubr.f32.gmra.mrb[0].mxu0 %v5493
    %v5622 = vpop.f32.mrb[0].mxu0
    %v5623 = vadd.f32 0.0, %v5622
    %v5624 = vpop.f32.mrb[0].mxu0
    %5625 = vmatprep.mubr.f32.mxu0 %v5496
    %5626 = vmatmul.mubr.f32.gmra.mrb[0].mxu0 %v5495
    %v5627 = vpop.f32.mrb[0].mxu0
    %v5628 = vadd.f32 0.0, %v5627
    %v5629 = vpop.f32.mrb[0].mxu0
    %5630 = vmatprep.mubr.f32.mxu0 %v5498
    %5631 = vmatmul.mubr.f32.gmra.mrb[0].mxu0 %v5497
    %v5632 = vpop.f32.mrb[0].mxu0
    %v5633 = vadd.f32 0.0, %v5632
    %v5634 = vpop.f32.mrb[0].mxu0
    %5635 = vmatprep.mubr.f32.mxu0 %v5500
    %5636 = vmatmul.mubr.f32.gmra.mrb[0].mxu0 %v5499
    %v5637 = vpop.f32.mrb[0].mxu0
    %v5638 = vadd.f32 0.0, %v5637
    %v5639 = vpop.f32.mrb[0].mxu0
    %5640 = vmatprep.mubr.f32.mxu0 %v5502
    %5641 = vmatmul.mubr.f32.gmra.mrb[0].mxu0 %v5501
    %v5642 = vpop.f32.mrb[0].mxu0
    %v5643 = vadd.f32 0.0, %v5642
    %v5644 = vpop.f32.mrb[0].mxu0
    %5645 = vmatprep.mubr.f32.mxu0 %v5504
    %5646 = vmatmul.mubr.f32.gmra.mrb[0].mxu0 %v5503
    %v5647 = vpop.f32.mrb[0].mxu0
    %v5648 = vadd.f32 0.0, %v5647
    %v5649 = vpop.f32.mrb[0].mxu0
    %5650 = vmatprep.mubr.f32.mxu0 %v5506
    %5651 = vmatmul.mubr.f32.gmra.mrb[0].mxu0 %v5505
    %v5652 = vpop.f32.mrb[0].mxu0
    %v5653 = vadd.f32 0.0, %v5652
    %v5654 = vpop.f32.mrb[0].mxu0
    %5655 = vmatprep.mubr.f32.mxu0 %v5508
    %5656 = vmatmul.mubr.f32.gmra.mrb[0].mxu0 %v5507
    %v5657 = vpop.f32.mrb[0].mxu0
    %v5658 = vadd.f32 0.0, %v5657
    %v5659 = vpop.f32.mrb[0].mxu0
    %5660 = vmatprep.mubr.f32.mxu0 %v5510
    %5661 = vmatmul.mubr.f32.gmra.mrb[0].mxu0 %v5509
    %v5662 = vpop.f32.mrb[0].mxu0
    %v5663 = vadd.f32 0.0, %v5662
    %v5664 = vpop.f32.mrb[0].mxu0
    %5665 = vmatprep.mubr.f32.mxu0 %v5512
    %5666 = vmatmul.mubr.f32.gmra.mrb[0].mxu0 %v5511
    %v5667 = vpop.f32.mrb[0].mxu0
    %v5668 = vadd.f32 0.0, %v5667
    %v5669 = vpop.f32.mrb[0].mxu0
    %5670 = vmatprep.mubr.f32.mxu0 %v5514
    %5671 = vmatmul.mubr.f32.gmra.mrb[0].mxu0 %v5513
    %v5672 = vpop.f32.mrb[0].mxu0
    %v5673 = vadd.f32 0.0, %v5672
    %v5674 = vpop.f32.mrb[0].mxu0
    %5675 = vdwg.mxu0
    %v5676 = vadd.f32 %v5515, %v5598
    %v5677 = vadd.f32 %v5516, %v5603
    %v5678 = vadd.f32 %v5517, %v5608
    %v5679 = vadd.f32 %v5518, %v5613
    %v5680 = vadd.f32 %v5519, %v5618
    %v5681 = vadd.f32 %v5520, %v5623
    %v5682 = vadd.f32 %v5521, %v5628
    %v5683 = vadd.f32 %v5522, %v5633
    %v5684 = vadd.f32 %v5523, %v5638
    %v5685 = vadd.f32 %v5524, %v5643
    %v5686 = vadd.f32 %v5525, %v5648
    %v5687 = vadd.f32 %v5526, %v5653
    %v5688 = vadd.f32 %v5527, %v5658
    %v5689 = vadd.f32 %v5528, %v5663
    %v5690 = vadd.f32 %v5529, %v5668
    %v5691 = vadd.f32 %v5530, %v5673
    %5692 = vst [vmem:[#allocation2] sm:$0xff] %v5676
    %5693 = vst [vmem:[#allocation2 + $0x8] sm:$0xff] %v5677
    %5694 = vst [vmem:[#allocation2 + $0x10] sm:$0xff] %v5678
    %5695 = vst [vmem:[#allocation2 + $0x18] sm:$0xff] %v5679
    %5696 = vst [vmem:[#allocation2 + $0x20] sm:$0xff] %v5680
    %5697 = vst [vmem:[#allocation2 + $0x28] sm:$0xff] %v5681
    %5698 = vst [vmem:[#allocation2 + $0x30] sm:$0xff] %v5682
    %5699 = vst [vmem:[#allocation2 + $0x38] sm:$0xff] %v5683
    %5700 = vst [vmem:[#allocation2 + $0x40] sm:$0xff] %v5684
    %5701 = vst [vmem:[#allocation2 + $0x48] sm:$0xff] %v5685
    %5702 = vst [vmem:[#allocation2 + $0x50] sm:$0xff] %v5686
    %5703 = vst [vmem:[#allocation2 + $0x58] sm:$0xff] %v5687
    %5704 = vst [vmem:[#allocation2 + $0x60] sm:$0xff] %v5688
    %5705 = vst [vmem:[#allocation2 + $0x68] sm:$0xff] %v5689
    %5706 = vst [vmem:[#allocation2 + $0x70] sm:$0xff] %v5690
    %5707 = vst [vmem:[#allocation2 + $0x78] sm:$0xff] %v5691
    // Predicated region
    $region50: #{tpu_custom_call.1} parent=1 // pred_check
      %p5708 = pneg %p39
    $region51: #{tpu_custom_call.1} parent=1 // pred_check_branch
      %5710 = sbr.rel (%p5708) target = $region53
    $region52: #{tpu_custom_call.1} parent=1 // pred_region
      %v5711 = vld [vmem:[#allocation2] sm:$0xff]
      %v5712 = vld [vmem:[#allocation2 + $0x8] sm:$0xff]
      %v5713 = vld [vmem:[#allocation2 + $0x10] sm:$0xff]
      %v5714 = vld [vmem:[#allocation2 + $0x18] sm:$0xff]
      %v5715 = vld [vmem:[#allocation2 + $0x20] sm:$0xff]
      %v5716 = vld [vmem:[#allocation2 + $0x28] sm:$0xff]
      %v5717 = vld [vmem:[#allocation2 + $0x30] sm:$0xff]
      %v5718 = vld [vmem:[#allocation2 + $0x38] sm:$0xff]
      %v5719 = vld [vmem:[#allocation2 + $0x40] sm:$0xff]
      %v5720 = vld [vmem:[#allocation2 + $0x48] sm:$0xff]
      %v5721 = vld [vmem:[#allocation2 + $0x50] sm:$0xff]
      %v5722 = vld [vmem:[#allocation2 + $0x58] sm:$0xff]
      %v5723 = vld [vmem:[#allocation2 + $0x60] sm:$0xff]
      %v5724 = vld [vmem:[#allocation2 + $0x68] sm:$0xff]
      %v5725 = vld [vmem:[#allocation2 + $0x70] sm:$0xff]
      %v5726 = vld [vmem:[#allocation2 + $0x78] sm:$0xff]
      %v5727 = vld [vmem:[%s9] sm:$0xff]
      %v5728 = vld [vmem:[%s9 + $0x8] sm:$0xff]
      %v5729 = vld [vmem:[%s9 + $0x10] sm:$0xff]
      %v5730 = vld [vmem:[%s9 + $0x18] sm:$0xff]
      %v5731 = vld [vmem:[%s9 + $0x20] sm:$0xff]
      %v5732 = vld [vmem:[%s9 + $0x28] sm:$0xff]
      %v5733 = vld [vmem:[%s9 + $0x30] sm:$0xff]
      %v5734 = vld [vmem:[%s9 + $0x38] sm:$0xff]
      %v5735 = vld [vmem:[%s9 + $0x40] sm:$0xff]
      %v5736 = vld [vmem:[%s9 + $0x48] sm:$0xff]
      %v5737 = vld [vmem:[%s9 + $0x50] sm:$0xff]
      %v5738 = vld [vmem:[%s9 + $0x58] sm:$0xff]
      %v5739 = vld [vmem:[%s9 + $0x60] sm:$0xff]
      %v5740 = vld [vmem:[%s9 + $0x68] sm:$0xff]
      %v5741 = vld [vmem:[%s9 + $0x70] sm:$0xff]
      %v5742 = vld [vmem:[%s9 + $0x78] sm:$0xff]
      %v5743 = vld [vmem:[%s10] sm:$0x1]
      %v5745 = vlaneseq
      %v5746 = vshrl.u32 %v5745, 7
      %v5747 = vsub.s32 0, %v5746
      %v5748 = vrot.slane %v5743, %v5747
      %5750 = vmatprep.subr.mxu0 0.0
      %5751 = vmatpush1.msra.mxu0 %v5727
      %5752 = vmatprep.subr.mxu0 0.0
      %5753 = vmatpush1.msra.mxu0 %v5728
      %5754 = vmatprep.subr.mxu0 0.0
      %5755 = vmatpush1.msra.mxu0 %v5729
      %5756 = vmatprep.subr.mxu0 0.0
      %5757 = vmatpush1.msra.mxu0 %v5730
      %5758 = vmatprep.subr.mxu0 0.0
      %5759 = vmatpush1.msra.mxu0 %v5731
      %5760 = vmatprep.subr.mxu0 0.0
      %5761 = vmatpush1.msra.mxu0 %v5732
      %5762 = vmatprep.subr.mxu0 0.0
      %5763 = vmatpush1.msra.mxu0 %v5733
      %5764 = vmatprep.subr.mxu0 0.0
      %5765 = vmatpush1.msra.mxu0 %v5734
      %5766 = vmatprep.subr.mxu0 0.0
      %5767 = vmatpush1.msra.mxu0 %v5735
      %5768 = vmatprep.subr.mxu0 0.0
      %5769 = vmatpush1.msra.mxu0 %v5736
      %5770 = vmatprep.subr.mxu0 0.0
      %5771 = vmatpush1.msra.mxu0 %v5737
      %5772 = vmatprep.subr.mxu0 0.0
      %5773 = vmatpush1.msra.mxu0 %v5738
      %5774 = vmatprep.subr.mxu0 0.0
      %5775 = vmatpush1.msra.mxu0 %v5739
      %5776 = vmatprep.subr.mxu0 0.0
      %5777 = vmatpush1.msra.mxu0 %v5740
      %5778 = vmatprep.subr.mxu0 0.0
      %5779 = vmatpush1.msra.mxu0 %v5741
      %5780 = vmatprep.subr.mxu0 0.0
      %5781 = vmatpush1.msra.mxu0 %v5742
      %5782 = vmatprep.subr.mxu0 0.0
      %5783 = vmatpush1.msra.mxu0 0.0
      %5784 = vmatprep.subr.mxu0 0.0
      %5785 = vmatpush1.msra.mxu0 0.0
      %5786 = vmatprep.subr.mxu0 0.0
      %5787 = vmatpush1.msra.mxu0 0.0
      %5788 = vmatprep.subr.mxu0 0.0
      %5789 = vmatpush1.msra.mxu0 0.0
      %5790 = vmatprep.subr.mxu0 0.0
      %5791 = vmatpush1.msra.mxu0 0.0
      %5792 = vmatprep.subr.mxu0 0.0
      %5793 = vmatpush1.msra.mxu0 0.0
      %5794 = vmatprep.subr.mxu0 0.0
      %5795 = vmatpush1.msra.mxu0 0.0
      %5796 = vmatprep.subr.mxu0 0.0
      %5797 = vmatpush1.msra.mxu0 0.0
      %5798 = vmatprep.subr.mxu0 0.0
      %5799 = vmatpush1.msra.mxu0 0.0
      %5800 = vmatprep.subr.mxu0 0.0
      %5801 = vmatpush1.msra.mxu0 0.0
      %5802 = vmatprep.subr.mxu0 0.0
      %5803 = vmatpush1.msra.mxu0 0.0
      %5804 = vmatprep.subr.mxu0 0.0
      %5805 = vmatpush1.msra.mxu0 0.0
      %5806 = vmatprep.subr.mxu0 0.0
      %5807 = vmatpush1.msra.mxu0 0.0
      %5808 = vmatprep.subr.mxu0 0.0
      %5809 = vmatpush1.msra.mxu0 0.0
      %5810 = vmatprep.subr.mxu0 0.0
      %5811 = vmatpush1.msra.mxu0 0.0
      %5812 = vmatprep.subr.mxu0 0.0
      %5813 = vmatpush1.msra.mxu0 0.0
      %5814 = vmatprep.mubr.f32.mxu0 0.0
      %5815 = vmatmul.mubr.f32.gmra.mrb[0].mxu0 %v5711
      %v5816 = vpop.f32.mrb[0].mxu0
      %v5817 = vadd.f32 %v5748, %v5816
      %v5818 = vpop.f32.mrb[0].mxu0
      %5819 = vmatprep.mubr.f32.mxu0 0.0
      %5820 = vmatmul.mubr.f32.gmra.mrb[0].mxu0 %v5712
      %v5821 = vpop.f32.mrb[0].mxu0
      %v5822 = vadd.f32 %v5748, %v5821
      %v5823 = vpop.f32.mrb[0].mxu0
      %5824 = vmatprep.mubr.f32.mxu0 0.0
      %5825 = vmatmul.mubr.f32.gmra.mrb[0].mxu0 %v5713
      %v5826 = vpop.f32.mrb[0].mxu0
      %v5827 = vadd.f32 %v5748, %v5826
      %v5828 = vpop.f32.mrb[0].mxu0
      %5829 = vmatprep.mubr.f32.mxu0 0.0
      %5830 = vmatmul.mubr.f32.gmra.mrb[0].mxu0 %v5714
      %v5831 = vpop.f32.mrb[0].mxu0
      %v5832 = vadd.f32 %v5748, %v5831
      %v5833 = vpop.f32.mrb[0].mxu0
      %5834 = vmatprep.mubr.f32.mxu0 0.0
      %5835 = vmatmul.mubr.f32.gmra.mrb[0].mxu0 %v5715
      %v5836 = vpop.f32.mrb[0].mxu0
      %v5837 = vadd.f32 %v5748, %v5836
      %v5838 = vpop.f32.mrb[0].mxu0
      %5839 = vmatprep.mubr.f32.mxu0 0.0
      %5840 = vmatmul.mubr.f32.gmra.mrb[0].mxu0 %v5716
      %v5841 = vpop.f32.mrb[0].mxu0
      %v5842 = vadd.f32 %v5748, %v5841
      %v5843 = vpop.f32.mrb[0].mxu0
      %5844 = vmatprep.mubr.f32.mxu0 0.0
      %5845 = vmatmul.mubr.f32.gmra.mrb[0].mxu0 %v5717
      %v5846 = vpop.f32.mrb[0].mxu0
      %v5847 = vadd.f32 %v5748, %v5846
      %v5848 = vpop.f32.mrb[0].mxu0
      %5849 = vmatprep.mubr.f32.mxu0 0.0
      %5850 = vmatmul.mubr.f32.gmra.mrb[0].mxu0 %v5718
      %v5851 = vpop.f32.mrb[0].mxu0
      %v5852 = vadd.f32 %v5748, %v5851
      %v5853 = vpop.f32.mrb[0].mxu0
      %5854 = vmatprep.mubr.f32.mxu0 0.0
      %5855 = vmatmul.mubr.f32.gmra.mrb[0].mxu0 %v5719
      %v5856 = vpop.f32.mrb[0].mxu0
      %v5857 = vadd.f32 %v5748, %v5856
      %v5858 = vpop.f32.mrb[0].mxu0
      %5859 = vmatprep.mubr.f32.mxu0 0.0
      %5860 = vmatmul.mubr.f32.gmra.mrb[0].mxu0 %v5720
      %v5861 = vpop.f32.mrb[0].mxu0
      %v5862 = vadd.f32 %v5748, %v5861
      %v5863 = vpop.f32.mrb[0].mxu0
      %5864 = vmatprep.mubr.f32.mxu0 0.0
      %5865 = vmatmul.mubr.f32.gmra.mrb[0].mxu0 %v5721
      %v5866 = vpop.f32.mrb[0].mxu0
      %v5867 = vadd.f32 %v5748, %v5866
      %v5868 = vpop.f32.mrb[0].mxu0
      %5869 = vmatprep.mubr.f32.mxu0 0.0
      %5870 = vmatmul.mubr.f32.gmra.mrb[0].mxu0 %v5722
      %v5871 = vpop.f32.mrb[0].mxu0
      %v5872 = vadd.f32 %v5748, %v5871
      %v5873 = vpop.f32.mrb[0].mxu0
      %5874 = vmatprep.mubr.f32.mxu0 0.0
      %5875 = vmatmul.mubr.f32.gmra.mrb[0].mxu0 %v5723
      %v5876 = vpop.f32.mrb[0].mxu0
      %v5877 = vadd.f32 %v5748, %v5876
      %v5878 = vpop.f32.mrb[0].mxu0
      %5879 = vmatprep.mubr.f32.mxu0 0.0
      %5880 = vmatmul.mubr.f32.gmra.mrb[0].mxu0 %v5724
      %v5881 = vpop.f32.mrb[0].mxu0
      %v5882 = vadd.f32 %v5748, %v5881
      %v5883 = vpop.f32.mrb[0].mxu0
      %5884 = vmatprep.mubr.f32.mxu0 0.0
      %5885 = vmatmul.mubr.f32.gmra.mrb[0].mxu0 %v5725
      %v5886 = vpop.f32.mrb[0].mxu0
      %v5887 = vadd.f32 %v5748, %v5886
      %v5888 = vpop.f32.mrb[0].mxu0
      %5889 = vmatprep.mubr.f32.mxu0 0.0
      %5890 = vmatmul.mubr.f32.gmra.mrb[0].mxu0 %v5726
      %v5891 = vpop.f32.mrb[0].mxu0
      %v5892 = vadd.f32 %v5748, %v5891
      %v5893 = vpop.f32.mrb[0].mxu0
      %5894 = vdwg.mxu0
      %v5895 = vmax.f32 %v5817, 0.0
      %v5896 = vmax.f32 %v5822, 0.0
      %v5897 = vmax.f32 %v5827, 0.0
      %v5898 = vmax.f32 %v5832, 0.0
      %v5899 = vmax.f32 %v5837, 0.0
      %v5900 = vmax.f32 %v5842, 0.0
      %v5901 = vmax.f32 %v5847, 0.0
      %v5902 = vmax.f32 %v5852, 0.0
      %v5903 = vmax.f32 %v5857, 0.0
      %v5904 = vmax.f32 %v5862, 0.0
      %v5905 = vmax.f32 %v5867, 0.0
      %v5906 = vmax.f32 %v5872, 0.0
      %v5907 = vmax.f32 %v5877, 0.0
      %v5908 = vmax.f32 %v5882, 0.0
      %v5909 = vmax.f32 %v5887, 0.0
      %v5910 = vmax.f32 %v5892, 0.0
      %vm5911 = vcmp.ne.f32.partialorder %v5817, %v5817
      %vm5912 = vcmp.ne.f32.partialorder %v5822, %v5822
      %vm5913 = vcmp.ne.f32.partialorder %v5827, %v5827
      %vm5914 = vcmp.ne.f32.partialorder %v5832, %v5832
      %vm5915 = vcmp.ne.f32.partialorder %v5837, %v5837
      %vm5916 = vcmp.ne.f32.partialorder %v5842, %v5842
      %vm5917 = vcmp.ne.f32.partialorder %v5847, %v5847
      %vm5918 = vcmp.ne.f32.partialorder %v5852, %v5852
      %vm5919 = vcmp.ne.f32.partialorder %v5857, %v5857
      %vm5920 = vcmp.ne.f32.partialorder %v5862, %v5862
      %vm5921 = vcmp.ne.f32.partialorder %v5867, %v5867
      %vm5922 = vcmp.ne.f32.partialorder %v5872, %v5872
      %vm5923 = vcmp.ne.f32.partialorder %v5877, %v5877
      %vm5924 = vcmp.ne.f32.partialorder %v5882, %v5882
      %vm5925 = vcmp.ne.f32.partialorder %v5887, %v5887
      %vm5926 = vcmp.ne.f32.partialorder %v5892, %v5892
      %v5927 = vadd.f32 %v5817, 0.0
      %v5928 = vadd.f32 %v5822, 0.0
      %v5929 = vadd.f32 %v5827, 0.0
      %v5930 = vadd.f32 %v5832, 0.0
      %v5931 = vadd.f32 %v5837, 0.0
      %v5932 = vadd.f32 %v5842, 0.0
      %v5933 = vadd.f32 %v5847, 0.0
      %v5934 = vadd.f32 %v5852, 0.0
      %v5935 = vadd.f32 %v5857, 0.0
      %v5936 = vadd.f32 %v5862, 0.0
      %v5937 = vadd.f32 %v5867, 0.0
      %v5938 = vadd.f32 %v5872, 0.0
      %v5939 = vadd.f32 %v5877, 0.0
      %v5940 = vadd.f32 %v5882, 0.0
      %v5941 = vadd.f32 %v5887, 0.0
      %v5942 = vadd.f32 %v5892, 0.0
      %v5943 = vand.u32 2147483647, %v5817
      %v5944 = vand.u32 2147483647, %v5822
      %v5945 = vand.u32 2147483647, %v5827
      %v5946 = vand.u32 2147483647, %v5832
      %v5947 = vand.u32 2147483647, %v5837
      %v5948 = vand.u32 2147483647, %v5842
      %v5949 = vand.u32 2147483647, %v5847
      %v5950 = vand.u32 2147483647, %v5852
      %v5951 = vand.u32 2147483647, %v5857
      %v5952 = vand.u32 2147483647, %v5862
      %v5953 = vand.u32 2147483647, %v5867
      %v5954 = vand.u32 2147483647, %v5872
      %v5955 = vand.u32 2147483647, %v5877
      %v5956 = vand.u32 2147483647, %v5882
      %v5957 = vand.u32 2147483647, %v5887
      %v5958 = vand.u32 2147483647, %v5892
      %v5959 = vsub.f32 0.0, %v5943
      %v5960 = vsub.f32 0.0, %v5944
      %v5961 = vsub.f32 0.0, %v5945
      %v5962 = vsub.f32 0.0, %v5946
      %v5963 = vsub.f32 0.0, %v5947
      %v5964 = vsub.f32 0.0, %v5948
      %v5965 = vsub.f32 0.0, %v5949
      %v5966 = vsub.f32 0.0, %v5950
      %v5967 = vsub.f32 0.0, %v5951
      %v5968 = vsub.f32 0.0, %v5952
      %v5969 = vsub.f32 0.0, %v5953
      %v5970 = vsub.f32 0.0, %v5954
      %v5971 = vsub.f32 0.0, %v5955
      %v5972 = vsub.f32 0.0, %v5956
      %v5973 = vsub.f32 0.0, %v5957
      %v5974 = vsub.f32 0.0, %v5958
      %v5975 = vmul.f32 %v5959, 1.442695
      %v5976 = vpow.pop %v5975
      %v5977 = vmul.f32 %v5960, 1.442695
      %v5978 = vpow.pop %v5977
      %v5979 = vmul.f32 %v5961, 1.442695
      %v5980 = vpow.pop %v5979
      %v5981 = vmul.f32 %v5962, 1.442695
      %v5982 = vpow.pop %v5981
      %v5983 = vmul.f32 %v5963, 1.442695
      %v5984 = vpow.pop %v5983
      %v5985 = vmul.f32 %v5964, 1.442695
      %v5986 = vpow.pop %v5985
      %v5987 = vmul.f32 %v5965, 1.442695
      %v5988 = vpow.pop %v5987
      %v5989 = vmul.f32 %v5966, 1.442695
      %v5990 = vpow.pop %v5989
      %v5991 = vmul.f32 %v5967, 1.442695
      %v5992 = vpow.pop %v5991
      %v5993 = vmul.f32 %v5968, 1.442695
      %v5994 = vpow.pop %v5993
      %v5995 = vmul.f32 %v5969, 1.442695
      %v5996 = vpow.pop %v5995
      %v5997 = vmul.f32 %v5970, 1.442695
      %v5998 = vpow.pop %v5997
      %v5999 = vmul.f32 %v5971, 1.442695
      %v6000 = vpow.pop %v5999
      %v6001 = vmul.f32 %v5972, 1.442695
      %v6002 = vpow.pop %v6001
      %v6003 = vmul.f32 %v5973, 1.442695
      %v6004 = vpow.pop %v6003
      %v6005 = vmul.f32 %v5974, 1.442695
      %v6006 = vpow.pop %v6005
      %v6007 = vadd.f32 %v5976, 1.0
      %v6008 = vlog2.pop %v6007
      %v6009 = vmul.f32 %v6008, 0.6931472
      %v6010 = vmul.f32 -0.5, %v5976
      %v6011 = vadd.f32 %v6010, 1.0
      %v6012 = vmul.f32 %v6011, %v5976
      %v6013 = vand.u32 2147483647, %v5976
      %vm6014 = vcmp.lt.f32.partialorder %v6013, 0.0004427343
      %v6015 = vsel %vm6014, %v6012, %v6009
      %v6016 = vadd.f32 %v5978, 1.0
      %v6017 = vlog2.pop %v6016
      %v6018 = vmul.f32 %v6017, 0.6931472
      %v6019 = vmul.f32 -0.5, %v5978
      %v6020 = vadd.f32 %v6019, 1.0
      %v6021 = vmul.f32 %v6020, %v5978
      %v6022 = vand.u32 2147483647, %v5978
      %vm6023 = vcmp.lt.f32.partialorder %v6022, 0.0004427343
      %v6024 = vsel %vm6023, %v6021, %v6018
      %v6025 = vadd.f32 %v5980, 1.0
      %v6026 = vlog2.pop %v6025
      %v6027 = vmul.f32 %v6026, 0.6931472
      %v6028 = vmul.f32 -0.5, %v5980
      %v6029 = vadd.f32 %v6028, 1.0
      %v6030 = vmul.f32 %v6029, %v5980
      %v6031 = vand.u32 2147483647, %v5980
      %vm6032 = vcmp.lt.f32.partialorder %v6031, 0.0004427343
      %v6033 = vsel %vm6032, %v6030, %v6027
      %v6034 = vadd.f32 %v5982, 1.0
      %v6035 = vlog2.pop %v6034
      %v6036 = vmul.f32 %v6035, 0.6931472
      %v6037 = vmul.f32 -0.5, %v5982
      %v6038 = vadd.f32 %v6037, 1.0
      %v6039 = vmul.f32 %v6038, %v5982
      %v6040 = vand.u32 2147483647, %v5982
      %vm6041 = vcmp.lt.f32.partialorder %v6040, 0.0004427343
      %v6042 = vsel %vm6041, %v6039, %v6036
      %v6043 = vadd.f32 %v5984, 1.0
      %v6044 = vlog2.pop %v6043
      %v6045 = vmul.f32 %v6044, 0.6931472
      %v6046 = vmul.f32 -0.5, %v5984
      %v6047 = vadd.f32 %v6046, 1.0
      %v6048 = vmul.f32 %v6047, %v5984
      %v6049 = vand.u32 2147483647, %v5984
      %vm6050 = vcmp.lt.f32.partialorder %v6049, 0.0004427343
      %v6051 = vsel %vm6050, %v6048, %v6045
      %v6052 = vadd.f32 %v5986, 1.0
      %v6053 = vlog2.pop %v6052
      %v6054 = vmul.f32 %v6053, 0.6931472
      %v6055 = vmul.f32 -0.5, %v5986
      %v6056 = vadd.f32 %v6055, 1.0
      %v6057 = vmul.f32 %v6056, %v5986
      %v6058 = vand.u32 2147483647, %v5986
      %vm6059 = vcmp.lt.f32.partialorder %v6058, 0.0004427343
      %v6060 = vsel %vm6059, %v6057, %v6054
      %v6061 = vadd.f32 %v5988, 1.0
      %v6062 = vlog2.pop %v6061
      %v6063 = vmul.f32 %v6062, 0.6931472
      %v6064 = vmul.f32 -0.5, %v5988
      %v6065 = vadd.f32 %v6064, 1.0
      %v6066 = vmul.f32 %v6065, %v5988
      %v6067 = vand.u32 2147483647, %v5988
      %vm6068 = vcmp.lt.f32.partialorder %v6067, 0.0004427343
      %v6069 = vsel %vm6068, %v6066, %v6063
      %v6070 = vadd.f32 %v5990, 1.0
      %v6071 = vlog2.pop %v6070
      %v6072 = vmul.f32 %v6071, 0.6931472
      %v6073 = vmul.f32 -0.5, %v5990
      %v6074 = vadd.f32 %v6073, 1.0
      %v6075 = vmul.f32 %v6074, %v5990
      %v6076 = vand.u32 2147483647, %v5990
      %vm6077 = vcmp.lt.f32.partialorder %v6076, 0.0004427343
      %v6078 = vsel %vm6077, %v6075, %v6072
      %v6079 = vadd.f32 %v5992, 1.0
      %v6080 = vlog2.pop %v6079
      %v6081 = vmul.f32 %v6080, 0.6931472
      %v6082 = vmul.f32 -0.5, %v5992
      %v6083 = vadd.f32 %v6082, 1.0
      %v6084 = vmul.f32 %v6083, %v5992
      %v6085 = vand.u32 2147483647, %v5992
      %vm6086 = vcmp.lt.f32.partialorder %v6085, 0.0004427343
      %v6087 = vsel %vm6086, %v6084, %v6081
      %v6088 = vadd.f32 %v5994, 1.0
      %v6089 = vlog2.pop %v6088
      %v6090 = vmul.f32 %v6089, 0.6931472
      %v6091 = vmul.f32 -0.5, %v5994
      %v6092 = vadd.f32 %v6091, 1.0
      %v6093 = vmul.f32 %v6092, %v5994
      %v6094 = vand.u32 2147483647, %v5994
      %vm6095 = vcmp.lt.f32.partialorder %v6094, 0.0004427343
      %v6096 = vsel %vm6095, %v6093, %v6090
      %v6097 = vadd.f32 %v5996, 1.0
      %v6098 = vlog2.pop %v6097
      %v6099 = vmul.f32 %v6098, 0.6931472
      %v6100 = vmul.f32 -0.5, %v5996
      %v6101 = vadd.f32 %v6100, 1.0
      %v6102 = vmul.f32 %v6101, %v5996
      %v6103 = vand.u32 2147483647, %v5996
      %vm6104 = vcmp.lt.f32.partialorder %v6103, 0.0004427343
      %v6105 = vsel %vm6104, %v6102, %v6099
      %v6106 = vadd.f32 %v5998, 1.0
      %v6107 = vlog2.pop %v6106
      %v6108 = vmul.f32 %v6107, 0.6931472
      %v6109 = vmul.f32 -0.5, %v5998
      %v6110 = vadd.f32 %v6109, 1.0
      %v6111 = vmul.f32 %v6110, %v5998
      %v6112 = vand.u32 2147483647, %v5998
      %vm6113 = vcmp.lt.f32.partialorder %v6112, 0.0004427343
      %v6114 = vsel %vm6113, %v6111, %v6108
      %v6115 = vadd.f32 %v6000, 1.0
      %v6116 = vlog2.pop %v6115
      %v6117 = vmul.f32 %v6116, 0.6931472
      %v6118 = vmul.f32 -0.5, %v6000
      %v6119 = vadd.f32 %v6118, 1.0
      %v6120 = vmul.f32 %v6119, %v6000
      %v6121 = vand.u32 2147483647, %v6000
      %vm6122 = vcmp.lt.f32.partialorder %v6121, 0.0004427343
      %v6123 = vsel %vm6122, %v6120, %v6117
      %v6124 = vadd.f32 %v6002, 1.0
      %v6125 = vlog2.pop %v6124
      %v6126 = vmul.f32 %v6125, 0.6931472
      %v6127 = vmul.f32 -0.5, %v6002
      %v6128 = vadd.f32 %v6127, 1.0
      %v6129 = vmul.f32 %v6128, %v6002
      %v6130 = vand.u32 2147483647, %v6002
      %vm6131 = vcmp.lt.f32.partialorder %v6130, 0.0004427343
      %v6132 = vsel %vm6131, %v6129, %v6126
      %v6133 = vadd.f32 %v6004, 1.0
      %v6134 = vlog2.pop %v6133
      %v6135 = vmul.f32 %v6134, 0.6931472
      %v6136 = vmul.f32 -0.5, %v6004
      %v6137 = vadd.f32 %v6136, 1.0
      %v6138 = vmul.f32 %v6137, %v6004
      %v6139 = vand.u32 2147483647, %v6004
      %vm6140 = vcmp.lt.f32.partialorder %v6139, 0.0004427343
      %v6141 = vsel %vm6140, %v6138, %v6135
      %v6142 = vadd.f32 %v6006, 1.0
      %v6143 = vlog2.pop %v6142
      %v6144 = vmul.f32 %v6143, 0.6931472
      %v6145 = vmul.f32 -0.5, %v6006
      %v6146 = vadd.f32 %v6145, 1.0
      %v6147 = vmul.f32 %v6146, %v6006
      %v6148 = vand.u32 2147483647, %v6006
      %vm6149 = vcmp.lt.f32.partialorder %v6148, 0.0004427343
      %v6150 = vsel %vm6149, %v6147, %v6144
      %v6151 = vadd.f32 %v5895, %v6015
      %v6152 = vadd.f32 %v5896, %v6024
      %v6153 = vadd.f32 %v5897, %v6033
      %v6154 = vadd.f32 %v5898, %v6042
      %v6155 = vadd.f32 %v5899, %v6051
      %v6156 = vadd.f32 %v5900, %v6060
      %v6157 = vadd.f32 %v5901, %v6069
      %v6158 = vadd.f32 %v5902, %v6078
      %v6159 = vadd.f32 %v5903, %v6087
      %v6160 = vadd.f32 %v5904, %v6096
      %v6161 = vadd.f32 %v5905, %v6105
      %v6162 = vadd.f32 %v5906, %v6114
      %v6163 = vadd.f32 %v5907, %v6123
      %v6164 = vadd.f32 %v5908, %v6132
      %v6165 = vadd.f32 %v5909, %v6141
      %v6166 = vadd.f32 %v5910, %v6150
      %v6167 = vsel %vm5911, %v5927, %v6151
      %v6168 = vsel %vm5912, %v5928, %v6152
      %v6169 = vsel %vm5913, %v5929, %v6153
      %v6170 = vsel %vm5914, %v5930, %v6154
      %v6171 = vsel %vm5915, %v5931, %v6155
      %v6172 = vsel %vm5916, %v5932, %v6156
      %v6173 = vsel %vm5917, %v5933, %v6157
      %v6174 = vsel %vm5918, %v5934, %v6158
      %v6175 = vsel %vm5919, %v5935, %v6159
      %v6176 = vsel %vm5920, %v5936, %v6160
      %v6177 = vsel %vm5921, %v5937, %v6161
      %v6178 = vsel %vm5922, %v5938, %v6162
      %v6179 = vsel %vm5923, %v5939, %v6163
      %v6180 = vsel %vm5924, %v5940, %v6164
      %v6181 = vsel %vm5925, %v5941, %v6165
      %v6182 = vsel %vm5926, %v5942, %v6166
      %v6183 = vsub.f32 %v6167, 0.6931472
      %v6184 = vsub.f32 %v6168, 0.6931472
      %v6185 = vsub.f32 %v6169, 0.6931472
      %v6186 = vsub.f32 %v6170, 0.6931472
      %v6187 = vsub.f32 %v6171, 0.6931472
      %v6188 = vsub.f32 %v6172, 0.6931472
      %v6189 = vsub.f32 %v6173, 0.6931472
      %v6190 = vsub.f32 %v6174, 0.6931472
      %v6191 = vsub.f32 %v6175, 0.6931472
      %v6192 = vsub.f32 %v6176, 0.6931472
      %v6193 = vsub.f32 %v6177, 0.6931472
      %v6194 = vsub.f32 %v6178, 0.6931472
      %v6195 = vsub.f32 %v6179, 0.6931472
      %v6196 = vsub.f32 %v6180, 0.6931472
      %v6197 = vsub.f32 %v6181, 0.6931472
      %v6198 = vsub.f32 %v6182, 0.6931472
      %6199 = vst [vmem:[#allocation3] sm:$0xff] %v6183
      %6200 = vst [vmem:[#allocation3 + $0x8] sm:$0xff] %v6184
      %6201 = vst [vmem:[#allocation3 + $0x10] sm:$0xff] %v6185
      %6202 = vst [vmem:[#allocation3 + $0x18] sm:$0xff] %v6186
      %6203 = vst [vmem:[#allocation3 + $0x20] sm:$0xff] %v6187
      %6204 = vst [vmem:[#allocation3 + $0x28] sm:$0xff] %v6188
      %6205 = vst [vmem:[#allocation3 + $0x30] sm:$0xff] %v6189
      %6206 = vst [vmem:[#allocation3 + $0x38] sm:$0xff] %v6190
      %6207 = vst [vmem:[#allocation3 + $0x40] sm:$0xff] %v6191
      %6208 = vst [vmem:[#allocation3 + $0x48] sm:$0xff] %v6192
      %6209 = vst [vmem:[#allocation3 + $0x50] sm:$0xff] %v6193
      %6210 = vst [vmem:[#allocation3 + $0x58] sm:$0xff] %v6194
      %6211 = vst [vmem:[#allocation3 + $0x60] sm:$0xff] %v6195
      %6212 = vst [vmem:[#allocation3 + $0x68] sm:$0xff] %v6196
      %6213 = vst [vmem:[#allocation3 + $0x70] sm:$0xff] %v6197
      %6214 = vst [vmem:[#allocation3 + $0x78] sm:$0xff] %v6198
    $region53: #{tpu_custom_call.1} parent=1 // pred_fallthru
      _
    // Predicated region
    $region54: #{tpu_custom_call.1} parent=1 // pred_check
      _
    $region55: #{tpu_custom_call.1} parent=1 // pred_check_branch
      %6216 = sbr.rel (0) target = $region57
    $region56: #{tpu_custom_call.1} parent=1 // pred_region
      %s6218 = ssub.s32 2048, 2048
      %6219 = vsyncadd [#allocation4], %s6218
      %s6220 = sshll.u32 [#allocation3], 4
      %s6221 = int_to_ptr.vmem [resolvable:$true] %s6220
      %6226 = dma.vmem_to_hbm [thread:$0]  %s6221, 2048, %s11, [#allocation4], 128, 128, 8
    $region57: #{tpu_custom_call.1} parent=1 // pred_fallthru
      _
    // Predicated region
    $region58: #{tpu_custom_call.1} parent=1 // pred_check
      _
    $region59: #{tpu_custom_call.1} parent=1 // pred_check_branch
      %6228 = sbr.rel (0) target = $region61
    $region60: #{tpu_custom_call.1} parent=1 // pred_region
      %6229 = dma.done [#allocation4], 2048
    $region61: #{tpu_custom_call.1} parent=1 // pred_fallthru
      _
    %6230 = vsyncpa [#allocation4], 1

</llo_original>
